<compile_context>
chip_gen: v5e
topology: v5e:2x2
jax: 0.10.0
libtpu: 0.0.40
codegen_flags: <defaults>
</compile_context>

<pallas_src>
import math

import jax
import jax.numpy as jnp
from jax.experimental import pallas as pl
from jax.experimental.pallas import tpu as pltpu

_BN_EPS = 1e-5


def _round_up(v, m):
    return (v + m - 1) // m * m


def _lcm(a, b):
    return a * b // math.gcd(a, b)


def _vmem_limit_bytes():
    """~80% of physical per-core VMEM instead of the small default scoped limit."""
    try:
        cap = pltpu.get_tpu_info().vmem_capacity_bytes
    except Exception:
        cap = 64 * 1024 * 1024
    return int(cap * 0.8)


def _bn_relu(h, gamma, beta, n_true):
    """One-pass BatchNorm1d (training mode, biased variance) + ReLU, all f32.

    h: (Np, D) f32.  Padded batch rows (if any) are exactly zero and are excluded from the
    statistics by dividing by the true batch size n_true (they contribute 0 to both the sum
    and the sum of squares).  gamma/beta: lane-dense (1, D) f32 rows (no sublane slicing).
    """
    inv_n = jnp.float32(1.0 / n_true)
    s = jnp.sum(h, axis=0, keepdims=True)
    ss = jnp.sum(h * h, axis=0, keepdims=True)
    mean = s * inv_n
    var = jnp.maximum(ss * inv_n - mean * mean, 0.0)
    h_hat = (h - mean) * jax.lax.rsqrt(var + _BN_EPS)
    return jnp.maximum(h_hat * gamma + beta, 0.0)


def _make_layer1_kernel(n_true, n_pad):
    mask_rows = n_pad != n_true

    def kernel(x_ref, w1_ref, g1_ref, b1_ref, h1_ref):
        h = jnp.dot(x_ref[...], w1_ref[...], preferred_element_type=jnp.float32)
        h = _bn_relu(h, g1_ref[...], b1_ref[...], n_true)
        if mask_rows:
            # Zero padded batch rows so they never pollute layer-2 statistics.
            rows = jax.lax.broadcasted_iota(jnp.int32, h.shape, 0)
            h = jnp.where(rows < n_true, h, 0.0)
        h1_ref[...] = h.astype(h1_ref.dtype)

    return kernel


def _make_layer23_kernel(n_true):
    def kernel(h1_ref, w2_ref, g2_ref, b2_ref, w3_ref, o_ref):
        k = pl.program_id(1)

        @pl.when(k == 0)
        def _():
            o_ref[...] = jnp.zeros_like(o_ref)

        h2 = jnp.dot(h1_ref[...], w2_ref[...], preferred_element_type=jnp.float32)
        h2 = _bn_relu(h2, g2_ref[...], b2_ref[...], n_true)
        # NOTE: padded batch rows of h2 are nonzero after BN2, but they only reach padded
        # output rows, which the wrapper slices away.
        o_ref[...] += jnp.dot(h2.astype(jnp.bfloat16), w3_ref[...],
                              preferred_element_type=jnp.float32)

    return kernel


def prepare_projector_params(w1, g1, b1, w2, g2, b2, w3, *,
                             block_h1=512, block_k=1024, block_out=1024):
    """Pad / cast the weights ONCE (hoisted out of the forward path).

    w1: (in_dim, hidden), w2: (hidden, hidden), w3: (hidden, out_dim)
        -- PyTorch Linear weights pre-transposed (PyTorch stores (out, in); forward is x@W.T).
    g*/b*: (hidden,) BatchNorm1d affine parameters.
    """
    assert block_h1 % 128 == 0 and block_k % 128 == 0 and block_out % 128 == 0
    in_dim, hidden = w1.shape
    out_dim = w3.shape[1]

    in_pad = _round_up(in_dim, 128)
    hid128 = _round_up(hidden, 128)
    bh1 = min(block_h1, hid128)
    bk = min(block_k, hid128)
    hid_pad = _round_up(hid128, _lcm(bh1, bk))
    out128 = _round_up(out_dim, 128)
    bout = min(block_out, out128)
    out_pad = _round_up(out128, bout)

    def pad2(w, r, c):
        return jnp.pad(w, ((0, r - w.shape[0]), (0, c - w.shape[1]))).astype(jnp.bfloat16)

    def pad_row(v):
        # Padded lanes get gamma = beta = 0 so padded hidden columns stay exactly 0
        # through BN + ReLU.
        return jnp.pad(v, (0, hid_pad - hidden)).astype(jnp.float32).reshape(1, hid_pad)

    return dict(
        in_dim=in_dim, hidden=hidden, out_dim=out_dim,
        in_pad=in_pad, hid_pad=hid_pad, out_pad=out_pad,
        bh1=bh1, bk=bk, bout=bout,
        w1=pad2(w1, in_pad, hid_pad),
        w2=pad2(w2, hid_pad, hid_pad),
        w3=pad2(w3, hid_pad, out_pad),
        g1=pad_row(g1), b1=pad_row(b1),
        g2=pad_row(g2), b2=pad_row(b2),
    )


def _spec(block_shape, index_map, *, single_buffer=False):
    if single_buffer:
        # Constant-index (resident) block: default 2-deep pipelining would only double its
        # VMEM footprint without ever re-DMAing it.
        return pl.BlockSpec(block_shape, index_map, pipeline_mode=pl.Buffered(1))
    return pl.BlockSpec(block_shape, index_map)


def _forward_impl(x, p, single_buffer):
    n = x.shape[0]
    n_pad = _round_up(n, 16)  # 16 sublanes = one packed bf16 vreg row-group
    in_pad, hid_pad, out_pad = p["in_pad"], p["hid_pad"], p["out_pad"]
    bh1, bk, bout = p["bh1"], p["bk"], p["bout"]
    vmem_limit = _vmem_limit_bytes()

    x_p = jnp.pad(x, ((0, n_pad - n), (0, in_pad - p["in_dim"]))).astype(jnp.bfloat16)

    # ---- Kernel A: h1 = relu(bn1(x @ W1)), tiled over hidden columns ("parallel"). ----
    h1 = pl.pallas_call(
        _make_layer1_kernel(n, n_pad),
        out_shape=jax.ShapeDtypeStruct((n_pad, hid_pad), jnp.bfloat16),
        grid_spec=pltpu.PrefetchScalarGridSpec(
            num_scalar_prefetch=0,
            grid=(hid_pad // bh1,),
            in_specs=[
                _spec((n_pad, in_pad), lambda j: (0, 0),
                      single_buffer=single_buffer),            # x (resident)
                pl.BlockSpec((in_pad, bh1), lambda j: (0, j)),  # W1 column tiles (streamed)
                pl.BlockSpec((1, bh1), lambda j: (0, j)),       # gamma1 tiles
                pl.BlockSpec((1, bh1), lambda j: (0, j)),       # beta1 tiles
            ],
            out_specs=pl.BlockSpec((n_pad, bh1), lambda j: (0, j)),
        ),
        compiler_params=pltpu.CompilerParams(
            dimension_semantics=("parallel",),
            vmem_limit_bytes=vmem_limit,
        ),
    )(x_p, p["w1"], p["g1"], p["b1"])

    # ---- Kernel B: out[:, i] += relu(bn2(h1 @ W2[:, k])) @ W3[k, i]. ----
    # Grid: out-dim tiles ("parallel", outer) x hidden tiles ("arbitrary" reduction, inner).
    # TODO(synk): cache h2 slabs in a per-core scratch (with validity flags) to avoid
    # recomputing layer 2 once per out tile when out_dim needs more than one tile.
    out = pl.pallas_call(
        _make_layer23_kernel(n),
        out_shape=jax.ShapeDtypeStruct((n_pad, out_pad), jnp.float32),
        grid_spec=pltpu.PrefetchScalarGridSpec(
            num_scalar_prefetch=0,
            grid=(out_pad // bout, hid_pad // bk),
            in_specs=[
                _spec((n_pad, hid_pad), lambda i, k: (0, 0),
                      single_buffer=single_buffer),                # h1 (resident)
                pl.BlockSpec((hid_pad, bk), lambda i, k: (0, k)),  # W2 column tiles
                pl.BlockSpec((1, bk), lambda i, k: (0, k)),        # gamma2 tiles
                pl.BlockSpec((1, bk), lambda i, k: (0, k)),        # beta2 tiles
                pl.BlockSpec((bk, bout), lambda i, k: (k, i)),     # W3 tiles
            ],
            out_specs=pl.BlockSpec((n_pad, bout), lambda i, k: (0, i)),
        ),
        compiler_params=pltpu.CompilerParams(
            dimension_semantics=("parallel", "arbitrary"),
            vmem_limit_bytes=vmem_limit,
        ),
    )(h1, p["w2"], p["g2"], p["b2"], p["w3"])

    return out[:n, :p["out_dim"]]


def projector_forward(x, params):
    """Fused Barlow Twins projector forward.  x: (N, in_dim) f32."""
    try:
        return _forward_impl(x, params, single_buffer=True)
    except Exception:
        # Installed Pallas rejected per-operand buffer counts (pl.Buffered(1)); fall back to
        # default double-buffering of the resident blocks (correctness unaffected).
        return _forward_impl(x, params, single_buffer=False)


if __name__ == "__main__":
    # Small but MXU/lane-friendly shapes; block sizes chosen so both kernels run multi-step
    # grids (2 hidden tiles in each phase) to exercise the pipelining.
    N, in_dim, hidden_dim, out_dim = 256, 256, 512, 128

    key = jax.random.PRNGKey(0)
    kx, k1, k2, k3, kg = jax.random.split(key, 5)
    x = jax.random.normal(kx, (N, in_dim), jnp.float32)
    # PyTorch Linear stores (out, in); we keep the transposed (in, out) layout.
    w1 = jax.random.normal(k1, (in_dim, hidden_dim), jnp.float32) * 0.05
    w2 = jax.random.normal(k2, (hidden_dim, hidden_dim), jnp.float32) * 0.05
    w3 = jax.random.normal(k3, (hidden_dim, out_dim), jnp.float32) * 0.05
    kg1, kg2, kb1, kb2 = jax.random.split(kg, 4)
    g1 = 1.0 + 0.1 * jax.random.normal(kg1, (hidden_dim,), jnp.float32)
    g2 = 1.0 + 0.1 * jax.random.normal(kg2, (hidden_dim,), jnp.float32)
    b1 = 0.1 * jax.random.normal(kb1, (hidden_dim,), jnp.float32)
    b2 = 0.1 * jax.random.normal(kb2, (hidden_dim,), jnp.float32)

    # Weight pad/cast hoisted out of the forward path (done once, reused per call).
    params = prepare_projector_params(w1, g1, b1, w2, g2, b2, w3,
                                      block_h1=256, block_k=256, block_out=128)

    out = projector_forward(x, params)
    jax.block_until_ready(out)
    assert out.shape == (N, out_dim)

    # Pure-JAX reference mirroring the kernel's mixed precision: bf16 matmul operands,
    # f32 accumulation and training-mode BatchNorm (batch statistics, biased variance).
    def ref(x, w1, g1, b1, w2, g2, b2, w3, eps=1e-5):
        bf = lambda a: a.astype(jnp.bfloat16).astype(jnp.float32)

        def bn_relu(h, g, b):
            m = h.mean(0, keepdims=True)
            v = ((h - m) ** 2).mean(0, keepdims=True)
            return jnp.maximum((h - m) / jnp.sqrt(v + eps) * g + b, 0.0)

        h = bn_relu(jnp.dot(bf(x), bf(w1), preferred_element_type=jnp.float32), g1, b1)
        h = bn_relu(jnp.dot(bf(h), bf(w2), preferred_element_type=jnp.float32), g2, b2)
        return jnp.dot(bf(h), bf(w3), preferred_element_type=jnp.float32)

    ref_out = ref(x, w1, g1, b1, w2, g2, b2, w3)
    max_err = float(jnp.max(jnp.abs(out - ref_out)))
    assert jnp.allclose(out, ref_out, atol=2e-2, rtol=2e-2), f"max abs err = {max_err}"

    print("KERNEL_OK")
</pallas_src>

<mosaic_0001>
module attributes {stable_mosaic.version = 11 : i64} {
  func.func @kernel(%arg0: i32, %arg1: memref<256x256xbf16, #tpu.memory_space<vmem>>, %arg2: memref<256x256xbf16, #tpu.memory_space<vmem>>, %arg3: memref<1x256xf32, #tpu.memory_space<vmem>>, %arg4: memref<1x256xf32, #tpu.memory_space<vmem>>, %arg5: memref<256x256xbf16, #tpu.memory_space<vmem>>) attributes {dimension_semantics = [#tpu.dimension_semantics<parallel>], iteration_bounds = array<i64: 2>, scalar_prefetch = 0 : i64, scratch_operands = 0 : i64, tpu.core_type = #tpu.core_type<tc>, window_params = [{pipeline_mode = #tpu.pipeline_mode<synchronous>, transform_indices = @transform_0, window_bounds = array<i64: 256, 256>}, {transform_indices = @transform_1, window_bounds = array<i64: 256, 256>}, {transform_indices = @transform_2, window_bounds = array<i64: 1, 256>}, {transform_indices = @transform_3, window_bounds = array<i64: 1, 256>}, {transform_indices = @transform_4, window_bounds = array<i64: 256, 256>}]} {
    %c0 = arith.constant 0 : index
    %c0_0 = arith.constant 0 : index
    %0 = vector.load %arg1[%c0, %c0_0] : memref<256x256xbf16, #tpu.memory_space<vmem>>, vector<256x256xbf16>
    %c0_1 = arith.constant 0 : index
    %c0_2 = arith.constant 0 : index
    %1 = vector.load %arg2[%c0_1, %c0_2] : memref<256x256xbf16, #tpu.memory_space<vmem>>, vector<256x256xbf16>
    %cst = arith.constant dense<0.000000e+00> : vector<256x256xf32>
    %2 = tpu.matmul %0, %1, %cst {dimension_numbers = #tpu.dot_dimension_numbers<[1], [0], [0], [1], [0, 0, 1, 1], [], []>} : vector<256x256xbf16>, vector<256x256xbf16>, vector<256x256xf32> -> vector<256x256xf32>
    %c0_3 = arith.constant 0 : index
    %c0_4 = arith.constant 0 : index
    %3 = vector.load %arg3[%c0_3, %c0_4] : memref<1x256xf32, #tpu.memory_space<vmem>>, vector<1x256xf32>
    %c0_5 = arith.constant 0 : index
    %c0_6 = arith.constant 0 : index
    %4 = vector.load %arg4[%c0_5, %c0_6] : memref<1x256xf32, #tpu.memory_space<vmem>>, vector<1x256xf32>
    %cst_7 = arith.constant dense<0.000000e+00> : vector<256xf32>
    %5 = vector.multi_reduction <add>, %2, %cst_7 [0] : vector<256x256xf32> to vector<256xf32>
    %6 = vector.shape_cast %5 : vector<256xf32> to vector<1x256xf32>
    %7 = arith.mulf %2, %2 : vector<256x256xf32>
    %cst_8 = arith.constant dense<0.000000e+00> : vector<256xf32>
    %8 = vector.multi_reduction <add>, %7, %cst_8 [0] : vector<256x256xf32> to vector<256xf32>
    %9 = vector.shape_cast %8 : vector<256xf32> to vector<1x256xf32>
    %cst_9 = arith.constant 3.906250e-03 : f32
    %10 = vector.broadcast %cst_9 : f32 to vector<1x256xf32>
    %11 = arith.mulf %6, %10 : vector<1x256xf32>
    %cst_10 = arith.constant 3.906250e-03 : f32
    %12 = vector.broadcast %cst_10 : f32 to vector<1x256xf32>
    %13 = arith.mulf %9, %12 : vector<1x256xf32>
    %14 = arith.mulf %11, %11 : vector<1x256xf32>
    %15 = arith.subf %13, %14 : vector<1x256xf32>
    %cst_11 = arith.constant 0.000000e+00 : f32
    %16 = vector.broadcast %cst_11 : f32 to vector<1x256xf32>
    %17 = arith.maximumf %15, %16 : vector<1x256xf32>
    %18 = vector.broadcast %11 : vector<1x256xf32> to vector<256x256xf32>
    %19 = arith.subf %2, %18 : vector<256x256xf32>
    %cst_12 = arith.constant 9.99999974E-6 : f32
    %20 = vector.broadcast %cst_12 : f32 to vector<1x256xf32>
    %21 = arith.addf %17, %20 : vector<1x256xf32>
    %22 = math.rsqrt %21 : vector<1x256xf32>
    %23 = vector.broadcast %22 : vector<1x256xf32> to vector<256x256xf32>
    %24 = arith.mulf %19, %23 : vector<256x256xf32>
    %25 = vector.broadcast %3 : vector<1x256xf32> to vector<256x256xf32>
    %26 = arith.mulf %24, %25 : vector<256x256xf32>
    %27 = vector.broadcast %4 : vector<1x256xf32> to vector<256x256xf32>
    %28 = arith.addf %26, %27 : vector<256x256xf32>
    %cst_13 = arith.constant 0.000000e+00 : f32
    %29 = vector.broadcast %cst_13 : f32 to vector<256x256xf32>
    %30 = arith.maximumf %28, %29 : vector<256x256xf32>
    %31 = arith.truncf %30 : vector<256x256xf32> to vector<256x256xbf16>
    %c0_14 = arith.constant 0 : index
    %c0_15 = arith.constant 0 : index
    %32 = vector.load %arg5[%c0_14, %c0_15] : memref<256x256xbf16, #tpu.memory_space<vmem>>, vector<256x256xbf16>
    tpu.vector_store %arg5[%c0_14, %c0_15], %31 {strides = array<i32>} : memref<256x256xbf16, #tpu.memory_space<vmem>>, vector<256x256xbf16>,
    return
  }
  func.func @transform_0(%arg0: i32) -> (i32, i32) {
    %c0_i32 = arith.constant 0 : i32
    %c0_i32_0 = arith.constant 0 : i32
    %c0_i32_1 = arith.constant 0 : i32
    return %c0_i32, %c0_i32_0 : i32, i32
  }
  func.func @transform_1(%arg0: i32) -> (i32, i32) {
    %c0_i32 = arith.constant 0 : i32
    %c0_i32_0 = arith.constant 0 : i32
    return %c0_i32, %arg0 : i32, i32
  }
  func.func @transform_2(%arg0: i32) -> (i32, i32) {
    %c0_i32 = arith.constant 0 : i32
    %c0_i32_0 = arith.constant 0 : i32
    return %c0_i32, %arg0 : i32, i32
  }
  func.func @transform_3(%arg0: i32) -> (i32, i32) {
    %c0_i32 = arith.constant 0 : i32
    %c0_i32_0 = arith.constant 0 : i32
    return %c0_i32, %arg0 : i32, i32
  }
  func.func @transform_4(%arg0: i32) -> (i32, i32) {
    %c0_i32 = arith.constant 0 : i32
    %c0_i32_0 = arith.constant 0 : i32
    return %c0_i32, %arg0 : i32, i32
  }
}

module attributes {stable_mosaic.version = 11 : i64} {
  func.func @kernel(%arg0: i32, %arg1: memref<256x256xbf16, #tpu.memory_space<vmem>>, %arg2: memref<256x256xbf16, #tpu.memory_space<vmem>>, %arg3: memref<1x256xf32, #tpu.memory_space<vmem>>, %arg4: memref<1x256xf32, #tpu.memory_space<vmem>>, %arg5: memref<256x256xbf16, #tpu.memory_space<vmem>>) attributes {dimension_semantics = [#tpu.dimension_semantics<parallel>], iteration_bounds = array<i64: 2>, scalar_prefetch = 0 : i64, scratch_operands = 0 : i64, tpu.core_type = #tpu.core_type<tc>, window_params = [{pipeline_mode = #tpu.pipeline_mode<synchronous>, transform_indices = @transform_0, window_bounds = array<i64: 256, 256>}, {transform_indices = @transform_1, window_bounds = array<i64: 256, 256>}, {transform_indices = @transform_2, window_bounds = array<i64: 1, 256>}, {transform_indices = @transform_3, window_bounds = array<i64: 1, 256>}, {transform_indices = @transform_4, window_bounds = array<i64: 256, 256>}]} {
    %c0 = arith.constant 0 : index
    %c0_0 = arith.constant 0 : index
    %0 = vector.load %arg1[%c0, %c0_0] : memref<256x256xbf16, #tpu.memory_space<vmem>>, vector<256x256xbf16>
    %c0_1 = arith.constant 0 : index
    %c0_2 = arith.constant 0 : index
    %1 = vector.load %arg2[%c0_1, %c0_2] : memref<256x256xbf16, #tpu.memory_space<vmem>>, vector<256x256xbf16>
    %cst = arith.constant dense<0.000000e+00> : vector<256x256xf32>
    %2 = tpu.matmul %0, %1, %cst {dimension_numbers = #tpu.dot_dimension_numbers<[1], [0], [0], [1], [0, 0, 1, 1], [], []>} : vector<256x256xbf16>, vector<256x256xbf16>, vector<256x256xf32> -> vector<256x256xf32>
    %c0_3 = arith.constant 0 : index
    %c0_4 = arith.constant 0 : index
    %3 = vector.load %arg3[%c0_3, %c0_4] : memref<1x256xf32, #tpu.memory_space<vmem>>, vector<1x256xf32>
    %c0_5 = arith.constant 0 : index
    %c0_6 = arith.constant 0 : index
    %4 = vector.load %arg4[%c0_5, %c0_6] : memref<1x256xf32, #tpu.memory_space<vmem>>, vector<1x256xf32>
    %cst_7 = arith.constant dense<0.000000e+00> : vector<256xf32>
    %5 = vector.multi_reduction <add>, %2, %cst_7 [0] : vector<256x256xf32> to vector<256xf32>
    %6 = vector.shape_cast %5 : vector<256xf32> to vector<1x256xf32>
    %7 = arith.mulf %2, %2 : vector<256x256xf32>
    %cst_8 = arith.constant dense<0.000000e+00> : vector<256xf32>
    %8 = vector.multi_reduction <add>, %7, %cst_8 [0] : vector<256x256xf32> to vector<256xf32>
    %9 = vector.shape_cast %8 : vector<256xf32> to vector<1x256xf32>
    %cst_9 = arith.constant 3.906250e-03 : f32
    %10 = vector.broadcast %cst_9 : f32 to vector<1x256xf32>
    %11 = arith.mulf %6, %10 : vector<1x256xf32>
    %cst_10 = arith.constant 3.906250e-03 : f32
    %12 = vector.broadcast %cst_10 : f32 to vector<1x256xf32>
    %13 = arith.mulf %9, %12 : vector<1x256xf32>
    %14 = arith.mulf %11, %11 : vector<1x256xf32>
    %15 = arith.subf %13, %14 : vector<1x256xf32>
    %cst_11 = arith.constant 0.000000e+00 : f32
    %16 = vector.broadcast %cst_11 : f32 to vector<1x256xf32>
    %17 = arith.maximumf %15, %16 : vector<1x256xf32>
    %18 = vector.broadcast %11 : vector<1x256xf32> to vector<256x256xf32>
    %19 = arith.subf %2, %18 : vector<256x256xf32>
    %cst_12 = arith.constant 9.99999974E-6 : f32
    %20 = vector.broadcast %cst_12 : f32 to vector<1x256xf32>
    %21 = arith.addf %17, %20 : vector<1x256xf32>
    %22 = math.rsqrt %21 : vector<1x256xf32>
    %23 = vector.broadcast %22 : vector<1x256xf32> to vector<256x256xf32>
    %24 = arith.mulf %19, %23 : vector<256x256xf32>
    %25 = vector.broadcast %3 : vector<1x256xf32> to vector<256x256xf32>
    %26 = arith.mulf %24, %25 : vector<256x256xf32>
    %27 = vector.broadcast %4 : vector<1x256xf32> to vector<256x256xf32>
    %28 = arith.addf %26, %27 : vector<256x256xf32>
    %cst_13 = arith.constant 0.000000e+00 : f32
    %29 = vector.broadcast %cst_13 : f32 to vector<256x256xf32>
    %30 = arith.maximumf %28, %29 : vector<256x256xf32>
    %31 = arith.truncf %30 : vector<256x256xf32> to vector<256x256xbf16>
    %c0_14 = arith.constant 0 : index
    %c0_15 = arith.constant 0 : index
    %32 = vector.load %arg5[%c0_14, %c0_15] : memref<256x256xbf16, #tpu.memory_space<vmem>>, vector<256x256xbf16>
    tpu.vector_store %arg5[%c0_14, %c0_15], %31 {strides = array<i32>} : memref<256x256xbf16, #tpu.memory_space<vmem>>, vector<256x256xbf16>,
    return
  }
  func.func @transform_0(%arg0: i32) -> (i32, i32) {
    %c0_i32 = arith.constant 0 : i32
    %c0_i32_0 = arith.constant 0 : i32
    %c0_i32_1 = arith.constant 0 : i32
    return %c0_i32, %c0_i32_0 : i32, i32
  }
  func.func @transform_1(%arg0: i32) -> (i32, i32) {
    %c0_i32 = arith.constant 0 : i32
    %c0_i32_0 = arith.constant 0 : i32
    return %c0_i32, %arg0 : i32, i32
  }
  func.func @transform_2(%arg0: i32) -> (i32, i32) {
    %c0_i32 = arith.constant 0 : i32
    %c0_i32_0 = arith.constant 0 : i32
    return %c0_i32, %arg0 : i32, i32
  }
  func.func @transform_3(%arg0: i32) -> (i32, i32) {
    %c0_i32 = arith.constant 0 : i32
    %c0_i32_0 = arith.constant 0 : i32
    return %c0_i32, %arg0 : i32, i32
  }
  func.func @transform_4(%arg0: i32) -> (i32, i32) {
    %c0_i32 = arith.constant 0 : i32
    %c0_i32_0 = arith.constant 0 : i32
    return %c0_i32, %arg0 : i32, i32
  }
}

</mosaic_0001>

<llo_original>
// kernel: tpu_custom_call.1
$region0: #{tpu_custom_call.1}
  #allocation0 [shape = 'u32[]', space=smem, size = 0x4, offset = 0x4, fixed_abs, tag = 'smem constant byte address 0x4 - core index']
  #allocation1 [shape = 'u32[72,128]{1,0:T(1,128)}', space=vmem, size = 0x9000, scoped, tag = 'internal scratch']
  %s0 = inlined_call_operand.hbm [shape: bf16[256,256], index: 0, kind: input, shape index: {}]
  %s1 = inlined_call_operand.hbm [shape: bf16[256,512], index: 1, kind: input, shape index: {}]
  %s2 = inlined_call_operand.hbm [shape: f32[1,512], index: 2, kind: input, shape index: {}]
  %s3 = inlined_call_operand.hbm [shape: f32[1,512], index: 3, kind: input, shape index: {}]
  %s4 = inlined_call_operand.hbm [shape: bf16[256,512], index: 4, kind: output, shape index: {}]
  %s5 = sld [smem:[#allocation0]]
  $region65: #{tpu_custom_call.1} parent=0
    _
  %s7 = ssub.s32 1, %s5
  %s8 = scalar_select 0, %s7, %s5
  $region1: #{tpu_custom_call.1} parent=0
    #allocation2 [shape = 'u8[131072]{0}', space=vmem, size = 0x20000, scoped, tag = 'input window, operand 0, single buffered']
    #allocation3 [shape = 's32[2]{0}', space=sflag, size = 0x8, scoped, tag = 'scoped memory for tpu_custom_call.1']
    #allocation4 [shape = 's32[2]{0}', space=sflag, size = 0x8, scoped, tag = 'scoped memory for tpu_custom_call.1']
    #allocation5 [shape = 'u8[262144]{0}', space=vmem, size = 0x40000, scoped, tag = 'input window, operand 1']
    #allocation6 [shape = 's32[2]{0}', space=sflag, size = 0x8, scoped, tag = 'scoped memory for tpu_custom_call.1']
    #allocation7 [shape = 'u8[2048]{0}', space=vmem, size = 0x800, scoped, tag = 'input window, operand 2']
    #allocation8 [shape = 'u8[2048]{0}', space=vmem, size = 0x800, scoped, tag = 'input window, operand 3']
    #allocation9 [shape = 's32[2]{0}', space=sflag, size = 0x8, scoped, tag = 'scoped memory for tpu_custom_call.1']
    #allocation10 [shape = 'u8[262144]{0}', space=vmem, size = 0x40000, scoped, tag = 'output window, operand 0']
    %9 = vsyncpa [#allocation3], 0
    %10 = vsyncpa [#allocation6], 0
    %s11 = scalar_lea.sflag [#allocation6], 1
    %12 = vsyncpa %s11, 0
    %13 = vsyncpa [#allocation9], 0
    %s14 = scalar_lea.sflag [#allocation9], 1
    %15 = vsyncpa %s14, 0
    %16 = vsyncpa [#allocation4], 0
    %s17 = scalar_lea.sflag [#allocation4], 1
    %18 = vsyncpa %s17, 0
    loop: start=0, step=1, limit=4
    $region2: #{tpu_custom_call.1} parent=1 // loop_pre_header
      _
    $region3: #{tpu_custom_call.1} parent=1 // loop_header
      %s20 = sphi 0, %s24
      %p21 = scmp.ge.s32.totalorder %s20, 4
      %s28 = sphi 0, %s28
      %s30 = sphi 0, %s28
      %s31 = sphi 0, %s30
      %s45 = sphi 0, %s31
      %s51 = sphi 0, %s53
      %s54 = sphi 0, %s51
      %s55 = sphi 0, %s54
      %s71 = sphi 0, %s55
      %s77 = sphi 0, %s79
      %s80 = sphi 0, %s77
      %s81 = sphi 0, %s80
      %s97 = sphi 0, %s81
      %s103 = sphi 0, %s105
      %s106 = sphi 0, %s103
      %s107 = sphi 0, %s106
      %s123 = sphi 0, %s107
      %s129 = sphi 0, %s131
      %s132 = sphi 0, %s129
      %s133 = sphi 0, %s132
      %s149 = sphi 0, %s133
    $region4: #{tpu_custom_call.1} parent=1 // loop_header_branch
      %23 = sbr.rel (%p21) target = $region8
    $region5: #{tpu_custom_call.1} parent=1 // loop_body
      %s25 = ssub.s32 %s20, 1
      %s26 = ssub.s32 %s20, 2
      %s27 = sadd.s32 %s20, 1
      %s29 = sadd.s32 %s28, 1
      %p32 = scmp.eq.s32.totalorder %s20, 1
      %p33 = scmp.ne.s32.totalorder %s28, %s30
      %p34 = scmp.eq.s32.totalorder %s20, 0
      %p35 = por %p33, %p34
      %p36 = scmp.ne.s32.totalorder %s28, %s30
      %p37 = scmp.eq.s32.totalorder %s25, 1
      %p38 = por %p36, %p37
      %p39 = scmp.ne.s32.totalorder %s30, %s31
      %p40 = scmp.eq.s32.totalorder %s25, 0
      %p41 = por %p39, %p40
      %p42 = scmp.ne.s32.totalorder %s30, %s31
      %p43 = scmp.eq.s32.totalorder %s26, 1
      %p44 = por %p42, %p43
      %p46 = scmp.ne.s32.totalorder %s31, %s45
      %p47 = scmp.eq.s32.totalorder %s26, 0
      %p48 = por %p46, %p47
      %s49 = ssub.s32 %s20, %s27
      %p50 = scmp.eq.s32.totalorder %s49, 0
      %s52 = sadd.s32 %s51, 1
      %s53 = scalar_select %p50, %s51, %s52
      %p56 = pneg %p50
      %p57 = scmp.eq.s32.totalorder %s20, 1
      %p58 = por %p56, %p57
      %p59 = scmp.ne.s32.totalorder %s51, %s54
      %p60 = scmp.eq.s32.totalorder %s20, 0
      %p61 = por %p59, %p60
      %p62 = scmp.ne.s32.totalorder %s51, %s54
      %p63 = scmp.eq.s32.totalorder %s25, 1
      %p64 = por %p62, %p63
      %p65 = scmp.ne.s32.totalorder %s54, %s55
      %p66 = scmp.eq.s32.totalorder %s25, 0
      %p67 = por %p65, %p66
      %p68 = scmp.ne.s32.totalorder %s54, %s55
      %p69 = scmp.eq.s32.totalorder %s26, 1
      %p70 = por %p68, %p69
      %p72 = scmp.ne.s32.totalorder %s55, %s71
      %p73 = scmp.eq.s32.totalorder %s26, 0
      %p74 = por %p72, %p73
      %s75 = ssub.s32 %s20, %s27
      %p76 = scmp.eq.s32.totalorder %s75, 0
      %s78 = sadd.s32 %s77, 1
      %s79 = scalar_select %p76, %s77, %s78
      %p82 = pneg %p76
      %p83 = scmp.eq.s32.totalorder %s20, 1
      %p84 = por %p82, %p83
      %p85 = scmp.ne.s32.totalorder %s77, %s80
      %p86 = scmp.eq.s32.totalorder %s20, 0
      %p87 = por %p85, %p86
      %p88 = scmp.ne.s32.totalorder %s77, %s80
      %p89 = scmp.eq.s32.totalorder %s25, 1
      %p90 = por %p88, %p89
      %p91 = scmp.ne.s32.totalorder %s80, %s81
      %p92 = scmp.eq.s32.totalorder %s25, 0
      %p93 = por %p91, %p92
      %p94 = scmp.ne.s32.totalorder %s80, %s81
      %p95 = scmp.eq.s32.totalorder %s26, 1
      %p96 = por %p94, %p95
      %p98 = scmp.ne.s32.totalorder %s81, %s97
      %p99 = scmp.eq.s32.totalorder %s26, 0
      %p100 = por %p98, %p99
      %s101 = ssub.s32 %s20, %s27
      %p102 = scmp.eq.s32.totalorder %s101, 0
      %s104 = sadd.s32 %s103, 1
      %s105 = scalar_select %p102, %s103, %s104
      %p108 = pneg %p102
      %p109 = scmp.eq.s32.totalorder %s20, 1
      %p110 = por %p108, %p109
      %p111 = scmp.ne.s32.totalorder %s103, %s106
      %p112 = scmp.eq.s32.totalorder %s20, 0
      %p113 = por %p111, %p112
      %p114 = scmp.ne.s32.totalorder %s103, %s106
      %p115 = scmp.eq.s32.totalorder %s25, 1
      %p116 = por %p114, %p115
      %p117 = scmp.ne.s32.totalorder %s106, %s107
      %p118 = scmp.eq.s32.totalorder %s25, 0
      %p119 = por %p117, %p118
      %p120 = scmp.ne.s32.totalorder %s106, %s107
      %p121 = scmp.eq.s32.totalorder %s26, 1
      %p122 = por %p120, %p121
      %p124 = scmp.ne.s32.totalorder %s107, %s123
      %p125 = scmp.eq.s32.totalorder %s26, 0
      %p126 = por %p124, %p125
      %s127 = ssub.s32 %s20, %s27
      %p128 = scmp.eq.s32.totalorder %s127, 0
      %s130 = sadd.s32 %s129, 1
      %s131 = scalar_select %p128, %s129, %s130
      %p134 = pneg %p128
      %p135 = scmp.eq.s32.totalorder %s20, 1
      %p136 = por %p134, %p135
      %p137 = scmp.ne.s32.totalorder %s129, %s132
      %p138 = scmp.eq.s32.totalorder %s20, 0
      %p139 = por %p137, %p138
      %p140 = scmp.ne.s32.totalorder %s129, %s132
      %p141 = scmp.eq.s32.totalorder %s25, 1
      %p142 = por %p140, %p141
      %p143 = scmp.ne.s32.totalorder %s132, %s133
      %p144 = scmp.eq.s32.totalorder %s25, 0
      %p145 = por %p143, %p144
      %p146 = scmp.ne.s32.totalorder %s132, %s133
      %p147 = scmp.eq.s32.totalorder %s26, 1
      %p148 = por %p146, %p147
      %p150 = scmp.ne.s32.totalorder %s133, %s149
      %p151 = scmp.eq.s32.totalorder %s26, 0
      %p152 = por %p150, %p151
      %p153 = scmp.le.s32.totalorder 1, %s20
      %p154 = scmp.lt.s32.totalorder %s20, 3
      %p155 = pnand %p153, %p154
      %p156 = pneg %p155
      // Predicated region
      $region9: #{tpu_custom_call.1} parent=5 // pred_check
        _
      $region10: #{tpu_custom_call.1} parent=5 // pred_check_branch
        %158 = sbr.rel (%p155) target = $region12
      $region11: #{tpu_custom_call.1} parent=5 // pred_region
        %s159 = ssub.s32 %s20, 1
        // Predicated region
        $region13: #{tpu_custom_call.1} parent=11 // pred_check
          %p160 = pneg %p41
        $region14: #{tpu_custom_call.1} parent=11 // pred_check_branch
          %162 = sbr.rel (%p160) target = $region16
        $region15: #{tpu_custom_call.1} parent=11 // pred_region
          %164 = vsyncadd [#allocation3], 0
          %s165 = sshll.u32 %s0, 4
          %s166 = int_to_ptr.hbm [resolvable:$true] %s165
          %s167 = sshll.u32 [#allocation2], 4
          %s168 = int_to_ptr.vmem [resolvable:$true] %s167
          %173 = dma.hbm_to_vmem [thread:$0]  %s166, 4096, %s168, [#allocation3], 128, 128, 8
        $region16: #{tpu_custom_call.1} parent=11 // pred_fallthru
          _
      $region12: #{tpu_custom_call.1} parent=5 // pred_fallthru
        _
      %p174 = scmp.lt.s32.totalorder %s20, 2
      // Predicated region
      $region17: #{tpu_custom_call.1} parent=5 // pred_check
        %p175 = pneg %p174
      $region18: #{tpu_custom_call.1} parent=5 // pred_check_branch
        %177 = sbr.rel (%p175) target = $region20
      $region19: #{tpu_custom_call.1} parent=5 // pred_region
        // Predicated region
        $region21: #{tpu_custom_call.1} parent=19 // pred_check
          %p178 = pneg %p61
        $region22: #{tpu_custom_call.1} parent=19 // pred_check_branch
          %180 = sbr.rel (%p178) target = $region24
        $region23: #{tpu_custom_call.1} parent=19 // pred_region
          %s181 = sand.u32 %s20, 1
          %s182 = scalar_lea.sflag [#allocation6], %s181
          %s183 = sand.u32 %s51, 1
          %s184 = smul.addr %s183, 256
          %s185 = scalar_lea.vmem [#allocation5], %s184
          %s186 = smul.u32 2, %s20
          %188 = vsyncadd %s182, 0
          %s189 = smul.addr %s186, 4
          %s190 = scalar_lea.hbm %s1, %s189
          %s191 = sshll.u32 %s190, 4
          %s192 = int_to_ptr.hbm [resolvable:$true] %s191
          %s193 = sshll.u32 %s185, 4
          %s194 = int_to_ptr.vmem [resolvable:$true] %s193
          %199 = dma.hbm_to_vmem [thread:$0]  %s192, 4096, %s194, %s182, 256, 128, 8
        $region24: #{tpu_custom_call.1} parent=19 // pred_fallthru
          _
        // Predicated region
        $region25: #{tpu_custom_call.1} parent=19 // pred_check
          %p200 = pneg %p87
        $region26: #{tpu_custom_call.1} parent=19 // pred_check_branch
          %202 = sbr.rel (%p200) target = $region28
        $region27: #{tpu_custom_call.1} parent=19 // pred_region
          %s203 = sand.u32 %s20, 1
          %s204 = scalar_lea.sflag [#allocation6], %s203
          %s205 = sand.u32 %s77, 1
          %s206 = smul.addr %s205, 2
          %s207 = scalar_lea.vmem [#allocation7], %s206
          %s208 = smul.u32 2, %s20
          %210 = vsyncadd %s204, 0
          %s211 = scalar_lea.hbm %s2, %s208
          %s213 = sshll.u32 %s211, 4
          %s214 = int_to_ptr.hbm [resolvable:$true] %s213
          %s215 = sshll.u32 %s207, 4
          %s216 = int_to_ptr.vmem [resolvable:$true] %s215
          %218 = dma.hbm_to_vmem [thread:$0]  %s214, 32, %s216, %s204
        $region28: #{tpu_custom_call.1} parent=19 // pred_fallthru
          _
        // Predicated region
        $region29: #{tpu_custom_call.1} parent=19 // pred_check
          %p219 = pneg %p113
        $region30: #{tpu_custom_call.1} parent=19 // pred_check_branch
          %221 = sbr.rel (%p219) target = $region32
        $region31: #{tpu_custom_call.1} parent=19 // pred_region
          %s222 = sand.u32 %s103, 1
          %s223 = scalar_lea.sflag [#allocation9], %s222
          %s224 = sand.u32 %s103, 1
          %s225 = smul.addr %s224, 2
          %s226 = scalar_lea.vmem [#allocation8], %s225
          %s227 = smul.u32 2, %s20
          %229 = vsyncadd %s223, 0
          %s230 = scalar_lea.hbm %s3, %s227
          %s232 = sshll.u32 %s230, 4
          %s233 = int_to_ptr.hbm [resolvable:$true] %s232
          %s234 = sshll.u32 %s226, 4
          %s235 = int_to_ptr.vmem [resolvable:$true] %s234
          %237 = dma.hbm_to_vmem [thread:$0]  %s233, 32, %s235, %s223
        $region32: #{tpu_custom_call.1} parent=19 // pred_fallthru
          _
      $region20: #{tpu_custom_call.1} parent=5 // pred_fallthru
        _
      %p238 = scmp.le.s32.totalorder 1, %s20
      %p239 = scmp.lt.s32.totalorder %s20, 3
      %p240 = pnand %p238, %p239
      %p241 = pneg %p240
      // Predicated region
      $region33: #{tpu_custom_call.1} parent=5 // pred_check
        _
      $region34: #{tpu_custom_call.1} parent=5 // pred_check_branch
        %243 = sbr.rel (%p240) target = $region36
      $region35: #{tpu_custom_call.1} parent=5 // pred_region
        %s244 = ssub.s32 %s20, 1
        // Predicated region
        $region37: #{tpu_custom_call.1} parent=35 // pred_check
          %p245 = pneg %p41
        $region38: #{tpu_custom_call.1} parent=35 // pred_check_branch
          %247 = sbr.rel (%p245) target = $region40
        $region39: #{tpu_custom_call.1} parent=35 // pred_region
          %249 = dma.done [#allocation3], 4096
        $region40: #{tpu_custom_call.1} parent=35 // pred_fallthru
          _
        %s250 = sand.u32 %s25, 1
        %s251 = scalar_lea.sflag [#allocation6], %s250
        %s252 = sand.u32 %s54, 1
        %s253 = smul.addr %s252, 256
        %s254 = scalar_lea.vmem [#allocation5], %s253
        // Predicated region
        $region41: #{tpu_custom_call.1} parent=35 // pred_check
          %p255 = pneg %p67
        $region42: #{tpu_custom_call.1} parent=35 // pred_check_branch
          %257 = sbr.rel (%p255) target = $region44
        $region43: #{tpu_custom_call.1} parent=35 // pred_region
          %259 = dma.done %s251, 4096
        $region44: #{tpu_custom_call.1} parent=35 // pred_fallthru
          _
        %s260 = sand.u32 %s25, 1
        %s261 = scalar_lea.sflag [#allocation6], %s260
        %s262 = sand.u32 %s80, 1
        %s263 = smul.addr %s262, 2
        %s264 = scalar_lea.vmem [#allocation7], %s263
        // Predicated region
        $region45: #{tpu_custom_call.1} parent=35 // pred_check
          %p265 = pneg %p93
        $region46: #{tpu_custom_call.1} parent=35 // pred_check_branch
          %267 = sbr.rel (%p265) target = $region48
        $region47: #{tpu_custom_call.1} parent=35 // pred_region
          %269 = dma.done %s261, 32
        $region48: #{tpu_custom_call.1} parent=35 // pred_fallthru
          _
        %s270 = sand.u32 %s106, 1
        %s271 = scalar_lea.sflag [#allocation9], %s270
        %s272 = sand.u32 %s106, 1
        %s273 = smul.addr %s272, 2
        %s274 = scalar_lea.vmem [#allocation8], %s273
        // Predicated region
        $region49: #{tpu_custom_call.1} parent=35 // pred_check
          %p275 = pneg %p119
        $region50: #{tpu_custom_call.1} parent=35 // pred_check_branch
          %277 = sbr.rel (%p275) target = $region52
        $region51: #{tpu_custom_call.1} parent=35 // pred_region
          %279 = dma.done %s271, 32
        $region52: #{tpu_custom_call.1} parent=35 // pred_fallthru
          _
        %p280 = pneg %p41
        %p281 = pneg %p38
        %s282 = sand.u32 %s25, 1
        %s283 = scalar_lea.sflag [#allocation6], %s282
        %s284 = sand.u32 %s54, 1
        %s285 = smul.addr %s284, 256
        %s286 = scalar_lea.vmem [#allocation5], %s285
        %p287 = pneg %p67
        %p288 = pneg %p64
        %s289 = sand.u32 %s25, 1
        %s290 = scalar_lea.sflag [#allocation6], %s289
        %s291 = sand.u32 %s80, 1
        %s292 = smul.addr %s291, 2
        %s293 = scalar_lea.vmem [#allocation7], %s292
        %p294 = pneg %p93
        %p295 = pneg %p90
        %s296 = sand.u32 %s106, 1
        %s297 = scalar_lea.sflag [#allocation9], %s296
        %s298 = sand.u32 %s106, 1
        %s299 = smul.addr %s298, 2
        %s300 = scalar_lea.vmem [#allocation8], %s299
        %p301 = pneg %p119
        %p302 = pneg %p116
        %p303 = pneg %p145
        %p304 = pneg %p142
        %s305 = sand.u32 %s132, 1
        %s306 = scalar_lea.sflag [#allocation4], %s305
        %s307 = sand.u32 %s132, 1
        %s308 = smul.addr %s307, 256
        %s309 = scalar_lea.vmem [#allocation10], %s308
        %s310 = smul.u32 2, %s25
        %s311 = smul.u32 2, %s25
        %s312 = smul.u32 2, %s25
        %s313 = smul.u32 2, %s25
        %v314 = vld [vmem:[#allocation2] sm:$0xff]
        %v315 = vld [vmem:[#allocation2 + $0x8] sm:$0xff]
        %v316 = vld [vmem:[#allocation2 + $0x10] sm:$0xff]
        %v317 = vld [vmem:[#allocation2 + $0x18] sm:$0xff]
        %v318 = vld [vmem:[#allocation2 + $0x20] sm:$0xff]
        %v319 = vld [vmem:[#allocation2 + $0x28] sm:$0xff]
        %v320 = vld [vmem:[#allocation2 + $0x30] sm:$0xff]
        %v321 = vld [vmem:[#allocation2 + $0x38] sm:$0xff]
        %v322 = vld [vmem:[#allocation2 + $0x40] sm:$0xff]
        %v323 = vld [vmem:[#allocation2 + $0x48] sm:$0xff]
        %v324 = vld [vmem:[#allocation2 + $0x50] sm:$0xff]
        %v325 = vld [vmem:[#allocation2 + $0x58] sm:$0xff]
        %v326 = vld [vmem:[#allocation2 + $0x60] sm:$0xff]
        %v327 = vld [vmem:[#allocation2 + $0x68] sm:$0xff]
        %v328 = vld [vmem:[#allocation2 + $0x70] sm:$0xff]
        %v329 = vld [vmem:[#allocation2 + $0x78] sm:$0xff]
        %v330 = vld [vmem:[#allocation2 + $0x80] sm:$0xff]
        %v331 = vld [vmem:[#allocation2 + $0x88] sm:$0xff]
        %v332 = vld [vmem:[#allocation2 + $0x90] sm:$0xff]
        %v333 = vld [vmem:[#allocation2 + $0x98] sm:$0xff]
        %v334 = vld [vmem:[#allocation2 + $0xa0] sm:$0xff]
        %v335 = vld [vmem:[#allocation2 + $0xa8] sm:$0xff]
        %v336 = vld [vmem:[#allocation2 + $0xb0] sm:$0xff]
        %v337 = vld [vmem:[#allocation2 + $0xb8] sm:$0xff]
        %v338 = vld [vmem:[#allocation2 + $0xc0] sm:$0xff]
        %v339 = vld [vmem:[#allocation2 + $0xc8] sm:$0xff]
        %v340 = vld [vmem:[#allocation2 + $0xd0] sm:$0xff]
        %v341 = vld [vmem:[#allocation2 + $0xd8] sm:$0xff]
        %v342 = vld [vmem:[#allocation2 + $0xe0] sm:$0xff]
        %v343 = vld [vmem:[#allocation2 + $0xe8] sm:$0xff]
        %v344 = vld [vmem:[#allocation2 + $0xf0] sm:$0xff]
        %v345 = vld [vmem:[#allocation2 + $0xf8] sm:$0xff]
        %v346 = vld [vmem:[%s254] sm:$0xff]
        %v347 = vld [vmem:[%s254 + $0x8] sm:$0xff]
        %v348 = vld [vmem:[%s254 + $0x10] sm:$0xff]
        %v349 = vld [vmem:[%s254 + $0x18] sm:$0xff]
        %v350 = vld [vmem:[%s254 + $0x20] sm:$0xff]
        %v351 = vld [vmem:[%s254 + $0x28] sm:$0xff]
        %v352 = vld [vmem:[%s254 + $0x30] sm:$0xff]
        %v353 = vld [vmem:[%s254 + $0x38] sm:$0xff]
        %v354 = vld [vmem:[%s254 + $0x40] sm:$0xff]
        %v355 = vld [vmem:[%s254 + $0x48] sm:$0xff]
        %v356 = vld [vmem:[%s254 + $0x50] sm:$0xff]
        %v357 = vld [vmem:[%s254 + $0x58] sm:$0xff]
        %v358 = vld [vmem:[%s254 + $0x60] sm:$0xff]
        %v359 = vld [vmem:[%s254 + $0x68] sm:$0xff]
        %v360 = vld [vmem:[%s254 + $0x70] sm:$0xff]
        %v361 = vld [vmem:[%s254 + $0x78] sm:$0xff]
        %v362 = vld [vmem:[%s254 + $0x80] sm:$0xff]
        %v363 = vld [vmem:[%s254 + $0x88] sm:$0xff]
        %v364 = vld [vmem:[%s254 + $0x90] sm:$0xff]
        %v365 = vld [vmem:[%s254 + $0x98] sm:$0xff]
        %v366 = vld [vmem:[%s254 + $0xa0] sm:$0xff]
        %v367 = vld [vmem:[%s254 + $0xa8] sm:$0xff]
        %v368 = vld [vmem:[%s254 + $0xb0] sm:$0xff]
        %v369 = vld [vmem:[%s254 + $0xb8] sm:$0xff]
        %v370 = vld [vmem:[%s254 + $0xc0] sm:$0xff]
        %v371 = vld [vmem:[%s254 + $0xc8] sm:$0xff]
        %v372 = vld [vmem:[%s254 + $0xd0] sm:$0xff]
        %v373 = vld [vmem:[%s254 + $0xd8] sm:$0xff]
        %v374 = vld [vmem:[%s254 + $0xe0] sm:$0xff]
        %v375 = vld [vmem:[%s254 + $0xe8] sm:$0xff]
        %v376 = vld [vmem:[%s254 + $0xf0] sm:$0xff]
        %v377 = vld [vmem:[%s254 + $0xf8] sm:$0xff]
        %v410 = vunpack.c.l.b16 %v314
        %v411 = vunpack.c.h.b16 %v314
        %v412 = vunpack.c.l.b16 %v315
        %v413 = vunpack.c.h.b16 %v315
        %v414 = vunpack.c.l.b16 %v316
        %v415 = vunpack.c.h.b16 %v316
        %v416 = vunpack.c.l.b16 %v317
        %v417 = vunpack.c.h.b16 %v317
        %v418 = vunpack.c.l.b16 %v318
        %v419 = vunpack.c.h.b16 %v318
        %v420 = vunpack.c.l.b16 %v319
        %v421 = vunpack.c.h.b16 %v319
        %v422 = vunpack.c.l.b16 %v320
        %v423 = vunpack.c.h.b16 %v320
        %v424 = vunpack.c.l.b16 %v321
        %v425 = vunpack.c.h.b16 %v321
        %v426 = vunpack.c.l.b16 %v322
        %v427 = vunpack.c.h.b16 %v322
        %v428 = vunpack.c.l.b16 %v323
        %v429 = vunpack.c.h.b16 %v323
        %v430 = vunpack.c.l.b16 %v324
        %v431 = vunpack.c.h.b16 %v324
        %v432 = vunpack.c.l.b16 %v325
        %v433 = vunpack.c.h.b16 %v325
        %v434 = vunpack.c.l.b16 %v326
        %v435 = vunpack.c.h.b16 %v326
        %v436 = vunpack.c.l.b16 %v327
        %v437 = vunpack.c.h.b16 %v327
        %v438 = vunpack.c.l.b16 %v328
        %v439 = vunpack.c.h.b16 %v328
        %v440 = vunpack.c.l.b16 %v329
        %v441 = vunpack.c.h.b16 %v329
        %v442 = vunpack.c.l.b16 %v330
        %v443 = vunpack.c.h.b16 %v330
        %v444 = vunpack.c.l.b16 %v331
        %v445 = vunpack.c.h.b16 %v331
        %v446 = vunpack.c.l.b16 %v332
        %v447 = vunpack.c.h.b16 %v332
        %v448 = vunpack.c.l.b16 %v333
        %v449 = vunpack.c.h.b16 %v333
        %v450 = vunpack.c.l.b16 %v334
        %v451 = vunpack.c.h.b16 %v334
        %v452 = vunpack.c.l.b16 %v335
        %v453 = vunpack.c.h.b16 %v335
        %v454 = vunpack.c.l.b16 %v336
        %v455 = vunpack.c.h.b16 %v336
        %v456 = vunpack.c.l.b16 %v337
        %v457 = vunpack.c.h.b16 %v337
        %v458 = vunpack.c.l.b16 %v338
        %v459 = vunpack.c.h.b16 %v338
        %v460 = vunpack.c.l.b16 %v339
        %v461 = vunpack.c.h.b16 %v339
        %v462 = vunpack.c.l.b16 %v340
        %v463 = vunpack.c.h.b16 %v340
        %v464 = vunpack.c.l.b16 %v341
        %v465 = vunpack.c.h.b16 %v341
        %v466 = vunpack.c.l.b16 %v342
        %v467 = vunpack.c.h.b16 %v342
        %v468 = vunpack.c.l.b16 %v343
        %v469 = vunpack.c.h.b16 %v343
        %v470 = vunpack.c.l.b16 %v344
        %v471 = vunpack.c.h.b16 %v344
        %v472 = vunpack.c.l.b16 %v345
        %v473 = vunpack.c.h.b16 %v345
        %v474 = vpack.c.b16 %v412, %v410
        %v475 = vpack.c.b16 %v413, %v411
        %v476 = vpack.c.b16 %v416, %v414
        %v477 = vpack.c.b16 %v417, %v415
        %v478 = vpack.c.b16 %v420, %v418
        %v479 = vpack.c.b16 %v421, %v419
        %v480 = vpack.c.b16 %v424, %v422
        %v481 = vpack.c.b16 %v425, %v423
        %v482 = vpack.c.b16 %v428, %v426
        %v483 = vpack.c.b16 %v429, %v427
        %v484 = vpack.c.b16 %v432, %v430
        %v485 = vpack.c.b16 %v433, %v431
        %v486 = vpack.c.b16 %v436, %v434
        %v487 = vpack.c.b16 %v437, %v435
        %v488 = vpack.c.b16 %v440, %v438
        %v489 = vpack.c.b16 %v441, %v439
        %v490 = vpack.c.b16 %v444, %v442
        %v491 = vpack.c.b16 %v445, %v443
        %v492 = vpack.c.b16 %v448, %v446
        %v493 = vpack.c.b16 %v449, %v447
        %v494 = vpack.c.b16 %v452, %v450
        %v495 = vpack.c.b16 %v453, %v451
        %v496 = vpack.c.b16 %v456, %v454
        %v497 = vpack.c.b16 %v457, %v455
        %v498 = vpack.c.b16 %v460, %v458
        %v499 = vpack.c.b16 %v461, %v459
        %v500 = vpack.c.b16 %v464, %v462
        %v501 = vpack.c.b16 %v465, %v463
        %v502 = vpack.c.b16 %v468, %v466
        %v503 = vpack.c.b16 %v469, %v467
        %v504 = vpack.c.b16 %v472, %v470
        %v505 = vpack.c.b16 %v473, %v471
        %v570 = vunpack.c.l.b16 %v346
        %v571 = vunpack.c.h.b16 %v346
        %v572 = vunpack.c.l.b16 %v347
        %v573 = vunpack.c.h.b16 %v347
        %v574 = vunpack.c.l.b16 %v348
        %v575 = vunpack.c.h.b16 %v348
        %v576 = vunpack.c.l.b16 %v349
        %v577 = vunpack.c.h.b16 %v349
        %v578 = vunpack.c.l.b16 %v350
        %v579 = vunpack.c.h.b16 %v350
        %v580 = vunpack.c.l.b16 %v351
        %v581 = vunpack.c.h.b16 %v351
        %v582 = vunpack.c.l.b16 %v352
        %v583 = vunpack.c.h.b16 %v352
        %v584 = vunpack.c.l.b16 %v353
        %v585 = vunpack.c.h.b16 %v353
        %v586 = vunpack.c.l.b16 %v354
        %v587 = vunpack.c.h.b16 %v354
        %v588 = vunpack.c.l.b16 %v355
        %v589 = vunpack.c.h.b16 %v355
        %v590 = vunpack.c.l.b16 %v356
        %v591 = vunpack.c.h.b16 %v356
        %v592 = vunpack.c.l.b16 %v357
        %v593 = vunpack.c.h.b16 %v357
        %v594 = vunpack.c.l.b16 %v358
        %v595 = vunpack.c.h.b16 %v358
        %v596 = vunpack.c.l.b16 %v359
        %v597 = vunpack.c.h.b16 %v359
        %v598 = vunpack.c.l.b16 %v360
        %v599 = vunpack.c.h.b16 %v360
        %v600 = vunpack.c.l.b16 %v361
        %v601 = vunpack.c.h.b16 %v361
        %v602 = vunpack.c.l.b16 %v362
        %v603 = vunpack.c.h.b16 %v362
        %v604 = vunpack.c.l.b16 %v363
        %v605 = vunpack.c.h.b16 %v363
        %v606 = vunpack.c.l.b16 %v364
        %v607 = vunpack.c.h.b16 %v364
        %v608 = vunpack.c.l.b16 %v365
        %v609 = vunpack.c.h.b16 %v365
        %v610 = vunpack.c.l.b16 %v366
        %v611 = vunpack.c.h.b16 %v366
        %v612 = vunpack.c.l.b16 %v367
        %v613 = vunpack.c.h.b16 %v367
        %v614 = vunpack.c.l.b16 %v368
        %v615 = vunpack.c.h.b16 %v368
        %v616 = vunpack.c.l.b16 %v369
        %v617 = vunpack.c.h.b16 %v369
        %v618 = vunpack.c.l.b16 %v370
        %v619 = vunpack.c.h.b16 %v370
        %v620 = vunpack.c.l.b16 %v371
        %v621 = vunpack.c.h.b16 %v371
        %v622 = vunpack.c.l.b16 %v372
        %v623 = vunpack.c.h.b16 %v372
        %v624 = vunpack.c.l.b16 %v373
        %v625 = vunpack.c.h.b16 %v373
        %v626 = vunpack.c.l.b16 %v374
        %v627 = vunpack.c.h.b16 %v374
        %v628 = vunpack.c.l.b16 %v375
        %v629 = vunpack.c.h.b16 %v375
        %v630 = vunpack.c.l.b16 %v376
        %v631 = vunpack.c.h.b16 %v376
        %v632 = vunpack.c.l.b16 %v377
        %v633 = vunpack.c.h.b16 %v377
        %v634 = vpack.c.b16 %v572, %v570
        %v635 = vpack.c.b16 %v573, %v571
        %v636 = vpack.c.b16 %v576, %v574
        %v637 = vpack.c.b16 %v577, %v575
        %v638 = vpack.c.b16 %v580, %v578
        %v639 = vpack.c.b16 %v581, %v579
        %v640 = vpack.c.b16 %v584, %v582
        %v641 = vpack.c.b16 %v585, %v583
        %v642 = vpack.c.b16 %v588, %v586
        %v643 = vpack.c.b16 %v589, %v587
        %v644 = vpack.c.b16 %v592, %v590
        %v645 = vpack.c.b16 %v593, %v591
        %v646 = vpack.c.b16 %v596, %v594
        %v647 = vpack.c.b16 %v597, %v595
        %v648 = vpack.c.b16 %v600, %v598
        %v649 = vpack.c.b16 %v601, %v599
        %v650 = vpack.c.b16 %v604, %v602
        %v651 = vpack.c.b16 %v605, %v603
        %v652 = vpack.c.b16 %v608, %v606
        %v653 = vpack.c.b16 %v609, %v607
        %v654 = vpack.c.b16 %v612, %v610
        %v655 = vpack.c.b16 %v613, %v611
        %v656 = vpack.c.b16 %v616, %v614
        %v657 = vpack.c.b16 %v617, %v615
        %v658 = vpack.c.b16 %v620, %v618
        %v659 = vpack.c.b16 %v621, %v619
        %v660 = vpack.c.b16 %v624, %v622
        %v661 = vpack.c.b16 %v625, %v623
        %v662 = vpack.c.b16 %v628, %v626
        %v663 = vpack.c.b16 %v629, %v627
        %v664 = vpack.c.b16 %v632, %v630
        %v665 = vpack.c.b16 %v633, %v631
        %698 = vmatpush.bf16.msra.mxu0 %v648
        %699 = vmatpush.bf16.msra.mxu0 %v646
        %700 = vmatpush.bf16.msra.mxu0 %v644
        %701 = vmatpush.bf16.msra.mxu0 %v642
        %702 = vmatpush.bf16.msra.mxu0 %v640
        %703 = vmatpush.bf16.msra.mxu0 %v638
        %704 = vmatpush.bf16.msra.mxu0 %v636
        %705 = vmatpush.bf16.msra.mxu0 %v634
        %706 = vmatmul.bf16.gmra.mxu0 %v474
        %v707 = vpop.f32.mrf.mxu0
        %v708 = vadd.f32 0.0, %v707
        %v709 = vpop.f32.mrf.mxu0
        %v710 = vadd.f32 0.0, %v709
        %711 = vmatmul.bf16.gmra.mxu0 %v476
        %v712 = vpop.f32.mrf.mxu0
        %v713 = vadd.f32 0.0, %v712
        %v714 = vpop.f32.mrf.mxu0
        %v715 = vadd.f32 0.0, %v714
        %716 = vmatmul.bf16.gmra.mxu0 %v478
        %v717 = vpop.f32.mrf.mxu0
        %v718 = vadd.f32 0.0, %v717
        %v719 = vpop.f32.mrf.mxu0
        %v720 = vadd.f32 0.0, %v719
        %721 = vmatmul.bf16.gmra.mxu0 %v480
        %v722 = vpop.f32.mrf.mxu0
        %v723 = vadd.f32 0.0, %v722
        %v724 = vpop.f32.mrf.mxu0
        %v725 = vadd.f32 0.0, %v724
        %726 = vmatmul.bf16.gmra.mxu0 %v482
        %v727 = vpop.f32.mrf.mxu0
        %v728 = vadd.f32 0.0, %v727
        %v729 = vpop.f32.mrf.mxu0
        %v730 = vadd.f32 0.0, %v729
        %731 = vmatmul.bf16.gmra.mxu0 %v484
        %v732 = vpop.f32.mrf.mxu0
        %v733 = vadd.f32 0.0, %v732
        %v734 = vpop.f32.mrf.mxu0
        %v735 = vadd.f32 0.0, %v734
        %736 = vmatmul.bf16.gmra.mxu0 %v486
        %v737 = vpop.f32.mrf.mxu0
        %v738 = vadd.f32 0.0, %v737
        %v739 = vpop.f32.mrf.mxu0
        %v740 = vadd.f32 0.0, %v739
        %741 = vmatmul.bf16.gmra.mxu0 %v488
        %v742 = vpop.f32.mrf.mxu0
        %v743 = vadd.f32 0.0, %v742
        %v744 = vpop.f32.mrf.mxu0
        %v745 = vadd.f32 0.0, %v744
        %746 = vmatmul.bf16.gmra.mxu0 %v490
        %v747 = vpop.f32.mrf.mxu0
        %v748 = vadd.f32 0.0, %v747
        %v749 = vpop.f32.mrf.mxu0
        %v750 = vadd.f32 0.0, %v749
        %751 = vmatmul.bf16.gmra.mxu0 %v492
        %v752 = vpop.f32.mrf.mxu0
        %v753 = vadd.f32 0.0, %v752
        %v754 = vpop.f32.mrf.mxu0
        %v755 = vadd.f32 0.0, %v754
        %756 = vmatmul.bf16.gmra.mxu0 %v494
        %v757 = vpop.f32.mrf.mxu0
        %v758 = vadd.f32 0.0, %v757
        %v759 = vpop.f32.mrf.mxu0
        %v760 = vadd.f32 0.0, %v759
        %761 = vmatmul.bf16.gmra.mxu0 %v496
        %v762 = vpop.f32.mrf.mxu0
        %v763 = vadd.f32 0.0, %v762
        %v764 = vpop.f32.mrf.mxu0
        %v765 = vadd.f32 0.0, %v764
        %766 = vmatmul.bf16.gmra.mxu0 %v498
        %v767 = vpop.f32.mrf.mxu0
        %v768 = vadd.f32 0.0, %v767
        %v769 = vpop.f32.mrf.mxu0
        %v770 = vadd.f32 0.0, %v769
        %771 = vmatmul.bf16.gmra.mxu0 %v500
        %v772 = vpop.f32.mrf.mxu0
        %v773 = vadd.f32 0.0, %v772
        %v774 = vpop.f32.mrf.mxu0
        %v775 = vadd.f32 0.0, %v774
        %776 = vmatmul.bf16.gmra.mxu0 %v502
        %v777 = vpop.f32.mrf.mxu0
        %v778 = vadd.f32 0.0, %v777
        %v779 = vpop.f32.mrf.mxu0
        %v780 = vadd.f32 0.0, %v779
        %781 = vmatmul.bf16.gmra.mxu0 %v504
        %v782 = vpop.f32.mrf.mxu0
        %v783 = vadd.f32 0.0, %v782
        %v784 = vpop.f32.mrf.mxu0
        %v785 = vadd.f32 0.0, %v784
        %786 = vdwg.mxu0
        %787 = vmatpush.bf16.msra.mxu0 %v664
        %788 = vmatpush.bf16.msra.mxu0 %v662
        %789 = vmatpush.bf16.msra.mxu0 %v660
        %790 = vmatpush.bf16.msra.mxu0 %v658
        %791 = vmatpush.bf16.msra.mxu0 %v656
        %792 = vmatpush.bf16.msra.mxu0 %v654
        %793 = vmatpush.bf16.msra.mxu0 %v652
        %794 = vmatpush.bf16.msra.mxu0 %v650
        %795 = vmatmul.bf16.gmra.mxu0 %v475
        %v796 = vpop.f32.mrf.mxu0
        %v797 = vadd.f32 %v708, %v796
        %v798 = vpop.f32.mrf.mxu0
        %v799 = vadd.f32 %v710, %v798
        %800 = vmatmul.bf16.gmra.mxu0 %v477
        %v801 = vpop.f32.mrf.mxu0
        %v802 = vadd.f32 %v713, %v801
        %v803 = vpop.f32.mrf.mxu0
        %v804 = vadd.f32 %v715, %v803
        %805 = vmatmul.bf16.gmra.mxu0 %v479
        %v806 = vpop.f32.mrf.mxu0
        %v807 = vadd.f32 %v718, %v806
        %v808 = vpop.f32.mrf.mxu0
        %v809 = vadd.f32 %v720, %v808
        %810 = vmatmul.bf16.gmra.mxu0 %v481
        %v811 = vpop.f32.mrf.mxu0
        %v812 = vadd.f32 %v723, %v811
        %v813 = vpop.f32.mrf.mxu0
        %v814 = vadd.f32 %v725, %v813
        %815 = vmatmul.bf16.gmra.mxu0 %v483
        %v816 = vpop.f32.mrf.mxu0
        %v817 = vadd.f32 %v728, %v816
        %v818 = vpop.f32.mrf.mxu0
        %v819 = vadd.f32 %v730, %v818
        %820 = vmatmul.bf16.gmra.mxu0 %v485
        %v821 = vpop.f32.mrf.mxu0
        %v822 = vadd.f32 %v733, %v821
        %v823 = vpop.f32.mrf.mxu0
        %v824 = vadd.f32 %v735, %v823
        %825 = vmatmul.bf16.gmra.mxu0 %v487
        %v826 = vpop.f32.mrf.mxu0
        %v827 = vadd.f32 %v738, %v826
        %v828 = vpop.f32.mrf.mxu0
        %v829 = vadd.f32 %v740, %v828
        %830 = vmatmul.bf16.gmra.mxu0 %v489
        %v831 = vpop.f32.mrf.mxu0
        %v832 = vadd.f32 %v743, %v831
        %v833 = vpop.f32.mrf.mxu0
        %v834 = vadd.f32 %v745, %v833
        %835 = vmatmul.bf16.gmra.mxu0 %v491
        %v836 = vpop.f32.mrf.mxu0
        %v837 = vadd.f32 %v748, %v836
        %v838 = vpop.f32.mrf.mxu0
        %v839 = vadd.f32 %v750, %v838
        %840 = vmatmul.bf16.gmra.mxu0 %v493
        %v841 = vpop.f32.mrf.mxu0
        %v842 = vadd.f32 %v753, %v841
        %v843 = vpop.f32.mrf.mxu0
        %v844 = vadd.f32 %v755, %v843
        %845 = vmatmul.bf16.gmra.mxu0 %v495
        %v846 = vpop.f32.mrf.mxu0
        %v847 = vadd.f32 %v758, %v846
        %v848 = vpop.f32.mrf.mxu0
        %v849 = vadd.f32 %v760, %v848
        %850 = vmatmul.bf16.gmra.mxu0 %v497
        %v851 = vpop.f32.mrf.mxu0
        %v852 = vadd.f32 %v763, %v851
        %v853 = vpop.f32.mrf.mxu0
        %v854 = vadd.f32 %v765, %v853
        %855 = vmatmul.bf16.gmra.mxu0 %v499
        %v856 = vpop.f32.mrf.mxu0
        %v857 = vadd.f32 %v768, %v856
        %v858 = vpop.f32.mrf.mxu0
        %v859 = vadd.f32 %v770, %v858
        %860 = vmatmul.bf16.gmra.mxu0 %v501
        %v861 = vpop.f32.mrf.mxu0
        %v862 = vadd.f32 %v773, %v861
        %v863 = vpop.f32.mrf.mxu0
        %v864 = vadd.f32 %v775, %v863
        %865 = vmatmul.bf16.gmra.mxu0 %v503
        %v866 = vpop.f32.mrf.mxu0
        %v867 = vadd.f32 %v778, %v866
        %v868 = vpop.f32.mrf.mxu0
        %v869 = vadd.f32 %v780, %v868
        %870 = vmatmul.bf16.gmra.mxu0 %v505
        %v871 = vpop.f32.mrf.mxu0
        %v872 = vadd.f32 %v783, %v871
        %v873 = vpop.f32.mrf.mxu0
        %v874 = vadd.f32 %v785, %v873
        %875 = vdwg.mxu0
        %876 = vmatpush.bf16.msra.mxu0 %v649
        %877 = vmatpush.bf16.msra.mxu0 %v647
        %878 = vmatpush.bf16.msra.mxu0 %v645
        %879 = vmatpush.bf16.msra.mxu0 %v643
        %880 = vmatpush.bf16.msra.mxu0 %v641
        %881 = vmatpush.bf16.msra.mxu0 %v639
        %882 = vmatpush.bf16.msra.mxu0 %v637
        %883 = vmatpush.bf16.msra.mxu0 %v635
        %884 = vmatmul.bf16.gmra.mxu0 %v474
        %v885 = vpop.f32.mrf.mxu0
        %v886 = vadd.f32 0.0, %v885
        %v887 = vpop.f32.mrf.mxu0
        %v888 = vadd.f32 0.0, %v887
        %889 = vmatmul.bf16.gmra.mxu0 %v476
        %v890 = vpop.f32.mrf.mxu0
        %v891 = vadd.f32 0.0, %v890
        %v892 = vpop.f32.mrf.mxu0
        %v893 = vadd.f32 0.0, %v892
        %894 = vmatmul.bf16.gmra.mxu0 %v478
        %v895 = vpop.f32.mrf.mxu0
        %v896 = vadd.f32 0.0, %v895
        %v897 = vpop.f32.mrf.mxu0
        %v898 = vadd.f32 0.0, %v897
        %899 = vmatmul.bf16.gmra.mxu0 %v480
        %v900 = vpop.f32.mrf.mxu0
        %v901 = vadd.f32 0.0, %v900
        %v902 = vpop.f32.mrf.mxu0
        %v903 = vadd.f32 0.0, %v902
        %904 = vmatmul.bf16.gmra.mxu0 %v482
        %v905 = vpop.f32.mrf.mxu0
        %v906 = vadd.f32 0.0, %v905
        %v907 = vpop.f32.mrf.mxu0
        %v908 = vadd.f32 0.0, %v907
        %909 = vmatmul.bf16.gmra.mxu0 %v484
        %v910 = vpop.f32.mrf.mxu0
        %v911 = vadd.f32 0.0, %v910
        %v912 = vpop.f32.mrf.mxu0
        %v913 = vadd.f32 0.0, %v912
        %914 = vmatmul.bf16.gmra.mxu0 %v486
        %v915 = vpop.f32.mrf.mxu0
        %v916 = vadd.f32 0.0, %v915
        %v917 = vpop.f32.mrf.mxu0
        %v918 = vadd.f32 0.0, %v917
        %919 = vmatmul.bf16.gmra.mxu0 %v488
        %v920 = vpop.f32.mrf.mxu0
        %v921 = vadd.f32 0.0, %v920
        %v922 = vpop.f32.mrf.mxu0
        %v923 = vadd.f32 0.0, %v922
        %924 = vmatmul.bf16.gmra.mxu0 %v490
        %v925 = vpop.f32.mrf.mxu0
        %v926 = vadd.f32 0.0, %v925
        %v927 = vpop.f32.mrf.mxu0
        %v928 = vadd.f32 0.0, %v927
        %929 = vmatmul.bf16.gmra.mxu0 %v492
        %v930 = vpop.f32.mrf.mxu0
        %v931 = vadd.f32 0.0, %v930
        %v932 = vpop.f32.mrf.mxu0
        %v933 = vadd.f32 0.0, %v932
        %934 = vmatmul.bf16.gmra.mxu0 %v494
        %v935 = vpop.f32.mrf.mxu0
        %v936 = vadd.f32 0.0, %v935
        %v937 = vpop.f32.mrf.mxu0
        %v938 = vadd.f32 0.0, %v937
        %939 = vmatmul.bf16.gmra.mxu0 %v496
        %v940 = vpop.f32.mrf.mxu0
        %v941 = vadd.f32 0.0, %v940
        %v942 = vpop.f32.mrf.mxu0
        %v943 = vadd.f32 0.0, %v942
        %944 = vmatmul.bf16.gmra.mxu0 %v498
        %v945 = vpop.f32.mrf.mxu0
        %v946 = vadd.f32 0.0, %v945
        %v947 = vpop.f32.mrf.mxu0
        %v948 = vadd.f32 0.0, %v947
        %949 = vmatmul.bf16.gmra.mxu0 %v500
        %v950 = vpop.f32.mrf.mxu0
        %v951 = vadd.f32 0.0, %v950
        %v952 = vpop.f32.mrf.mxu0
        %v953 = vadd.f32 0.0, %v952
        %954 = vmatmul.bf16.gmra.mxu0 %v502
        %v955 = vpop.f32.mrf.mxu0
        %v956 = vadd.f32 0.0, %v955
        %v957 = vpop.f32.mrf.mxu0
        %v958 = vadd.f32 0.0, %v957
        %959 = vmatmul.bf16.gmra.mxu0 %v504
        %v960 = vpop.f32.mrf.mxu0
        %v961 = vadd.f32 0.0, %v960
        %v962 = vpop.f32.mrf.mxu0
        %v963 = vadd.f32 0.0, %v962
        %964 = vdwg.mxu0
        %965 = vmatpush.bf16.msra.mxu0 %v665
        %966 = vmatpush.bf16.msra.mxu0 %v663
        %967 = vmatpush.bf16.msra.mxu0 %v661
        %968 = vmatpush.bf16.msra.mxu0 %v659
        %969 = vmatpush.bf16.msra.mxu0 %v657
        %970 = vmatpush.bf16.msra.mxu0 %v655
        %971 = vmatpush.bf16.msra.mxu0 %v653
        %972 = vmatpush.bf16.msra.mxu0 %v651
        %973 = vmatmul.bf16.gmra.mxu0 %v475
        %v974 = vpop.f32.mrf.mxu0
        %v975 = vadd.f32 %v886, %v974
        %v976 = vpop.f32.mrf.mxu0
        %v977 = vadd.f32 %v888, %v976
        %978 = vmatmul.bf16.gmra.mxu0 %v477
        %v979 = vpop.f32.mrf.mxu0
        %v980 = vadd.f32 %v891, %v979
        %v981 = vpop.f32.mrf.mxu0
        %v982 = vadd.f32 %v893, %v981
        %983 = vmatmul.bf16.gmra.mxu0 %v479
        %v984 = vpop.f32.mrf.mxu0
        %v985 = vadd.f32 %v896, %v984
        %v986 = vpop.f32.mrf.mxu0
        %v987 = vadd.f32 %v898, %v986
        %988 = vmatmul.bf16.gmra.mxu0 %v481
        %v989 = vpop.f32.mrf.mxu0
        %v990 = vadd.f32 %v901, %v989
        %v991 = vpop.f32.mrf.mxu0
        %v992 = vadd.f32 %v903, %v991
        %993 = vmatmul.bf16.gmra.mxu0 %v483
        %v994 = vpop.f32.mrf.mxu0
        %v995 = vadd.f32 %v906, %v994
        %v996 = vpop.f32.mrf.mxu0
        %v997 = vadd.f32 %v908, %v996
        %998 = vmatmul.bf16.gmra.mxu0 %v485
        %v999 = vpop.f32.mrf.mxu0
        %v1000 = vadd.f32 %v911, %v999
        %v1001 = vpop.f32.mrf.mxu0
        %v1002 = vadd.f32 %v913, %v1001
        %1003 = vmatmul.bf16.gmra.mxu0 %v487
        %v1004 = vpop.f32.mrf.mxu0
        %v1005 = vadd.f32 %v916, %v1004
        %v1006 = vpop.f32.mrf.mxu0
        %v1007 = vadd.f32 %v918, %v1006
        %1008 = vmatmul.bf16.gmra.mxu0 %v489
        %v1009 = vpop.f32.mrf.mxu0
        %v1010 = vadd.f32 %v921, %v1009
        %v1011 = vpop.f32.mrf.mxu0
        %v1012 = vadd.f32 %v923, %v1011
        %1013 = vmatmul.bf16.gmra.mxu0 %v491
        %v1014 = vpop.f32.mrf.mxu0
        %v1015 = vadd.f32 %v926, %v1014
        %v1016 = vpop.f32.mrf.mxu0
        %v1017 = vadd.f32 %v928, %v1016
        %1018 = vmatmul.bf16.gmra.mxu0 %v493
        %v1019 = vpop.f32.mrf.mxu0
        %v1020 = vadd.f32 %v931, %v1019
        %v1021 = vpop.f32.mrf.mxu0
        %v1022 = vadd.f32 %v933, %v1021
        %1023 = vmatmul.bf16.gmra.mxu0 %v495
        %v1024 = vpop.f32.mrf.mxu0
        %v1025 = vadd.f32 %v936, %v1024
        %v1026 = vpop.f32.mrf.mxu0
        %v1027 = vadd.f32 %v938, %v1026
        %1028 = vmatmul.bf16.gmra.mxu0 %v497
        %v1029 = vpop.f32.mrf.mxu0
        %v1030 = vadd.f32 %v941, %v1029
        %v1031 = vpop.f32.mrf.mxu0
        %v1032 = vadd.f32 %v943, %v1031
        %1033 = vmatmul.bf16.gmra.mxu0 %v499
        %v1034 = vpop.f32.mrf.mxu0
        %v1035 = vadd.f32 %v946, %v1034
        %v1036 = vpop.f32.mrf.mxu0
        %v1037 = vadd.f32 %v948, %v1036
        %1038 = vmatmul.bf16.gmra.mxu0 %v501
        %v1039 = vpop.f32.mrf.mxu0
        %v1040 = vadd.f32 %v951, %v1039
        %v1041 = vpop.f32.mrf.mxu0
        %v1042 = vadd.f32 %v953, %v1041
        %1043 = vmatmul.bf16.gmra.mxu0 %v503
        %v1044 = vpop.f32.mrf.mxu0
        %v1045 = vadd.f32 %v956, %v1044
        %v1046 = vpop.f32.mrf.mxu0
        %v1047 = vadd.f32 %v958, %v1046
        %1048 = vmatmul.bf16.gmra.mxu0 %v505
        %v1049 = vpop.f32.mrf.mxu0
        %v1050 = vadd.f32 %v961, %v1049
        %v1051 = vpop.f32.mrf.mxu0
        %v1052 = vadd.f32 %v963, %v1051
        %1053 = vdwg.mxu0
        %v1054 = vld [vmem:[%s264] sm:$0x3]
        %v1055 = vld [vmem:[%s274] sm:$0x3]
        %v1056 = vadd.f32 %v797, %v799
        %v1057 = vadd.f32 %v1056, %v802
        %v1058 = vadd.f32 %v1057, %v804
        %v1059 = vadd.f32 %v1058, %v807
        %v1060 = vadd.f32 %v1059, %v809
        %v1061 = vadd.f32 %v1060, %v812
        %v1062 = vadd.f32 %v1061, %v814
        %v1063 = vadd.f32 %v1062, %v817
        %v1064 = vadd.f32 %v1063, %v819
        %v1065 = vadd.f32 %v1064, %v822
        %v1066 = vadd.f32 %v1065, %v824
        %v1067 = vadd.f32 %v1066, %v827
        %v1068 = vadd.f32 %v1067, %v829
        %v1069 = vadd.f32 %v1068, %v832
        %v1070 = vadd.f32 %v1069, %v834
        %v1071 = vadd.f32 %v1070, %v837
        %v1072 = vadd.f32 %v1071, %v839
        %v1073 = vadd.f32 %v1072, %v842
        %v1074 = vadd.f32 %v1073, %v844
        %v1075 = vadd.f32 %v1074, %v847
        %v1076 = vadd.f32 %v1075, %v849
        %v1077 = vadd.f32 %v1076, %v852
        %v1078 = vadd.f32 %v1077, %v854
        %v1079 = vadd.f32 %v1078, %v857
        %v1080 = vadd.f32 %v1079, %v859
        %v1081 = vadd.f32 %v1080, %v862
        %v1082 = vadd.f32 %v1081, %v864
        %v1083 = vadd.f32 %v1082, %v867
        %v1084 = vadd.f32 %v1083, %v869
        %v1085 = vadd.f32 %v1084, %v872
        %v1086 = vadd.f32 %v1085, %v874
        %v1087 = vrot.slane %v1086, 4
        %v1088 = vadd.f32 %v1086, %v1087
        %v1089 = vrot.slane %v1088, 2
        %v1090 = vadd.f32 %v1088, %v1089
        %v1091 = vrot.slane %v1090, 1
        %v1092 = vadd.f32 %v1090, %v1091
        %v1093 = vadd.f32 %v975, %v977
        %v1094 = vadd.f32 %v1093, %v980
        %v1095 = vadd.f32 %v1094, %v982
        %v1096 = vadd.f32 %v1095, %v985
        %v1097 = vadd.f32 %v1096, %v987
        %v1098 = vadd.f32 %v1097, %v990
        %v1099 = vadd.f32 %v1098, %v992
        %v1100 = vadd.f32 %v1099, %v995
        %v1101 = vadd.f32 %v1100, %v997
        %v1102 = vadd.f32 %v1101, %v1000
        %v1103 = vadd.f32 %v1102, %v1002
        %v1104 = vadd.f32 %v1103, %v1005
        %v1105 = vadd.f32 %v1104, %v1007
        %v1106 = vadd.f32 %v1105, %v1010
        %v1107 = vadd.f32 %v1106, %v1012
        %v1108 = vadd.f32 %v1107, %v1015
        %v1109 = vadd.f32 %v1108, %v1017
        %v1110 = vadd.f32 %v1109, %v1020
        %v1111 = vadd.f32 %v1110, %v1022
        %v1112 = vadd.f32 %v1111, %v1025
        %v1113 = vadd.f32 %v1112, %v1027
        %v1114 = vadd.f32 %v1113, %v1030
        %v1115 = vadd.f32 %v1114, %v1032
        %v1116 = vadd.f32 %v1115, %v1035
        %v1117 = vadd.f32 %v1116, %v1037
        %v1118 = vadd.f32 %v1117, %v1040
        %v1119 = vadd.f32 %v1118, %v1042
        %v1120 = vadd.f32 %v1119, %v1045
        %v1121 = vadd.f32 %v1120, %v1047
        %v1122 = vadd.f32 %v1121, %v1050
        %v1123 = vadd.f32 %v1122, %v1052
        %v1124 = vrot.slane %v1123, 4
        %v1125 = vadd.f32 %v1123, %v1124
        %v1126 = vrot.slane %v1125, 2
        %v1127 = vadd.f32 %v1125, %v1126
        %v1128 = vrot.slane %v1127, 1
        %v1129 = vadd.f32 %v1127, %v1128
        %v1130 = vmul.f32 %v797, %v797
        %v1131 = vmul.f32 %v975, %v975
        %v1132 = vmul.f32 %v799, %v799
        %v1133 = vmul.f32 %v977, %v977
        %v1134 = vmul.f32 %v802, %v802
        %v1135 = vmul.f32 %v980, %v980
        %v1136 = vmul.f32 %v804, %v804
        %v1137 = vmul.f32 %v982, %v982
        %v1138 = vmul.f32 %v807, %v807
        %v1139 = vmul.f32 %v985, %v985
        %v1140 = vmul.f32 %v809, %v809
        %v1141 = vmul.f32 %v987, %v987
        %v1142 = vmul.f32 %v812, %v812
        %v1143 = vmul.f32 %v990, %v990
        %v1144 = vmul.f32 %v814, %v814
        %v1145 = vmul.f32 %v992, %v992
        %v1146 = vmul.f32 %v817, %v817
        %v1147 = vmul.f32 %v995, %v995
        %v1148 = vmul.f32 %v819, %v819
        %v1149 = vmul.f32 %v997, %v997
        %v1150 = vmul.f32 %v822, %v822
        %v1151 = vmul.f32 %v1000, %v1000
        %v1152 = vmul.f32 %v824, %v824
        %v1153 = vmul.f32 %v1002, %v1002
        %v1154 = vmul.f32 %v827, %v827
        %v1155 = vmul.f32 %v1005, %v1005
        %v1156 = vmul.f32 %v829, %v829
        %v1157 = vmul.f32 %v1007, %v1007
        %v1158 = vmul.f32 %v832, %v832
        %v1159 = vmul.f32 %v1010, %v1010
        %v1160 = vmul.f32 %v834, %v834
        %v1161 = vmul.f32 %v1012, %v1012
        %v1162 = vmul.f32 %v837, %v837
        %v1163 = vmul.f32 %v1015, %v1015
        %v1164 = vmul.f32 %v839, %v839
        %v1165 = vmul.f32 %v1017, %v1017
        %v1166 = vmul.f32 %v842, %v842
        %v1167 = vmul.f32 %v1020, %v1020
        %v1168 = vmul.f32 %v844, %v844
        %v1169 = vmul.f32 %v1022, %v1022
        %v1170 = vmul.f32 %v847, %v847
        %v1171 = vmul.f32 %v1025, %v1025
        %v1172 = vmul.f32 %v849, %v849
        %v1173 = vmul.f32 %v1027, %v1027
        %v1174 = vmul.f32 %v852, %v852
        %v1175 = vmul.f32 %v1030, %v1030
        %v1176 = vmul.f32 %v854, %v854
        %v1177 = vmul.f32 %v1032, %v1032
        %v1178 = vmul.f32 %v857, %v857
        %v1179 = vmul.f32 %v1035, %v1035
        %v1180 = vmul.f32 %v859, %v859
        %v1181 = vmul.f32 %v1037, %v1037
        %v1182 = vmul.f32 %v862, %v862
        %v1183 = vmul.f32 %v1040, %v1040
        %v1184 = vmul.f32 %v864, %v864
        %v1185 = vmul.f32 %v1042, %v1042
        %v1186 = vmul.f32 %v867, %v867
        %v1187 = vmul.f32 %v1045, %v1045
        %v1188 = vmul.f32 %v869, %v869
        %v1189 = vmul.f32 %v1047, %v1047
        %v1190 = vmul.f32 %v872, %v872
        %v1191 = vmul.f32 %v1050, %v1050
        %v1192 = vmul.f32 %v874, %v874
        %v1193 = vmul.f32 %v1052, %v1052
        %v1194 = vadd.f32 %v1130, %v1132
        %v1195 = vadd.f32 %v1194, %v1134
        %v1196 = vadd.f32 %v1195, %v1136
        %v1197 = vadd.f32 %v1196, %v1138
        %v1198 = vadd.f32 %v1197, %v1140
        %v1199 = vadd.f32 %v1198, %v1142
        %v1200 = vadd.f32 %v1199, %v1144
        %v1201 = vadd.f32 %v1200, %v1146
        %v1202 = vadd.f32 %v1201, %v1148
        %v1203 = vadd.f32 %v1202, %v1150
        %v1204 = vadd.f32 %v1203, %v1152
        %v1205 = vadd.f32 %v1204, %v1154
        %v1206 = vadd.f32 %v1205, %v1156
        %v1207 = vadd.f32 %v1206, %v1158
        %v1208 = vadd.f32 %v1207, %v1160
        %v1209 = vadd.f32 %v1208, %v1162
        %v1210 = vadd.f32 %v1209, %v1164
        %v1211 = vadd.f32 %v1210, %v1166
        %v1212 = vadd.f32 %v1211, %v1168
        %v1213 = vadd.f32 %v1212, %v1170
        %v1214 = vadd.f32 %v1213, %v1172
        %v1215 = vadd.f32 %v1214, %v1174
        %v1216 = vadd.f32 %v1215, %v1176
        %v1217 = vadd.f32 %v1216, %v1178
        %v1218 = vadd.f32 %v1217, %v1180
        %v1219 = vadd.f32 %v1218, %v1182
        %v1220 = vadd.f32 %v1219, %v1184
        %v1221 = vadd.f32 %v1220, %v1186
        %v1222 = vadd.f32 %v1221, %v1188
        %v1223 = vadd.f32 %v1222, %v1190
        %v1224 = vadd.f32 %v1223, %v1192
        %v1225 = vrot.slane %v1224, 4
        %v1226 = vadd.f32 %v1224, %v1225
        %v1227 = vrot.slane %v1226, 2
        %v1228 = vadd.f32 %v1226, %v1227
        %v1229 = vrot.slane %v1228, 1
        %v1230 = vadd.f32 %v1228, %v1229
        %v1231 = vadd.f32 %v1131, %v1133
        %v1232 = vadd.f32 %v1231, %v1135
        %v1233 = vadd.f32 %v1232, %v1137
        %v1234 = vadd.f32 %v1233, %v1139
        %v1235 = vadd.f32 %v1234, %v1141
        %v1236 = vadd.f32 %v1235, %v1143
        %v1237 = vadd.f32 %v1236, %v1145
        %v1238 = vadd.f32 %v1237, %v1147
        %v1239 = vadd.f32 %v1238, %v1149
        %v1240 = vadd.f32 %v1239, %v1151
        %v1241 = vadd.f32 %v1240, %v1153
        %v1242 = vadd.f32 %v1241, %v1155
        %v1243 = vadd.f32 %v1242, %v1157
        %v1244 = vadd.f32 %v1243, %v1159
        %v1245 = vadd.f32 %v1244, %v1161
        %v1246 = vadd.f32 %v1245, %v1163
        %v1247 = vadd.f32 %v1246, %v1165
        %v1248 = vadd.f32 %v1247, %v1167
        %v1249 = vadd.f32 %v1248, %v1169
        %v1250 = vadd.f32 %v1249, %v1171
        %v1251 = vadd.f32 %v1250, %v1173
        %v1252 = vadd.f32 %v1251, %v1175
        %v1253 = vadd.f32 %v1252, %v1177
        %v1254 = vadd.f32 %v1253, %v1179
        %v1255 = vadd.f32 %v1254, %v1181
        %v1256 = vadd.f32 %v1255, %v1183
        %v1257 = vadd.f32 %v1256, %v1185
        %v1258 = vadd.f32 %v1257, %v1187
        %v1259 = vadd.f32 %v1258, %v1189
        %v1260 = vadd.f32 %v1259, %v1191
        %v1261 = vadd.f32 %v1260, %v1193
        %v1262 = vrot.slane %v1261, 4
        %v1263 = vadd.f32 %v1261, %v1262
        %v1264 = vrot.slane %v1263, 2
        %v1265 = vadd.f32 %v1263, %v1264
        %v1266 = vrot.slane %v1265, 1
        %v1267 = vadd.f32 %v1265, %v1266
        %v1268 = vmul.f32 %v1092, 0.00390625
        %v1269 = vmul.f32 %v1129, 0.00390625
        %v1270 = vmul.f32 %v1230, 0.00390625
        %v1271 = vmul.f32 %v1267, 0.00390625
        %v1272 = vmul.f32 %v1268, %v1268
        %v1273 = vmul.f32 %v1269, %v1269
        %v1274 = vsub.f32 %v1270, %v1272
        %v1275 = vsub.f32 %v1271, %v1273
        %v1276 = vmax.f32 %v1274, 0.0
        %v1277 = vmax.f32 %v1275, 0.0
        %v1278 = vsub.f32 %v797, %v1268
        %v1279 = vsub.f32 %v975, %v1269
        %v1280 = vsub.f32 %v799, %v1268
        %v1281 = vsub.f32 %v977, %v1269
        %v1282 = vsub.f32 %v802, %v1268
        %v1283 = vsub.f32 %v980, %v1269
        %v1284 = vsub.f32 %v804, %v1268
        %v1285 = vsub.f32 %v982, %v1269
        %v1286 = vsub.f32 %v807, %v1268
        %v1287 = vsub.f32 %v985, %v1269
        %v1288 = vsub.f32 %v809, %v1268
        %v1289 = vsub.f32 %v987, %v1269
        %v1290 = vsub.f32 %v812, %v1268
        %v1291 = vsub.f32 %v990, %v1269
        %v1292 = vsub.f32 %v814, %v1268
        %v1293 = vsub.f32 %v992, %v1269
        %v1294 = vsub.f32 %v817, %v1268
        %v1295 = vsub.f32 %v995, %v1269
        %v1296 = vsub.f32 %v819, %v1268
        %v1297 = vsub.f32 %v997, %v1269
        %v1298 = vsub.f32 %v822, %v1268
        %v1299 = vsub.f32 %v1000, %v1269
        %v1300 = vsub.f32 %v824, %v1268
        %v1301 = vsub.f32 %v1002, %v1269
        %v1302 = vsub.f32 %v827, %v1268
        %v1303 = vsub.f32 %v1005, %v1269
        %v1304 = vsub.f32 %v829, %v1268
        %v1305 = vsub.f32 %v1007, %v1269
        %v1306 = vsub.f32 %v832, %v1268
        %v1307 = vsub.f32 %v1010, %v1269
        %v1308 = vsub.f32 %v834, %v1268
        %v1309 = vsub.f32 %v1012, %v1269
        %v1310 = vsub.f32 %v837, %v1268
        %v1311 = vsub.f32 %v1015, %v1269
        %v1312 = vsub.f32 %v839, %v1268
        %v1313 = vsub.f32 %v1017, %v1269
        %v1314 = vsub.f32 %v842, %v1268
        %v1315 = vsub.f32 %v1020, %v1269
        %v1316 = vsub.f32 %v844, %v1268
        %v1317 = vsub.f32 %v1022, %v1269
        %v1318 = vsub.f32 %v847, %v1268
        %v1319 = vsub.f32 %v1025, %v1269
        %v1320 = vsub.f32 %v849, %v1268
        %v1321 = vsub.f32 %v1027, %v1269
        %v1322 = vsub.f32 %v852, %v1268
        %v1323 = vsub.f32 %v1030, %v1269
        %v1324 = vsub.f32 %v854, %v1268
        %v1325 = vsub.f32 %v1032, %v1269
        %v1326 = vsub.f32 %v857, %v1268
        %v1327 = vsub.f32 %v1035, %v1269
        %v1328 = vsub.f32 %v859, %v1268
        %v1329 = vsub.f32 %v1037, %v1269
        %v1330 = vsub.f32 %v862, %v1268
        %v1331 = vsub.f32 %v1040, %v1269
        %v1332 = vsub.f32 %v864, %v1268
        %v1333 = vsub.f32 %v1042, %v1269
        %v1334 = vsub.f32 %v867, %v1268
        %v1335 = vsub.f32 %v1045, %v1269
        %v1336 = vsub.f32 %v869, %v1268
        %v1337 = vsub.f32 %v1047, %v1269
        %v1338 = vsub.f32 %v872, %v1268
        %v1339 = vsub.f32 %v1050, %v1269
        %v1340 = vsub.f32 %v874, %v1268
        %v1341 = vsub.f32 %v1052, %v1269
        %v1342 = vadd.f32 %v1276, 1e-05
        %v1343 = vadd.f32 %v1277, 1e-05
        %v1344 = vrsqrt.pop %v1342
        %v1345 = vmul.f32 %v1344, %v1342
        %v1346 = vmul.f32 %v1345, %v1344
        %v1347 = vmul.f32 0.5, %v1346
        %v1348 = vsub.f32 1.5, %v1347
        %v1349 = vmul.f32 %v1344, %v1348
        %vm1350 = vweird.f32 %v1342
        %vm1351 = vweird.f32 %v1344
        %vm1352 = vmor %vm1350, %vm1351
        %v1353 = vsel %vm1352, %v1344, %v1349
        %v1354 = vrsqrt.pop %v1343
        %v1355 = vmul.f32 %v1354, %v1343
        %v1356 = vmul.f32 %v1355, %v1354
        %v1357 = vmul.f32 0.5, %v1356
        %v1358 = vsub.f32 1.5, %v1357
        %v1359 = vmul.f32 %v1354, %v1358
        %vm1360 = vweird.f32 %v1343
        %vm1361 = vweird.f32 %v1354
        %vm1362 = vmor %vm1360, %vm1361
        %v1363 = vsel %vm1362, %v1354, %v1359
        %v1364 = vmul.f32 %v1278, %v1353
        %v1365 = vmul.f32 %v1279, %v1363
        %v1366 = vmul.f32 %v1280, %v1353
        %v1367 = vmul.f32 %v1281, %v1363
        %v1368 = vmul.f32 %v1282, %v1353
        %v1369 = vmul.f32 %v1283, %v1363
        %v1370 = vmul.f32 %v1284, %v1353
        %v1371 = vmul.f32 %v1285, %v1363
        %v1372 = vmul.f32 %v1286, %v1353
        %v1373 = vmul.f32 %v1287, %v1363
        %v1374 = vmul.f32 %v1288, %v1353
        %v1375 = vmul.f32 %v1289, %v1363
        %v1376 = vmul.f32 %v1290, %v1353
        %v1377 = vmul.f32 %v1291, %v1363
        %v1378 = vmul.f32 %v1292, %v1353
        %v1379 = vmul.f32 %v1293, %v1363
        %v1380 = vmul.f32 %v1294, %v1353
        %v1381 = vmul.f32 %v1295, %v1363
        %v1382 = vmul.f32 %v1296, %v1353
        %v1383 = vmul.f32 %v1297, %v1363
        %v1384 = vmul.f32 %v1298, %v1353
        %v1385 = vmul.f32 %v1299, %v1363
        %v1386 = vmul.f32 %v1300, %v1353
        %v1387 = vmul.f32 %v1301, %v1363
        %v1388 = vmul.f32 %v1302, %v1353
        %v1389 = vmul.f32 %v1303, %v1363
        %v1390 = vmul.f32 %v1304, %v1353
        %v1391 = vmul.f32 %v1305, %v1363
        %v1392 = vmul.f32 %v1306, %v1353
        %v1393 = vmul.f32 %v1307, %v1363
        %v1394 = vmul.f32 %v1308, %v1353
        %v1395 = vmul.f32 %v1309, %v1363
        %v1396 = vmul.f32 %v1310, %v1353
        %v1397 = vmul.f32 %v1311, %v1363
        %v1398 = vmul.f32 %v1312, %v1353
        %v1399 = vmul.f32 %v1313, %v1363
        %v1400 = vmul.f32 %v1314, %v1353
        %v1401 = vmul.f32 %v1315, %v1363
        %v1402 = vmul.f32 %v1316, %v1353
        %v1403 = vmul.f32 %v1317, %v1363
        %v1404 = vmul.f32 %v1318, %v1353
        %v1405 = vmul.f32 %v1319, %v1363
        %v1406 = vmul.f32 %v1320, %v1353
        %v1407 = vmul.f32 %v1321, %v1363
        %v1408 = vmul.f32 %v1322, %v1353
        %v1409 = vmul.f32 %v1323, %v1363
        %v1410 = vmul.f32 %v1324, %v1353
        %v1411 = vmul.f32 %v1325, %v1363
        %v1412 = vmul.f32 %v1326, %v1353
        %v1413 = vmul.f32 %v1327, %v1363
        %v1414 = vmul.f32 %v1328, %v1353
        %v1415 = vmul.f32 %v1329, %v1363
        %v1416 = vmul.f32 %v1330, %v1353
        %v1417 = vmul.f32 %v1331, %v1363
        %v1418 = vmul.f32 %v1332, %v1353
        %v1419 = vmul.f32 %v1333, %v1363
        %v1420 = vmul.f32 %v1334, %v1353
        %v1421 = vmul.f32 %v1335, %v1363
        %v1422 = vmul.f32 %v1336, %v1353
        %v1423 = vmul.f32 %v1337, %v1363
        %v1424 = vmul.f32 %v1338, %v1353
        %v1425 = vmul.f32 %v1339, %v1363
        %v1426 = vmul.f32 %v1340, %v1353
        %v1427 = vmul.f32 %v1341, %v1363
        %v1429 = vperm.slane %v1054, 0
        %v1430 = vperm.slane %v1054, 1
        %v1433 = vmul.f32 %v1364, %v1429
        %v1434 = vmul.f32 %v1365, %v1430
        %v1435 = vmul.f32 %v1366, %v1429
        %v1436 = vmul.f32 %v1367, %v1430
        %v1437 = vmul.f32 %v1368, %v1429
        %v1438 = vmul.f32 %v1369, %v1430
        %v1439 = vmul.f32 %v1370, %v1429
        %v1440 = vmul.f32 %v1371, %v1430
        %v1441 = vmul.f32 %v1372, %v1429
        %v1442 = vmul.f32 %v1373, %v1430
        %v1443 = vmul.f32 %v1374, %v1429
        %v1444 = vmul.f32 %v1375, %v1430
        %v1445 = vmul.f32 %v1376, %v1429
        %v1446 = vmul.f32 %v1377, %v1430
        %v1447 = vmul.f32 %v1378, %v1429
        %v1448 = vmul.f32 %v1379, %v1430
        %v1449 = vmul.f32 %v1380, %v1429
        %v1450 = vmul.f32 %v1381, %v1430
        %v1451 = vmul.f32 %v1382, %v1429
        %v1452 = vmul.f32 %v1383, %v1430
        %v1453 = vmul.f32 %v1384, %v1429
        %v1454 = vmul.f32 %v1385, %v1430
        %v1455 = vmul.f32 %v1386, %v1429
        %v1456 = vmul.f32 %v1387, %v1430
        %v1457 = vmul.f32 %v1388, %v1429
        %v1458 = vmul.f32 %v1389, %v1430
        %v1459 = vmul.f32 %v1390, %v1429
        %v1460 = vmul.f32 %v1391, %v1430
        %v1461 = vmul.f32 %v1392, %v1429
        %v1462 = vmul.f32 %v1393, %v1430
        %v1463 = vmul.f32 %v1394, %v1429
        %v1464 = vmul.f32 %v1395, %v1430
        %v1465 = vmul.f32 %v1396, %v1429
        %v1466 = vmul.f32 %v1397, %v1430
        %v1467 = vmul.f32 %v1398, %v1429
        %v1468 = vmul.f32 %v1399, %v1430
        %v1469 = vmul.f32 %v1400, %v1429
        %v1470 = vmul.f32 %v1401, %v1430
        %v1471 = vmul.f32 %v1402, %v1429
        %v1472 = vmul.f32 %v1403, %v1430
        %v1473 = vmul.f32 %v1404, %v1429
        %v1474 = vmul.f32 %v1405, %v1430
        %v1475 = vmul.f32 %v1406, %v1429
        %v1476 = vmul.f32 %v1407, %v1430
        %v1477 = vmul.f32 %v1408, %v1429
        %v1478 = vmul.f32 %v1409, %v1430
        %v1479 = vmul.f32 %v1410, %v1429
        %v1480 = vmul.f32 %v1411, %v1430
        %v1481 = vmul.f32 %v1412, %v1429
        %v1482 = vmul.f32 %v1413, %v1430
        %v1483 = vmul.f32 %v1414, %v1429
        %v1484 = vmul.f32 %v1415, %v1430
        %v1485 = vmul.f32 %v1416, %v1429
        %v1486 = vmul.f32 %v1417, %v1430
        %v1487 = vmul.f32 %v1418, %v1429
        %v1488 = vmul.f32 %v1419, %v1430
        %v1489 = vmul.f32 %v1420, %v1429
        %v1490 = vmul.f32 %v1421, %v1430
        %v1491 = vmul.f32 %v1422, %v1429
        %v1492 = vmul.f32 %v1423, %v1430
        %v1493 = vmul.f32 %v1424, %v1429
        %v1494 = vmul.f32 %v1425, %v1430
        %v1495 = vmul.f32 %v1426, %v1429
        %v1496 = vmul.f32 %v1427, %v1430
        %v1498 = vperm.slane %v1055, 0
        %v1499 = vperm.slane %v1055, 1
        %v1502 = vadd.f32 %v1433, %v1498
        %v1503 = vadd.f32 %v1434, %v1499
        %v1504 = vadd.f32 %v1435, %v1498
        %v1505 = vadd.f32 %v1436, %v1499
        %v1506 = vadd.f32 %v1437, %v1498
        %v1507 = vadd.f32 %v1438, %v1499
        %v1508 = vadd.f32 %v1439, %v1498
        %v1509 = vadd.f32 %v1440, %v1499
        %v1510 = vadd.f32 %v1441, %v1498
        %v1511 = vadd.f32 %v1442, %v1499
        %v1512 = vadd.f32 %v1443, %v1498
        %v1513 = vadd.f32 %v1444, %v1499
        %v1514 = vadd.f32 %v1445, %v1498
        %v1515 = vadd.f32 %v1446, %v1499
        %v1516 = vadd.f32 %v1447, %v1498
        %v1517 = vadd.f32 %v1448, %v1499
        %v1518 = vadd.f32 %v1449, %v1498
        %v1519 = vadd.f32 %v1450, %v1499
        %v1520 = vadd.f32 %v1451, %v1498
        %v1521 = vadd.f32 %v1452, %v1499
        %v1522 = vadd.f32 %v1453, %v1498
        %v1523 = vadd.f32 %v1454, %v1499
        %v1524 = vadd.f32 %v1455, %v1498
        %v1525 = vadd.f32 %v1456, %v1499
        %v1526 = vadd.f32 %v1457, %v1498
        %v1527 = vadd.f32 %v1458, %v1499
        %v1528 = vadd.f32 %v1459, %v1498
        %v1529 = vadd.f32 %v1460, %v1499
        %v1530 = vadd.f32 %v1461, %v1498
        %v1531 = vadd.f32 %v1462, %v1499
        %v1532 = vadd.f32 %v1463, %v1498
        %v1533 = vadd.f32 %v1464, %v1499
        %v1534 = vadd.f32 %v1465, %v1498
        %v1535 = vadd.f32 %v1466, %v1499
        %v1536 = vadd.f32 %v1467, %v1498
        %v1537 = vadd.f32 %v1468, %v1499
        %v1538 = vadd.f32 %v1469, %v1498
        %v1539 = vadd.f32 %v1470, %v1499
        %v1540 = vadd.f32 %v1471, %v1498
        %v1541 = vadd.f32 %v1472, %v1499
        %v1542 = vadd.f32 %v1473, %v1498
        %v1543 = vadd.f32 %v1474, %v1499
        %v1544 = vadd.f32 %v1475, %v1498
        %v1545 = vadd.f32 %v1476, %v1499
        %v1546 = vadd.f32 %v1477, %v1498
        %v1547 = vadd.f32 %v1478, %v1499
        %v1548 = vadd.f32 %v1479, %v1498
        %v1549 = vadd.f32 %v1480, %v1499
        %v1550 = vadd.f32 %v1481, %v1498
        %v1551 = vadd.f32 %v1482, %v1499
        %v1552 = vadd.f32 %v1483, %v1498
        %v1553 = vadd.f32 %v1484, %v1499
        %v1554 = vadd.f32 %v1485, %v1498
        %v1555 = vadd.f32 %v1486, %v1499
        %v1556 = vadd.f32 %v1487, %v1498
        %v1557 = vadd.f32 %v1488, %v1499
        %v1558 = vadd.f32 %v1489, %v1498
        %v1559 = vadd.f32 %v1490, %v1499
        %v1560 = vadd.f32 %v1491, %v1498
        %v1561 = vadd.f32 %v1492, %v1499
        %v1562 = vadd.f32 %v1493, %v1498
        %v1563 = vadd.f32 %v1494, %v1499
        %v1564 = vadd.f32 %v1495, %v1498
        %v1565 = vadd.f32 %v1496, %v1499
        %v1566 = vmax.f32 %v1502, 0.0
        %v1567 = vmax.f32 %v1503, 0.0
        %v1568 = vmax.f32 %v1504, 0.0
        %v1569 = vmax.f32 %v1505, 0.0
        %v1570 = vmax.f32 %v1506, 0.0
        %v1571 = vmax.f32 %v1507, 0.0
        %v1572 = vmax.f32 %v1508, 0.0
        %v1573 = vmax.f32 %v1509, 0.0
        %v1574 = vmax.f32 %v1510, 0.0
        %v1575 = vmax.f32 %v1511, 0.0
        %v1576 = vmax.f32 %v1512, 0.0
        %v1577 = vmax.f32 %v1513, 0.0
        %v1578 = vmax.f32 %v1514, 0.0
        %v1579 = vmax.f32 %v1515, 0.0
        %v1580 = vmax.f32 %v1516, 0.0
        %v1581 = vmax.f32 %v1517, 0.0
        %v1582 = vmax.f32 %v1518, 0.0
        %v1583 = vmax.f32 %v1519, 0.0
        %v1584 = vmax.f32 %v1520, 0.0
        %v1585 = vmax.f32 %v1521, 0.0
        %v1586 = vmax.f32 %v1522, 0.0
        %v1587 = vmax.f32 %v1523, 0.0
        %v1588 = vmax.f32 %v1524, 0.0
        %v1589 = vmax.f32 %v1525, 0.0
        %v1590 = vmax.f32 %v1526, 0.0
        %v1591 = vmax.f32 %v1527, 0.0
        %v1592 = vmax.f32 %v1528, 0.0
        %v1593 = vmax.f32 %v1529, 0.0
        %v1594 = vmax.f32 %v1530, 0.0
        %v1595 = vmax.f32 %v1531, 0.0
        %v1596 = vmax.f32 %v1532, 0.0
        %v1597 = vmax.f32 %v1533, 0.0
        %v1598 = vmax.f32 %v1534, 0.0
        %v1599 = vmax.f32 %v1535, 0.0
        %v1600 = vmax.f32 %v1536, 0.0
        %v1601 = vmax.f32 %v1537, 0.0
        %v1602 = vmax.f32 %v1538, 0.0
        %v1603 = vmax.f32 %v1539, 0.0
        %v1604 = vmax.f32 %v1540, 0.0
        %v1605 = vmax.f32 %v1541, 0.0
        %v1606 = vmax.f32 %v1542, 0.0
        %v1607 = vmax.f32 %v1543, 0.0
        %v1608 = vmax.f32 %v1544, 0.0
        %v1609 = vmax.f32 %v1545, 0.0
        %v1610 = vmax.f32 %v1546, 0.0
        %v1611 = vmax.f32 %v1547, 0.0
        %v1612 = vmax.f32 %v1548, 0.0
        %v1613 = vmax.f32 %v1549, 0.0
        %v1614 = vmax.f32 %v1550, 0.0
        %v1615 = vmax.f32 %v1551, 0.0
        %v1616 = vmax.f32 %v1552, 0.0
        %v1617 = vmax.f32 %v1553, 0.0
        %v1618 = vmax.f32 %v1554, 0.0
        %v1619 = vmax.f32 %v1555, 0.0
        %v1620 = vmax.f32 %v1556, 0.0
        %v1621 = vmax.f32 %v1557, 0.0
        %v1622 = vmax.f32 %v1558, 0.0
        %v1623 = vmax.f32 %v1559, 0.0
        %v1624 = vmax.f32 %v1560, 0.0
        %v1625 = vmax.f32 %v1561, 0.0
        %v1626 = vmax.f32 %v1562, 0.0
        %v1627 = vmax.f32 %v1563, 0.0
        %v1628 = vmax.f32 %v1564, 0.0
        %v1629 = vmax.f32 %v1565, 0.0
        %v1630 = vpack.c.bf16 %v1567, %v1566
        %v1631 = vpack.c.bf16 %v1569, %v1568
        %v1632 = vpack.c.bf16 %v1571, %v1570
        %v1633 = vpack.c.bf16 %v1573, %v1572
        %v1634 = vpack.c.bf16 %v1575, %v1574
        %v1635 = vpack.c.bf16 %v1577, %v1576
        %v1636 = vpack.c.bf16 %v1579, %v1578
        %v1637 = vpack.c.bf16 %v1581, %v1580
        %v1638 = vpack.c.bf16 %v1583, %v1582
        %v1639 = vpack.c.bf16 %v1585, %v1584
        %v1640 = vpack.c.bf16 %v1587, %v1586
        %v1641 = vpack.c.bf16 %v1589, %v1588
        %v1642 = vpack.c.bf16 %v1591, %v1590
        %v1643 = vpack.c.bf16 %v1593, %v1592
        %v1644 = vpack.c.bf16 %v1595, %v1594
        %v1645 = vpack.c.bf16 %v1597, %v1596
        %v1646 = vpack.c.bf16 %v1599, %v1598
        %v1647 = vpack.c.bf16 %v1601, %v1600
        %v1648 = vpack.c.bf16 %v1603, %v1602
        %v1649 = vpack.c.bf16 %v1605, %v1604
        %v1650 = vpack.c.bf16 %v1607, %v1606
        %v1651 = vpack.c.bf16 %v1609, %v1608
        %v1652 = vpack.c.bf16 %v1611, %v1610
        %v1653 = vpack.c.bf16 %v1613, %v1612
        %v1654 = vpack.c.bf16 %v1615, %v1614
        %v1655 = vpack.c.bf16 %v1617, %v1616
        %v1656 = vpack.c.bf16 %v1619, %v1618
        %v1657 = vpack.c.bf16 %v1621, %v1620
        %v1658 = vpack.c.bf16 %v1623, %v1622
        %v1659 = vpack.c.bf16 %v1625, %v1624
        %v1660 = vpack.c.bf16 %v1627, %v1626
        %v1661 = vpack.c.bf16 %v1629, %v1628
        %1662 = vst [vmem:[%s309] sm:$0xff] %v1630
        %1663 = vst [vmem:[%s309 + $0x8] sm:$0xff] %v1631
        %1664 = vst [vmem:[%s309 + $0x10] sm:$0xff] %v1632
        %1665 = vst [vmem:[%s309 + $0x18] sm:$0xff] %v1633
        %1666 = vst [vmem:[%s309 + $0x20] sm:$0xff] %v1634
        %1667 = vst [vmem:[%s309 + $0x28] sm:$0xff] %v1635
        %1668 = vst [vmem:[%s309 + $0x30] sm:$0xff] %v1636
        %1669 = vst [vmem:[%s309 + $0x38] sm:$0xff] %v1637
        %1670 = vst [vmem:[%s309 + $0x40] sm:$0xff] %v1638
        %1671 = vst [vmem:[%s309 + $0x48] sm:$0xff] %v1639
        %1672 = vst [vmem:[%s309 + $0x50] sm:$0xff] %v1640
        %1673 = vst [vmem:[%s309 + $0x58] sm:$0xff] %v1641
        %1674 = vst [vmem:[%s309 + $0x60] sm:$0xff] %v1642
        %1675 = vst [vmem:[%s309 + $0x68] sm:$0xff] %v1643
        %1676 = vst [vmem:[%s309 + $0x70] sm:$0xff] %v1644
        %1677 = vst [vmem:[%s309 + $0x78] sm:$0xff] %v1645
        %1678 = vst [vmem:[%s309 + $0x80] sm:$0xff] %v1646
        %1679 = vst [vmem:[%s309 + $0x88] sm:$0xff] %v1647
        %1680 = vst [vmem:[%s309 + $0x90] sm:$0xff] %v1648
        %1681 = vst [vmem:[%s309 + $0x98] sm:$0xff] %v1649
        %1682 = vst [vmem:[%s309 + $0xa0] sm:$0xff] %v1650
        %1683 = vst [vmem:[%s309 + $0xa8] sm:$0xff] %v1651
        %1684 = vst [vmem:[%s309 + $0xb0] sm:$0xff] %v1652
        %1685 = vst [vmem:[%s309 + $0xb8] sm:$0xff] %v1653
        %1686 = vst [vmem:[%s309 + $0xc0] sm:$0xff] %v1654
        %1687 = vst [vmem:[%s309 + $0xc8] sm:$0xff] %v1655
        %1688 = vst [vmem:[%s309 + $0xd0] sm:$0xff] %v1656
        %1689 = vst [vmem:[%s309 + $0xd8] sm:$0xff] %v1657
        %1690 = vst [vmem:[%s309 + $0xe0] sm:$0xff] %v1658
        %1691 = vst [vmem:[%s309 + $0xe8] sm:$0xff] %v1659
        %1692 = vst [vmem:[%s309 + $0xf0] sm:$0xff] %v1660
        %1693 = vst [vmem:[%s309 + $0xf8] sm:$0xff] %v1661
        %s1694 = sand.u32 %s132, 1
        %s1695 = scalar_lea.sflag [#allocation4], %s1694
        %s1696 = sand.u32 %s132, 1
        %s1697 = smul.addr %s1696, 256
        %s1698 = scalar_lea.vmem [#allocation10], %s1697
        // Predicated region
        $region53: #{tpu_custom_call.1} parent=35 // pred_check
          %p1699 = pneg %p142
        $region54: #{tpu_custom_call.1} parent=35 // pred_check_branch
          %1701 = sbr.rel (%p1699) target = $region56
        $region55: #{tpu_custom_call.1} parent=35 // pred_region
          %s1702 = smul.u32 2, %s25
          %1704 = vsyncadd %s1695, 0
          %s1705 = smul.addr %s1702, 4
          %s1706 = scalar_lea.hbm %s4, %s1705
          %s1707 = sshll.u32 %s1698, 4
          %s1708 = int_to_ptr.vmem [resolvable:$true] %s1707
          %s1709 = sshll.u32 %s1706, 4
          %s1710 = int_to_ptr.hbm [resolvable:$true] %s1709
          %1715 = dma.vmem_to_hbm [thread:$0]  %s1708, 4096, %s1710, %s1695, 128, 256, 8
        $region56: #{tpu_custom_call.1} parent=35 // pred_fallthru
          _
      $region36: #{tpu_custom_call.1} parent=5 // pred_fallthru
        _
      %p1716 = scmp.le.s32.totalorder 2, %s20
      // Predicated region
      $region57: #{tpu_custom_call.1} parent=5 // pred_check
        %p1717 = pneg %p1716
      $region58: #{tpu_custom_call.1} parent=5 // pred_check_branch
        %1719 = sbr.rel (%p1717) target = $region60
      $region59: #{tpu_custom_call.1} parent=5 // pred_region
        %s1720 = ssub.s32 %s20, 2
        // Predicated region
        $region61: #{tpu_custom_call.1} parent=59 // pred_check
          %p1721 = pneg %p148
        $region62: #{tpu_custom_call.1} parent=59 // pred_check_branch
          %1723 = sbr.rel (%p1721) target = $region64
        $region63: #{tpu_custom_call.1} parent=59 // pred_region
          %s1724 = sand.u32 %s133, 1
          %s1725 = scalar_lea.sflag [#allocation4], %s1724
          %s1726 = sand.u32 %s133, 1
          %s1727 = smul.addr %s1726, 256
          %s1728 = scalar_lea.vmem [#allocation10], %s1727
          %1730 = dma.done %s1725, 4096
        $region64: #{tpu_custom_call.1} parent=59 // pred_fallthru
          _
      $region60: #{tpu_custom_call.1} parent=5 // pred_fallthru
        _
    $region6: #{tpu_custom_call.1} parent=1 // loop_footer
      %s24 = sadd.s32 1, %s20
    $region7: #{tpu_custom_call.1} parent=1 // loop_footer_branch
      %19 = sbr.rel target = $region3
    $region8: #{tpu_custom_call.1} parent=1 // loop_exit
      _
    %1731 = vsyncpa [#allocation3], 1
    %s1732 = scalar_lea.sflag [#allocation3], 1
    %1733 = vsyncpa %s1732, 1
    %1734 = vsyncpa [#allocation6], 1
    %s1735 = scalar_lea.sflag [#allocation6], 1
    %1736 = vsyncpa %s1735, 1
    %1737 = vsyncpa [#allocation9], 1
    %s1738 = scalar_lea.sflag [#allocation9], 1
    %1739 = vsyncpa %s1738, 1
    %1740 = vsyncpa [#allocation4], 1
    %s1741 = scalar_lea.sflag [#allocation4], 1
    %1742 = vsyncpa %s1741, 1

// kernel: tpu_custom_call.1
$region0: #{tpu_custom_call.1}
  #allocation0 [shape = 'u32[]', space=smem, size = 0x4, offset = 0x4, fixed_abs, tag = 'smem constant byte address 0x4 - core index']
  #allocation1 [shape = 'u32[72,128]{1,0:T(1,128)}', space=vmem, size = 0x9000, scoped, tag = 'internal scratch']
  %s0 = inlined_call_operand.hbm [shape: bf16[256,256], index: 0, kind: input, shape index: {}]
  %s1 = inlined_call_operand.hbm [shape: bf16[256,512], index: 1, kind: input, shape index: {}]
  %s2 = inlined_call_operand.hbm [shape: f32[1,512], index: 2, kind: input, shape index: {}]
  %s3 = inlined_call_operand.hbm [shape: f32[1,512], index: 3, kind: input, shape index: {}]
  %s4 = inlined_call_operand.hbm [shape: bf16[256,512], index: 4, kind: output, shape index: {}]
  %s5 = sld [smem:[#allocation0]]
  $region65: #{tpu_custom_call.1} parent=0
    _
  %s7 = ssub.s32 1, %s5
  %s8 = scalar_select 0, %s7, %s5
  $region1: #{tpu_custom_call.1} parent=0
    #allocation2 [shape = 'u8[131072]{0}', space=vmem, size = 0x20000, scoped, tag = 'input window, operand 0, single buffered']
    #allocation3 [shape = 's32[2]{0}', space=sflag, size = 0x8, scoped, tag = 'scoped memory for tpu_custom_call.1']
    #allocation4 [shape = 's32[2]{0}', space=sflag, size = 0x8, scoped, tag = 'scoped memory for tpu_custom_call.1']
    #allocation5 [shape = 'u8[262144]{0}', space=vmem, size = 0x40000, scoped, tag = 'input window, operand 1']
    #allocation6 [shape = 's32[2]{0}', space=sflag, size = 0x8, scoped, tag = 'scoped memory for tpu_custom_call.1']
    #allocation7 [shape = 'u8[2048]{0}', space=vmem, size = 0x800, scoped, tag = 'input window, operand 2']
    #allocation8 [shape = 'u8[2048]{0}', space=vmem, size = 0x800, scoped, tag = 'input window, operand 3']
    #allocation9 [shape = 's32[2]{0}', space=sflag, size = 0x8, scoped, tag = 'scoped memory for tpu_custom_call.1']
    #allocation10 [shape = 'u8[262144]{0}', space=vmem, size = 0x40000, scoped, tag = 'output window, operand 0']
    %9 = vsyncpa [#allocation3], 0
    %10 = vsyncpa [#allocation6], 0
    %s11 = scalar_lea.sflag [#allocation6], 1
    %12 = vsyncpa %s11, 0
    %13 = vsyncpa [#allocation9], 0
    %s14 = scalar_lea.sflag [#allocation9], 1
    %15 = vsyncpa %s14, 0
    %16 = vsyncpa [#allocation4], 0
    %s17 = scalar_lea.sflag [#allocation4], 1
    %18 = vsyncpa %s17, 0
    loop: start=0, step=1, limit=4
    $region2: #{tpu_custom_call.1} parent=1 // loop_pre_header
      _
    $region3: #{tpu_custom_call.1} parent=1 // loop_header
      %s20 = sphi 0, %s24
      %p21 = scmp.ge.s32.totalorder %s20, 4
      %s28 = sphi 0, %s28
      %s30 = sphi 0, %s28
      %s31 = sphi 0, %s30
      %s45 = sphi 0, %s31
      %s51 = sphi 0, %s53
      %s54 = sphi 0, %s51
      %s55 = sphi 0, %s54
      %s71 = sphi 0, %s55
      %s77 = sphi 0, %s79
      %s80 = sphi 0, %s77
      %s81 = sphi 0, %s80
      %s97 = sphi 0, %s81
      %s103 = sphi 0, %s105
      %s106 = sphi 0, %s103
      %s107 = sphi 0, %s106
      %s123 = sphi 0, %s107
      %s129 = sphi 0, %s131
      %s132 = sphi 0, %s129
      %s133 = sphi 0, %s132
      %s149 = sphi 0, %s133
    $region4: #{tpu_custom_call.1} parent=1 // loop_header_branch
      %23 = sbr.rel (%p21) target = $region8
    $region5: #{tpu_custom_call.1} parent=1 // loop_body
      %s25 = ssub.s32 %s20, 1
      %s26 = ssub.s32 %s20, 2
      %s27 = sadd.s32 %s20, 1
      %s29 = sadd.s32 %s28, 1
      %p32 = scmp.eq.s32.totalorder %s20, 1
      %p33 = scmp.ne.s32.totalorder %s28, %s30
      %p34 = scmp.eq.s32.totalorder %s20, 0
      %p35 = por %p33, %p34
      %p36 = scmp.ne.s32.totalorder %s28, %s30
      %p37 = scmp.eq.s32.totalorder %s25, 1
      %p38 = por %p36, %p37
      %p39 = scmp.ne.s32.totalorder %s30, %s31
      %p40 = scmp.eq.s32.totalorder %s25, 0
      %p41 = por %p39, %p40
      %p42 = scmp.ne.s32.totalorder %s30, %s31
      %p43 = scmp.eq.s32.totalorder %s26, 1
      %p44 = por %p42, %p43
      %p46 = scmp.ne.s32.totalorder %s31, %s45
      %p47 = scmp.eq.s32.totalorder %s26, 0
      %p48 = por %p46, %p47
      %s49 = ssub.s32 %s20, %s27
      %p50 = scmp.eq.s32.totalorder %s49, 0
      %s52 = sadd.s32 %s51, 1
      %s53 = scalar_select %p50, %s51, %s52
      %p56 = pneg %p50
      %p57 = scmp.eq.s32.totalorder %s20, 1
      %p58 = por %p56, %p57
      %p59 = scmp.ne.s32.totalorder %s51, %s54
      %p60 = scmp.eq.s32.totalorder %s20, 0
      %p61 = por %p59, %p60
      %p62 = scmp.ne.s32.totalorder %s51, %s54
      %p63 = scmp.eq.s32.totalorder %s25, 1
      %p64 = por %p62, %p63
      %p65 = scmp.ne.s32.totalorder %s54, %s55
      %p66 = scmp.eq.s32.totalorder %s25, 0
      %p67 = por %p65, %p66
      %p68 = scmp.ne.s32.totalorder %s54, %s55
      %p69 = scmp.eq.s32.totalorder %s26, 1
      %p70 = por %p68, %p69
      %p72 = scmp.ne.s32.totalorder %s55, %s71
      %p73 = scmp.eq.s32.totalorder %s26, 0
      %p74 = por %p72, %p73
      %s75 = ssub.s32 %s20, %s27
      %p76 = scmp.eq.s32.totalorder %s75, 0
      %s78 = sadd.s32 %s77, 1
      %s79 = scalar_select %p76, %s77, %s78
      %p82 = pneg %p76
      %p83 = scmp.eq.s32.totalorder %s20, 1
      %p84 = por %p82, %p83
      %p85 = scmp.ne.s32.totalorder %s77, %s80
      %p86 = scmp.eq.s32.totalorder %s20, 0
      %p87 = por %p85, %p86
      %p88 = scmp.ne.s32.totalorder %s77, %s80
      %p89 = scmp.eq.s32.totalorder %s25, 1
      %p90 = por %p88, %p89
      %p91 = scmp.ne.s32.totalorder %s80, %s81
      %p92 = scmp.eq.s32.totalorder %s25, 0
      %p93 = por %p91, %p92
      %p94 = scmp.ne.s32.totalorder %s80, %s81
      %p95 = scmp.eq.s32.totalorder %s26, 1
      %p96 = por %p94, %p95
      %p98 = scmp.ne.s32.totalorder %s81, %s97
      %p99 = scmp.eq.s32.totalorder %s26, 0
      %p100 = por %p98, %p99
      %s101 = ssub.s32 %s20, %s27
      %p102 = scmp.eq.s32.totalorder %s101, 0
      %s104 = sadd.s32 %s103, 1
      %s105 = scalar_select %p102, %s103, %s104
      %p108 = pneg %p102
      %p109 = scmp.eq.s32.totalorder %s20, 1
      %p110 = por %p108, %p109
      %p111 = scmp.ne.s32.totalorder %s103, %s106
      %p112 = scmp.eq.s32.totalorder %s20, 0
      %p113 = por %p111, %p112
      %p114 = scmp.ne.s32.totalorder %s103, %s106
      %p115 = scmp.eq.s32.totalorder %s25, 1
      %p116 = por %p114, %p115
      %p117 = scmp.ne.s32.totalorder %s106, %s107
      %p118 = scmp.eq.s32.totalorder %s25, 0
      %p119 = por %p117, %p118
      %p120 = scmp.ne.s32.totalorder %s106, %s107
      %p121 = scmp.eq.s32.totalorder %s26, 1
      %p122 = por %p120, %p121
      %p124 = scmp.ne.s32.totalorder %s107, %s123
      %p125 = scmp.eq.s32.totalorder %s26, 0
      %p126 = por %p124, %p125
      %s127 = ssub.s32 %s20, %s27
      %p128 = scmp.eq.s32.totalorder %s127, 0
      %s130 = sadd.s32 %s129, 1
      %s131 = scalar_select %p128, %s129, %s130
      %p134 = pneg %p128
      %p135 = scmp.eq.s32.totalorder %s20, 1
      %p136 = por %p134, %p135
      %p137 = scmp.ne.s32.totalorder %s129, %s132
      %p138 = scmp.eq.s32.totalorder %s20, 0
      %p139 = por %p137, %p138
      %p140 = scmp.ne.s32.totalorder %s129, %s132
      %p141 = scmp.eq.s32.totalorder %s25, 1
      %p142 = por %p140, %p141
      %p143 = scmp.ne.s32.totalorder %s132, %s133
      %p144 = scmp.eq.s32.totalorder %s25, 0
      %p145 = por %p143, %p144
      %p146 = scmp.ne.s32.totalorder %s132, %s133
      %p147 = scmp.eq.s32.totalorder %s26, 1
      %p148 = por %p146, %p147
      %p150 = scmp.ne.s32.totalorder %s133, %s149
      %p151 = scmp.eq.s32.totalorder %s26, 0
      %p152 = por %p150, %p151
      %p153 = scmp.le.s32.totalorder 1, %s20
      %p154 = scmp.lt.s32.totalorder %s20, 3
      %p155 = pnand %p153, %p154
      %p156 = pneg %p155
      // Predicated region
      $region9: #{tpu_custom_call.1} parent=5 // pred_check
        _
      $region10: #{tpu_custom_call.1} parent=5 // pred_check_branch
        %158 = sbr.rel (%p155) target = $region12
      $region11: #{tpu_custom_call.1} parent=5 // pred_region
        %s159 = ssub.s32 %s20, 1
        // Predicated region
        $region13: #{tpu_custom_call.1} parent=11 // pred_check
          %p160 = pneg %p41
        $region14: #{tpu_custom_call.1} parent=11 // pred_check_branch
          %162 = sbr.rel (%p160) target = $region16
        $region15: #{tpu_custom_call.1} parent=11 // pred_region
          %164 = vsyncadd [#allocation3], 0
          %s165 = sshll.u32 %s0, 4
          %s166 = int_to_ptr.hbm [resolvable:$true] %s165
          %s167 = sshll.u32 [#allocation2], 4
          %s168 = int_to_ptr.vmem [resolvable:$true] %s167
          %173 = dma.hbm_to_vmem [thread:$0]  %s166, 4096, %s168, [#allocation3], 128, 128, 8
        $region16: #{tpu_custom_call.1} parent=11 // pred_fallthru
          _
      $region12: #{tpu_custom_call.1} parent=5 // pred_fallthru
        _
      %p174 = scmp.lt.s32.totalorder %s20, 2
      // Predicated region
      $region17: #{tpu_custom_call.1} parent=5 // pred_check
        %p175 = pneg %p174
      $region18: #{tpu_custom_call.1} parent=5 // pred_check_branch
        %177 = sbr.rel (%p175) target = $region20
      $region19: #{tpu_custom_call.1} parent=5 // pred_region
        // Predicated region
        $region21: #{tpu_custom_call.1} parent=19 // pred_check
          %p178 = pneg %p61
        $region22: #{tpu_custom_call.1} parent=19 // pred_check_branch
          %180 = sbr.rel (%p178) target = $region24
        $region23: #{tpu_custom_call.1} parent=19 // pred_region
          %s181 = sand.u32 %s20, 1
          %s182 = scalar_lea.sflag [#allocation6], %s181
          %s183 = sand.u32 %s51, 1
          %s184 = smul.addr %s183, 256
          %s185 = scalar_lea.vmem [#allocation5], %s184
          %s186 = smul.u32 2, %s20
          %188 = vsyncadd %s182, 0
          %s189 = smul.addr %s186, 4
          %s190 = scalar_lea.hbm %s1, %s189
          %s191 = sshll.u32 %s190, 4
          %s192 = int_to_ptr.hbm [resolvable:$true] %s191
          %s193 = sshll.u32 %s185, 4
          %s194 = int_to_ptr.vmem [resolvable:$true] %s193
          %199 = dma.hbm_to_vmem [thread:$0]  %s192, 4096, %s194, %s182, 256, 128, 8
        $region24: #{tpu_custom_call.1} parent=19 // pred_fallthru
          _
        // Predicated region
        $region25: #{tpu_custom_call.1} parent=19 // pred_check
          %p200 = pneg %p87
        $region26: #{tpu_custom_call.1} parent=19 // pred_check_branch
          %202 = sbr.rel (%p200) target = $region28
        $region27: #{tpu_custom_call.1} parent=19 // pred_region
          %s203 = sand.u32 %s20, 1
          %s204 = scalar_lea.sflag [#allocation6], %s203
          %s205 = sand.u32 %s77, 1
          %s206 = smul.addr %s205, 2
          %s207 = scalar_lea.vmem [#allocation7], %s206
          %s208 = smul.u32 2, %s20
          %210 = vsyncadd %s204, 0
          %s211 = scalar_lea.hbm %s2, %s208
          %s213 = sshll.u32 %s211, 4
          %s214 = int_to_ptr.hbm [resolvable:$true] %s213
          %s215 = sshll.u32 %s207, 4
          %s216 = int_to_ptr.vmem [resolvable:$true] %s215
          %218 = dma.hbm_to_vmem [thread:$0]  %s214, 32, %s216, %s204
        $region28: #{tpu_custom_call.1} parent=19 // pred_fallthru
          _
        // Predicated region
        $region29: #{tpu_custom_call.1} parent=19 // pred_check
          %p219 = pneg %p113
        $region30: #{tpu_custom_call.1} parent=19 // pred_check_branch
          %221 = sbr.rel (%p219) target = $region32
        $region31: #{tpu_custom_call.1} parent=19 // pred_region
          %s222 = sand.u32 %s103, 1
          %s223 = scalar_lea.sflag [#allocation9], %s222
          %s224 = sand.u32 %s103, 1
          %s225 = smul.addr %s224, 2
          %s226 = scalar_lea.vmem [#allocation8], %s225
          %s227 = smul.u32 2, %s20
          %229 = vsyncadd %s223, 0
          %s230 = scalar_lea.hbm %s3, %s227
          %s232 = sshll.u32 %s230, 4
          %s233 = int_to_ptr.hbm [resolvable:$true] %s232
          %s234 = sshll.u32 %s226, 4
          %s235 = int_to_ptr.vmem [resolvable:$true] %s234
          %237 = dma.hbm_to_vmem [thread:$0]  %s233, 32, %s235, %s223
        $region32: #{tpu_custom_call.1} parent=19 // pred_fallthru
          _
      $region20: #{tpu_custom_call.1} parent=5 // pred_fallthru
        _
      %p238 = scmp.le.s32.totalorder 1, %s20
      %p239 = scmp.lt.s32.totalorder %s20, 3
      %p240 = pnand %p238, %p239
      %p241 = pneg %p240
      // Predicated region
      $region33: #{tpu_custom_call.1} parent=5 // pred_check
        _
      $region34: #{tpu_custom_call.1} parent=5 // pred_check_branch
        %243 = sbr.rel (%p240) target = $region36
      $region35: #{tpu_custom_call.1} parent=5 // pred_region
        %s244 = ssub.s32 %s20, 1
        // Predicated region
        $region37: #{tpu_custom_call.1} parent=35 // pred_check
          %p245 = pneg %p41
        $region38: #{tpu_custom_call.1} parent=35 // pred_check_branch
          %247 = sbr.rel (%p245) target = $region40
        $region39: #{tpu_custom_call.1} parent=35 // pred_region
          %249 = dma.done [#allocation3], 4096
        $region40: #{tpu_custom_call.1} parent=35 // pred_fallthru
          _
        %s250 = sand.u32 %s25, 1
        %s251 = scalar_lea.sflag [#allocation6], %s250
        %s252 = sand.u32 %s54, 1
        %s253 = smul.addr %s252, 256
        %s254 = scalar_lea.vmem [#allocation5], %s253
        // Predicated region
        $region41: #{tpu_custom_call.1} parent=35 // pred_check
          %p255 = pneg %p67
        $region42: #{tpu_custom_call.1} parent=35 // pred_check_branch
          %257 = sbr.rel (%p255) target = $region44
        $region43: #{tpu_custom_call.1} parent=35 // pred_region
          %259 = dma.done %s251, 4096
        $region44: #{tpu_custom_call.1} parent=35 // pred_fallthru
          _
        %s260 = sand.u32 %s25, 1
        %s261 = scalar_lea.sflag [#allocation6], %s260
        %s262 = sand.u32 %s80, 1
        %s263 = smul.addr %s262, 2
        %s264 = scalar_lea.vmem [#allocation7], %s263
        // Predicated region
        $region45: #{tpu_custom_call.1} parent=35 // pred_check
          %p265 = pneg %p93
        $region46: #{tpu_custom_call.1} parent=35 // pred_check_branch
          %267 = sbr.rel (%p265) target = $region48
        $region47: #{tpu_custom_call.1} parent=35 // pred_region
          %269 = dma.done %s261, 32
        $region48: #{tpu_custom_call.1} parent=35 // pred_fallthru
          _
        %s270 = sand.u32 %s106, 1
        %s271 = scalar_lea.sflag [#allocation9], %s270
        %s272 = sand.u32 %s106, 1
        %s273 = smul.addr %s272, 2
        %s274 = scalar_lea.vmem [#allocation8], %s273
        // Predicated region
        $region49: #{tpu_custom_call.1} parent=35 // pred_check
          %p275 = pneg %p119
        $region50: #{tpu_custom_call.1} parent=35 // pred_check_branch
          %277 = sbr.rel (%p275) target = $region52
        $region51: #{tpu_custom_call.1} parent=35 // pred_region
          %279 = dma.done %s271, 32
        $region52: #{tpu_custom_call.1} parent=35 // pred_fallthru
          _
        %p280 = pneg %p41
        %p281 = pneg %p38
        %s282 = sand.u32 %s25, 1
        %s283 = scalar_lea.sflag [#allocation6], %s282
        %s284 = sand.u32 %s54, 1
        %s285 = smul.addr %s284, 256
        %s286 = scalar_lea.vmem [#allocation5], %s285
        %p287 = pneg %p67
        %p288 = pneg %p64
        %s289 = sand.u32 %s25, 1
        %s290 = scalar_lea.sflag [#allocation6], %s289
        %s291 = sand.u32 %s80, 1
        %s292 = smul.addr %s291, 2
        %s293 = scalar_lea.vmem [#allocation7], %s292
        %p294 = pneg %p93
        %p295 = pneg %p90
        %s296 = sand.u32 %s106, 1
        %s297 = scalar_lea.sflag [#allocation9], %s296
        %s298 = sand.u32 %s106, 1
        %s299 = smul.addr %s298, 2
        %s300 = scalar_lea.vmem [#allocation8], %s299
        %p301 = pneg %p119
        %p302 = pneg %p116
        %p303 = pneg %p145
        %p304 = pneg %p142
        %s305 = sand.u32 %s132, 1
        %s306 = scalar_lea.sflag [#allocation4], %s305
        %s307 = sand.u32 %s132, 1
        %s308 = smul.addr %s307, 256
        %s309 = scalar_lea.vmem [#allocation10], %s308
        %s310 = smul.u32 2, %s25
        %s311 = smul.u32 2, %s25
        %s312 = smul.u32 2, %s25
        %s313 = smul.u32 2, %s25
        %v314 = vld [vmem:[#allocation2] sm:$0xff]
        %v315 = vld [vmem:[#allocation2 + $0x8] sm:$0xff]
        %v316 = vld [vmem:[#allocation2 + $0x10] sm:$0xff]
        %v317 = vld [vmem:[#allocation2 + $0x18] sm:$0xff]
        %v318 = vld [vmem:[#allocation2 + $0x20] sm:$0xff]
        %v319 = vld [vmem:[#allocation2 + $0x28] sm:$0xff]
        %v320 = vld [vmem:[#allocation2 + $0x30] sm:$0xff]
        %v321 = vld [vmem:[#allocation2 + $0x38] sm:$0xff]
        %v322 = vld [vmem:[#allocation2 + $0x40] sm:$0xff]
        %v323 = vld [vmem:[#allocation2 + $0x48] sm:$0xff]
        %v324 = vld [vmem:[#allocation2 + $0x50] sm:$0xff]
        %v325 = vld [vmem:[#allocation2 + $0x58] sm:$0xff]
        %v326 = vld [vmem:[#allocation2 + $0x60] sm:$0xff]
        %v327 = vld [vmem:[#allocation2 + $0x68] sm:$0xff]
        %v328 = vld [vmem:[#allocation2 + $0x70] sm:$0xff]
        %v329 = vld [vmem:[#allocation2 + $0x78] sm:$0xff]
        %v330 = vld [vmem:[#allocation2 + $0x80] sm:$0xff]
        %v331 = vld [vmem:[#allocation2 + $0x88] sm:$0xff]
        %v332 = vld [vmem:[#allocation2 + $0x90] sm:$0xff]
        %v333 = vld [vmem:[#allocation2 + $0x98] sm:$0xff]
        %v334 = vld [vmem:[#allocation2 + $0xa0] sm:$0xff]
        %v335 = vld [vmem:[#allocation2 + $0xa8] sm:$0xff]
        %v336 = vld [vmem:[#allocation2 + $0xb0] sm:$0xff]
        %v337 = vld [vmem:[#allocation2 + $0xb8] sm:$0xff]
        %v338 = vld [vmem:[#allocation2 + $0xc0] sm:$0xff]
        %v339 = vld [vmem:[#allocation2 + $0xc8] sm:$0xff]
        %v340 = vld [vmem:[#allocation2 + $0xd0] sm:$0xff]
        %v341 = vld [vmem:[#allocation2 + $0xd8] sm:$0xff]
        %v342 = vld [vmem:[#allocation2 + $0xe0] sm:$0xff]
        %v343 = vld [vmem:[#allocation2 + $0xe8] sm:$0xff]
        %v344 = vld [vmem:[#allocation2 + $0xf0] sm:$0xff]
        %v345 = vld [vmem:[#allocation2 + $0xf8] sm:$0xff]
        %v346 = vld [vmem:[%s254] sm:$0xff]
        %v347 = vld [vmem:[%s254 + $0x8] sm:$0xff]
        %v348 = vld [vmem:[%s254 + $0x10] sm:$0xff]
        %v349 = vld [vmem:[%s254 + $0x18] sm:$0xff]
        %v350 = vld [vmem:[%s254 + $0x20] sm:$0xff]
        %v351 = vld [vmem:[%s254 + $0x28] sm:$0xff]
        %v352 = vld [vmem:[%s254 + $0x30] sm:$0xff]
        %v353 = vld [vmem:[%s254 + $0x38] sm:$0xff]
        %v354 = vld [vmem:[%s254 + $0x40] sm:$0xff]
        %v355 = vld [vmem:[%s254 + $0x48] sm:$0xff]
        %v356 = vld [vmem:[%s254 + $0x50] sm:$0xff]
        %v357 = vld [vmem:[%s254 + $0x58] sm:$0xff]
        %v358 = vld [vmem:[%s254 + $0x60] sm:$0xff]
        %v359 = vld [vmem:[%s254 + $0x68] sm:$0xff]
        %v360 = vld [vmem:[%s254 + $0x70] sm:$0xff]
        %v361 = vld [vmem:[%s254 + $0x78] sm:$0xff]
        %v362 = vld [vmem:[%s254 + $0x80] sm:$0xff]
        %v363 = vld [vmem:[%s254 + $0x88] sm:$0xff]
        %v364 = vld [vmem:[%s254 + $0x90] sm:$0xff]
        %v365 = vld [vmem:[%s254 + $0x98] sm:$0xff]
        %v366 = vld [vmem:[%s254 + $0xa0] sm:$0xff]
        %v367 = vld [vmem:[%s254 + $0xa8] sm:$0xff]
        %v368 = vld [vmem:[%s254 + $0xb0] sm:$0xff]
        %v369 = vld [vmem:[%s254 + $0xb8] sm:$0xff]
        %v370 = vld [vmem:[%s254 + $0xc0] sm:$0xff]
        %v371 = vld [vmem:[%s254 + $0xc8] sm:$0xff]
        %v372 = vld [vmem:[%s254 + $0xd0] sm:$0xff]
        %v373 = vld [vmem:[%s254 + $0xd8] sm:$0xff]
        %v374 = vld [vmem:[%s254 + $0xe0] sm:$0xff]
        %v375 = vld [vmem:[%s254 + $0xe8] sm:$0xff]
        %v376 = vld [vmem:[%s254 + $0xf0] sm:$0xff]
        %v377 = vld [vmem:[%s254 + $0xf8] sm:$0xff]
        %v410 = vunpack.c.l.b16 %v314
        %v411 = vunpack.c.h.b16 %v314
        %v412 = vunpack.c.l.b16 %v315
        %v413 = vunpack.c.h.b16 %v315
        %v414 = vunpack.c.l.b16 %v316
        %v415 = vunpack.c.h.b16 %v316
        %v416 = vunpack.c.l.b16 %v317
        %v417 = vunpack.c.h.b16 %v317
        %v418 = vunpack.c.l.b16 %v318
        %v419 = vunpack.c.h.b16 %v318
        %v420 = vunpack.c.l.b16 %v319
        %v421 = vunpack.c.h.b16 %v319
        %v422 = vunpack.c.l.b16 %v320
        %v423 = vunpack.c.h.b16 %v320
        %v424 = vunpack.c.l.b16 %v321
        %v425 = vunpack.c.h.b16 %v321
        %v426 = vunpack.c.l.b16 %v322
        %v427 = vunpack.c.h.b16 %v322
        %v428 = vunpack.c.l.b16 %v323
        %v429 = vunpack.c.h.b16 %v323
        %v430 = vunpack.c.l.b16 %v324
        %v431 = vunpack.c.h.b16 %v324
        %v432 = vunpack.c.l.b16 %v325
        %v433 = vunpack.c.h.b16 %v325
        %v434 = vunpack.c.l.b16 %v326
        %v435 = vunpack.c.h.b16 %v326
        %v436 = vunpack.c.l.b16 %v327
        %v437 = vunpack.c.h.b16 %v327
        %v438 = vunpack.c.l.b16 %v328
        %v439 = vunpack.c.h.b16 %v328
        %v440 = vunpack.c.l.b16 %v329
        %v441 = vunpack.c.h.b16 %v329
        %v442 = vunpack.c.l.b16 %v330
        %v443 = vunpack.c.h.b16 %v330
        %v444 = vunpack.c.l.b16 %v331
        %v445 = vunpack.c.h.b16 %v331
        %v446 = vunpack.c.l.b16 %v332
        %v447 = vunpack.c.h.b16 %v332
        %v448 = vunpack.c.l.b16 %v333
        %v449 = vunpack.c.h.b16 %v333
        %v450 = vunpack.c.l.b16 %v334
        %v451 = vunpack.c.h.b16 %v334
        %v452 = vunpack.c.l.b16 %v335
        %v453 = vunpack.c.h.b16 %v335
        %v454 = vunpack.c.l.b16 %v336
        %v455 = vunpack.c.h.b16 %v336
        %v456 = vunpack.c.l.b16 %v337
        %v457 = vunpack.c.h.b16 %v337
        %v458 = vunpack.c.l.b16 %v338
        %v459 = vunpack.c.h.b16 %v338
        %v460 = vunpack.c.l.b16 %v339
        %v461 = vunpack.c.h.b16 %v339
        %v462 = vunpack.c.l.b16 %v340
        %v463 = vunpack.c.h.b16 %v340
        %v464 = vunpack.c.l.b16 %v341
        %v465 = vunpack.c.h.b16 %v341
        %v466 = vunpack.c.l.b16 %v342
        %v467 = vunpack.c.h.b16 %v342
        %v468 = vunpack.c.l.b16 %v343
        %v469 = vunpack.c.h.b16 %v343
        %v470 = vunpack.c.l.b16 %v344
        %v471 = vunpack.c.h.b16 %v344
        %v472 = vunpack.c.l.b16 %v345
        %v473 = vunpack.c.h.b16 %v345
        %v474 = vpack.c.b16 %v412, %v410
        %v475 = vpack.c.b16 %v413, %v411
        %v476 = vpack.c.b16 %v416, %v414
        %v477 = vpack.c.b16 %v417, %v415
        %v478 = vpack.c.b16 %v420, %v418
        %v479 = vpack.c.b16 %v421, %v419
        %v480 = vpack.c.b16 %v424, %v422
        %v481 = vpack.c.b16 %v425, %v423
        %v482 = vpack.c.b16 %v428, %v426
        %v483 = vpack.c.b16 %v429, %v427
        %v484 = vpack.c.b16 %v432, %v430
        %v485 = vpack.c.b16 %v433, %v431
        %v486 = vpack.c.b16 %v436, %v434
        %v487 = vpack.c.b16 %v437, %v435
        %v488 = vpack.c.b16 %v440, %v438
        %v489 = vpack.c.b16 %v441, %v439
        %v490 = vpack.c.b16 %v444, %v442
        %v491 = vpack.c.b16 %v445, %v443
        %v492 = vpack.c.b16 %v448, %v446
        %v493 = vpack.c.b16 %v449, %v447
        %v494 = vpack.c.b16 %v452, %v450
        %v495 = vpack.c.b16 %v453, %v451
        %v496 = vpack.c.b16 %v456, %v454
        %v497 = vpack.c.b16 %v457, %v455
        %v498 = vpack.c.b16 %v460, %v458
        %v499 = vpack.c.b16 %v461, %v459
        %v500 = vpack.c.b16 %v464, %v462
        %v501 = vpack.c.b16 %v465, %v463
        %v502 = vpack.c.b16 %v468, %v466
        %v503 = vpack.c.b16 %v469, %v467
        %v504 = vpack.c.b16 %v472, %v470
        %v505 = vpack.c.b16 %v473, %v471
        %v570 = vunpack.c.l.b16 %v346
        %v571 = vunpack.c.h.b16 %v346
        %v572 = vunpack.c.l.b16 %v347
        %v573 = vunpack.c.h.b16 %v347
        %v574 = vunpack.c.l.b16 %v348
        %v575 = vunpack.c.h.b16 %v348
        %v576 = vunpack.c.l.b16 %v349
        %v577 = vunpack.c.h.b16 %v349
        %v578 = vunpack.c.l.b16 %v350
        %v579 = vunpack.c.h.b16 %v350
        %v580 = vunpack.c.l.b16 %v351
        %v581 = vunpack.c.h.b16 %v351
        %v582 = vunpack.c.l.b16 %v352
        %v583 = vunpack.c.h.b16 %v352
        %v584 = vunpack.c.l.b16 %v353
        %v585 = vunpack.c.h.b16 %v353
        %v586 = vunpack.c.l.b16 %v354
        %v587 = vunpack.c.h.b16 %v354
        %v588 = vunpack.c.l.b16 %v355
        %v589 = vunpack.c.h.b16 %v355
        %v590 = vunpack.c.l.b16 %v356
        %v591 = vunpack.c.h.b16 %v356
        %v592 = vunpack.c.l.b16 %v357
        %v593 = vunpack.c.h.b16 %v357
        %v594 = vunpack.c.l.b16 %v358
        %v595 = vunpack.c.h.b16 %v358
        %v596 = vunpack.c.l.b16 %v359
        %v597 = vunpack.c.h.b16 %v359
        %v598 = vunpack.c.l.b16 %v360
        %v599 = vunpack.c.h.b16 %v360
        %v600 = vunpack.c.l.b16 %v361
        %v601 = vunpack.c.h.b16 %v361
        %v602 = vunpack.c.l.b16 %v362
        %v603 = vunpack.c.h.b16 %v362
        %v604 = vunpack.c.l.b16 %v363
        %v605 = vunpack.c.h.b16 %v363
        %v606 = vunpack.c.l.b16 %v364
        %v607 = vunpack.c.h.b16 %v364
        %v608 = vunpack.c.l.b16 %v365
        %v609 = vunpack.c.h.b16 %v365
        %v610 = vunpack.c.l.b16 %v366
        %v611 = vunpack.c.h.b16 %v366
        %v612 = vunpack.c.l.b16 %v367
        %v613 = vunpack.c.h.b16 %v367
        %v614 = vunpack.c.l.b16 %v368
        %v615 = vunpack.c.h.b16 %v368
        %v616 = vunpack.c.l.b16 %v369
        %v617 = vunpack.c.h.b16 %v369
        %v618 = vunpack.c.l.b16 %v370
        %v619 = vunpack.c.h.b16 %v370
        %v620 = vunpack.c.l.b16 %v371
        %v621 = vunpack.c.h.b16 %v371
        %v622 = vunpack.c.l.b16 %v372
        %v623 = vunpack.c.h.b16 %v372
        %v624 = vunpack.c.l.b16 %v373
        %v625 = vunpack.c.h.b16 %v373
        %v626 = vunpack.c.l.b16 %v374
        %v627 = vunpack.c.h.b16 %v374
        %v628 = vunpack.c.l.b16 %v375
        %v629 = vunpack.c.h.b16 %v375
        %v630 = vunpack.c.l.b16 %v376
        %v631 = vunpack.c.h.b16 %v376
        %v632 = vunpack.c.l.b16 %v377
        %v633 = vunpack.c.h.b16 %v377
        %v634 = vpack.c.b16 %v572, %v570
        %v635 = vpack.c.b16 %v573, %v571
        %v636 = vpack.c.b16 %v576, %v574
        %v637 = vpack.c.b16 %v577, %v575
        %v638 = vpack.c.b16 %v580, %v578
        %v639 = vpack.c.b16 %v581, %v579
        %v640 = vpack.c.b16 %v584, %v582
        %v641 = vpack.c.b16 %v585, %v583
        %v642 = vpack.c.b16 %v588, %v586
        %v643 = vpack.c.b16 %v589, %v587
        %v644 = vpack.c.b16 %v592, %v590
        %v645 = vpack.c.b16 %v593, %v591
        %v646 = vpack.c.b16 %v596, %v594
        %v647 = vpack.c.b16 %v597, %v595
        %v648 = vpack.c.b16 %v600, %v598
        %v649 = vpack.c.b16 %v601, %v599
        %v650 = vpack.c.b16 %v604, %v602
        %v651 = vpack.c.b16 %v605, %v603
        %v652 = vpack.c.b16 %v608, %v606
        %v653 = vpack.c.b16 %v609, %v607
        %v654 = vpack.c.b16 %v612, %v610
        %v655 = vpack.c.b16 %v613, %v611
        %v656 = vpack.c.b16 %v616, %v614
        %v657 = vpack.c.b16 %v617, %v615
        %v658 = vpack.c.b16 %v620, %v618
        %v659 = vpack.c.b16 %v621, %v619
        %v660 = vpack.c.b16 %v624, %v622
        %v661 = vpack.c.b16 %v625, %v623
        %v662 = vpack.c.b16 %v628, %v626
        %v663 = vpack.c.b16 %v629, %v627
        %v664 = vpack.c.b16 %v632, %v630
        %v665 = vpack.c.b16 %v633, %v631
        %698 = vmatpush.bf16.msra.mxu0 %v648
        %699 = vmatpush.bf16.msra.mxu0 %v646
        %700 = vmatpush.bf16.msra.mxu0 %v644
        %701 = vmatpush.bf16.msra.mxu0 %v642
        %702 = vmatpush.bf16.msra.mxu0 %v640
        %703 = vmatpush.bf16.msra.mxu0 %v638
        %704 = vmatpush.bf16.msra.mxu0 %v636
        %705 = vmatpush.bf16.msra.mxu0 %v634
        %706 = vmatmul.bf16.gmra.mxu0 %v474
        %v707 = vpop.f32.mrf.mxu0
        %v708 = vadd.f32 0.0, %v707
        %v709 = vpop.f32.mrf.mxu0
        %v710 = vadd.f32 0.0, %v709
        %711 = vmatmul.bf16.gmra.mxu0 %v476
        %v712 = vpop.f32.mrf.mxu0
        %v713 = vadd.f32 0.0, %v712
        %v714 = vpop.f32.mrf.mxu0
        %v715 = vadd.f32 0.0, %v714
        %716 = vmatmul.bf16.gmra.mxu0 %v478
        %v717 = vpop.f32.mrf.mxu0
        %v718 = vadd.f32 0.0, %v717
        %v719 = vpop.f32.mrf.mxu0
        %v720 = vadd.f32 0.0, %v719
        %721 = vmatmul.bf16.gmra.mxu0 %v480
        %v722 = vpop.f32.mrf.mxu0
        %v723 = vadd.f32 0.0, %v722
        %v724 = vpop.f32.mrf.mxu0
        %v725 = vadd.f32 0.0, %v724
        %726 = vmatmul.bf16.gmra.mxu0 %v482
        %v727 = vpop.f32.mrf.mxu0
        %v728 = vadd.f32 0.0, %v727
        %v729 = vpop.f32.mrf.mxu0
        %v730 = vadd.f32 0.0, %v729
        %731 = vmatmul.bf16.gmra.mxu0 %v484
        %v732 = vpop.f32.mrf.mxu0
        %v733 = vadd.f32 0.0, %v732
        %v734 = vpop.f32.mrf.mxu0
        %v735 = vadd.f32 0.0, %v734
        %736 = vmatmul.bf16.gmra.mxu0 %v486
        %v737 = vpop.f32.mrf.mxu0
        %v738 = vadd.f32 0.0, %v737
        %v739 = vpop.f32.mrf.mxu0
        %v740 = vadd.f32 0.0, %v739
        %741 = vmatmul.bf16.gmra.mxu0 %v488
        %v742 = vpop.f32.mrf.mxu0
        %v743 = vadd.f32 0.0, %v742
        %v744 = vpop.f32.mrf.mxu0
        %v745 = vadd.f32 0.0, %v744
        %746 = vmatmul.bf16.gmra.mxu0 %v490
        %v747 = vpop.f32.mrf.mxu0
        %v748 = vadd.f32 0.0, %v747
        %v749 = vpop.f32.mrf.mxu0
        %v750 = vadd.f32 0.0, %v749
        %751 = vmatmul.bf16.gmra.mxu0 %v492
        %v752 = vpop.f32.mrf.mxu0
        %v753 = vadd.f32 0.0, %v752
        %v754 = vpop.f32.mrf.mxu0
        %v755 = vadd.f32 0.0, %v754
        %756 = vmatmul.bf16.gmra.mxu0 %v494
        %v757 = vpop.f32.mrf.mxu0
        %v758 = vadd.f32 0.0, %v757
        %v759 = vpop.f32.mrf.mxu0
        %v760 = vadd.f32 0.0, %v759
        %761 = vmatmul.bf16.gmra.mxu0 %v496
        %v762 = vpop.f32.mrf.mxu0
        %v763 = vadd.f32 0.0, %v762
        %v764 = vpop.f32.mrf.mxu0
        %v765 = vadd.f32 0.0, %v764
        %766 = vmatmul.bf16.gmra.mxu0 %v498
        %v767 = vpop.f32.mrf.mxu0
        %v768 = vadd.f32 0.0, %v767
        %v769 = vpop.f32.mrf.mxu0
        %v770 = vadd.f32 0.0, %v769
        %771 = vmatmul.bf16.gmra.mxu0 %v500
        %v772 = vpop.f32.mrf.mxu0
        %v773 = vadd.f32 0.0, %v772
        %v774 = vpop.f32.mrf.mxu0
        %v775 = vadd.f32 0.0, %v774
        %776 = vmatmul.bf16.gmra.mxu0 %v502
        %v777 = vpop.f32.mrf.mxu0
        %v778 = vadd.f32 0.0, %v777
        %v779 = vpop.f32.mrf.mxu0
        %v780 = vadd.f32 0.0, %v779
        %781 = vmatmul.bf16.gmra.mxu0 %v504
        %v782 = vpop.f32.mrf.mxu0
        %v783 = vadd.f32 0.0, %v782
        %v784 = vpop.f32.mrf.mxu0
        %v785 = vadd.f32 0.0, %v784
        %786 = vdwg.mxu0
        %787 = vmatpush.bf16.msra.mxu0 %v664
        %788 = vmatpush.bf16.msra.mxu0 %v662
        %789 = vmatpush.bf16.msra.mxu0 %v660
        %790 = vmatpush.bf16.msra.mxu0 %v658
        %791 = vmatpush.bf16.msra.mxu0 %v656
        %792 = vmatpush.bf16.msra.mxu0 %v654
        %793 = vmatpush.bf16.msra.mxu0 %v652
        %794 = vmatpush.bf16.msra.mxu0 %v650
        %795 = vmatmul.bf16.gmra.mxu0 %v475
        %v796 = vpop.f32.mrf.mxu0
        %v797 = vadd.f32 %v708, %v796
        %v798 = vpop.f32.mrf.mxu0
        %v799 = vadd.f32 %v710, %v798
        %800 = vmatmul.bf16.gmra.mxu0 %v477
        %v801 = vpop.f32.mrf.mxu0
        %v802 = vadd.f32 %v713, %v801
        %v803 = vpop.f32.mrf.mxu0
        %v804 = vadd.f32 %v715, %v803
        %805 = vmatmul.bf16.gmra.mxu0 %v479
        %v806 = vpop.f32.mrf.mxu0
        %v807 = vadd.f32 %v718, %v806
        %v808 = vpop.f32.mrf.mxu0
        %v809 = vadd.f32 %v720, %v808
        %810 = vmatmul.bf16.gmra.mxu0 %v481
        %v811 = vpop.f32.mrf.mxu0
        %v812 = vadd.f32 %v723, %v811
        %v813 = vpop.f32.mrf.mxu0
        %v814 = vadd.f32 %v725, %v813
        %815 = vmatmul.bf16.gmra.mxu0 %v483
        %v816 = vpop.f32.mrf.mxu0
        %v817 = vadd.f32 %v728, %v816
        %v818 = vpop.f32.mrf.mxu0
        %v819 = vadd.f32 %v730, %v818
        %820 = vmatmul.bf16.gmra.mxu0 %v485
        %v821 = vpop.f32.mrf.mxu0
        %v822 = vadd.f32 %v733, %v821
        %v823 = vpop.f32.mrf.mxu0
        %v824 = vadd.f32 %v735, %v823
        %825 = vmatmul.bf16.gmra.mxu0 %v487
        %v826 = vpop.f32.mrf.mxu0
        %v827 = vadd.f32 %v738, %v826
        %v828 = vpop.f32.mrf.mxu0
        %v829 = vadd.f32 %v740, %v828
        %830 = vmatmul.bf16.gmra.mxu0 %v489
        %v831 = vpop.f32.mrf.mxu0
        %v832 = vadd.f32 %v743, %v831
        %v833 = vpop.f32.mrf.mxu0
        %v834 = vadd.f32 %v745, %v833
        %835 = vmatmul.bf16.gmra.mxu0 %v491
        %v836 = vpop.f32.mrf.mxu0
        %v837 = vadd.f32 %v748, %v836
        %v838 = vpop.f32.mrf.mxu0
        %v839 = vadd.f32 %v750, %v838
        %840 = vmatmul.bf16.gmra.mxu0 %v493
        %v841 = vpop.f32.mrf.mxu0
        %v842 = vadd.f32 %v753, %v841
        %v843 = vpop.f32.mrf.mxu0
        %v844 = vadd.f32 %v755, %v843
        %845 = vmatmul.bf16.gmra.mxu0 %v495
        %v846 = vpop.f32.mrf.mxu0
        %v847 = vadd.f32 %v758, %v846
        %v848 = vpop.f32.mrf.mxu0
        %v849 = vadd.f32 %v760, %v848
        %850 = vmatmul.bf16.gmra.mxu0 %v497
        %v851 = vpop.f32.mrf.mxu0
        %v852 = vadd.f32 %v763, %v851
        %v853 = vpop.f32.mrf.mxu0
        %v854 = vadd.f32 %v765, %v853
        %855 = vmatmul.bf16.gmra.mxu0 %v499
        %v856 = vpop.f32.mrf.mxu0
        %v857 = vadd.f32 %v768, %v856
        %v858 = vpop.f32.mrf.mxu0
        %v859 = vadd.f32 %v770, %v858
        %860 = vmatmul.bf16.gmra.mxu0 %v501
        %v861 = vpop.f32.mrf.mxu0
        %v862 = vadd.f32 %v773, %v861
        %v863 = vpop.f32.mrf.mxu0
        %v864 = vadd.f32 %v775, %v863
        %865 = vmatmul.bf16.gmra.mxu0 %v503
        %v866 = vpop.f32.mrf.mxu0
        %v867 = vadd.f32 %v778, %v866
        %v868 = vpop.f32.mrf.mxu0
        %v869 = vadd.f32 %v780, %v868
        %870 = vmatmul.bf16.gmra.mxu0 %v505
        %v871 = vpop.f32.mrf.mxu0
        %v872 = vadd.f32 %v783, %v871
        %v873 = vpop.f32.mrf.mxu0
        %v874 = vadd.f32 %v785, %v873
        %875 = vdwg.mxu0
        %876 = vmatpush.bf16.msra.mxu0 %v649
        %877 = vmatpush.bf16.msra.mxu0 %v647
        %878 = vmatpush.bf16.msra.mxu0 %v645
        %879 = vmatpush.bf16.msra.mxu0 %v643
        %880 = vmatpush.bf16.msra.mxu0 %v641
        %881 = vmatpush.bf16.msra.mxu0 %v639
        %882 = vmatpush.bf16.msra.mxu0 %v637
        %883 = vmatpush.bf16.msra.mxu0 %v635
        %884 = vmatmul.bf16.gmra.mxu0 %v474
        %v885 = vpop.f32.mrf.mxu0
        %v886 = vadd.f32 0.0, %v885
        %v887 = vpop.f32.mrf.mxu0
        %v888 = vadd.f32 0.0, %v887
        %889 = vmatmul.bf16.gmra.mxu0 %v476
        %v890 = vpop.f32.mrf.mxu0
        %v891 = vadd.f32 0.0, %v890
        %v892 = vpop.f32.mrf.mxu0
        %v893 = vadd.f32 0.0, %v892
        %894 = vmatmul.bf16.gmra.mxu0 %v478
        %v895 = vpop.f32.mrf.mxu0
        %v896 = vadd.f32 0.0, %v895
        %v897 = vpop.f32.mrf.mxu0
        %v898 = vadd.f32 0.0, %v897
        %899 = vmatmul.bf16.gmra.mxu0 %v480
        %v900 = vpop.f32.mrf.mxu0
        %v901 = vadd.f32 0.0, %v900
        %v902 = vpop.f32.mrf.mxu0
        %v903 = vadd.f32 0.0, %v902
        %904 = vmatmul.bf16.gmra.mxu0 %v482
        %v905 = vpop.f32.mrf.mxu0
        %v906 = vadd.f32 0.0, %v905
        %v907 = vpop.f32.mrf.mxu0
        %v908 = vadd.f32 0.0, %v907
        %909 = vmatmul.bf16.gmra.mxu0 %v484
        %v910 = vpop.f32.mrf.mxu0
        %v911 = vadd.f32 0.0, %v910
        %v912 = vpop.f32.mrf.mxu0
        %v913 = vadd.f32 0.0, %v912
        %914 = vmatmul.bf16.gmra.mxu0 %v486
        %v915 = vpop.f32.mrf.mxu0
        %v916 = vadd.f32 0.0, %v915
        %v917 = vpop.f32.mrf.mxu0
        %v918 = vadd.f32 0.0, %v917
        %919 = vmatmul.bf16.gmra.mxu0 %v488
        %v920 = vpop.f32.mrf.mxu0
        %v921 = vadd.f32 0.0, %v920
        %v922 = vpop.f32.mrf.mxu0
        %v923 = vadd.f32 0.0, %v922
        %924 = vmatmul.bf16.gmra.mxu0 %v490
        %v925 = vpop.f32.mrf.mxu0
        %v926 = vadd.f32 0.0, %v925
        %v927 = vpop.f32.mrf.mxu0
        %v928 = vadd.f32 0.0, %v927
        %929 = vmatmul.bf16.gmra.mxu0 %v492
        %v930 = vpop.f32.mrf.mxu0
        %v931 = vadd.f32 0.0, %v930
        %v932 = vpop.f32.mrf.mxu0
        %v933 = vadd.f32 0.0, %v932
        %934 = vmatmul.bf16.gmra.mxu0 %v494
        %v935 = vpop.f32.mrf.mxu0
        %v936 = vadd.f32 0.0, %v935
        %v937 = vpop.f32.mrf.mxu0
        %v938 = vadd.f32 0.0, %v937
        %939 = vmatmul.bf16.gmra.mxu0 %v496
        %v940 = vpop.f32.mrf.mxu0
        %v941 = vadd.f32 0.0, %v940
        %v942 = vpop.f32.mrf.mxu0
        %v943 = vadd.f32 0.0, %v942
        %944 = vmatmul.bf16.gmra.mxu0 %v498
        %v945 = vpop.f32.mrf.mxu0
        %v946 = vadd.f32 0.0, %v945
        %v947 = vpop.f32.mrf.mxu0
        %v948 = vadd.f32 0.0, %v947
        %949 = vmatmul.bf16.gmra.mxu0 %v500
        %v950 = vpop.f32.mrf.mxu0
        %v951 = vadd.f32 0.0, %v950
        %v952 = vpop.f32.mrf.mxu0
        %v953 = vadd.f32 0.0, %v952
        %954 = vmatmul.bf16.gmra.mxu0 %v502
        %v955 = vpop.f32.mrf.mxu0
        %v956 = vadd.f32 0.0, %v955
        %v957 = vpop.f32.mrf.mxu0
        %v958 = vadd.f32 0.0, %v957
        %959 = vmatmul.bf16.gmra.mxu0 %v504
        %v960 = vpop.f32.mrf.mxu0
        %v961 = vadd.f32 0.0, %v960
        %v962 = vpop.f32.mrf.mxu0
        %v963 = vadd.f32 0.0, %v962
        %964 = vdwg.mxu0
        %965 = vmatpush.bf16.msra.mxu0 %v665
        %966 = vmatpush.bf16.msra.mxu0 %v663
        %967 = vmatpush.bf16.msra.mxu0 %v661
        %968 = vmatpush.bf16.msra.mxu0 %v659
        %969 = vmatpush.bf16.msra.mxu0 %v657
        %970 = vmatpush.bf16.msra.mxu0 %v655
        %971 = vmatpush.bf16.msra.mxu0 %v653
        %972 = vmatpush.bf16.msra.mxu0 %v651
        %973 = vmatmul.bf16.gmra.mxu0 %v475
        %v974 = vpop.f32.mrf.mxu0
        %v975 = vadd.f32 %v886, %v974
        %v976 = vpop.f32.mrf.mxu0
        %v977 = vadd.f32 %v888, %v976
        %978 = vmatmul.bf16.gmra.mxu0 %v477
        %v979 = vpop.f32.mrf.mxu0
        %v980 = vadd.f32 %v891, %v979
        %v981 = vpop.f32.mrf.mxu0
        %v982 = vadd.f32 %v893, %v981
        %983 = vmatmul.bf16.gmra.mxu0 %v479
        %v984 = vpop.f32.mrf.mxu0
        %v985 = vadd.f32 %v896, %v984
        %v986 = vpop.f32.mrf.mxu0
        %v987 = vadd.f32 %v898, %v986
        %988 = vmatmul.bf16.gmra.mxu0 %v481
        %v989 = vpop.f32.mrf.mxu0
        %v990 = vadd.f32 %v901, %v989
        %v991 = vpop.f32.mrf.mxu0
        %v992 = vadd.f32 %v903, %v991
        %993 = vmatmul.bf16.gmra.mxu0 %v483
        %v994 = vpop.f32.mrf.mxu0
        %v995 = vadd.f32 %v906, %v994
        %v996 = vpop.f32.mrf.mxu0
        %v997 = vadd.f32 %v908, %v996
        %998 = vmatmul.bf16.gmra.mxu0 %v485
        %v999 = vpop.f32.mrf.mxu0
        %v1000 = vadd.f32 %v911, %v999
        %v1001 = vpop.f32.mrf.mxu0
        %v1002 = vadd.f32 %v913, %v1001
        %1003 = vmatmul.bf16.gmra.mxu0 %v487
        %v1004 = vpop.f32.mrf.mxu0
        %v1005 = vadd.f32 %v916, %v1004
        %v1006 = vpop.f32.mrf.mxu0
        %v1007 = vadd.f32 %v918, %v1006
        %1008 = vmatmul.bf16.gmra.mxu0 %v489
        %v1009 = vpop.f32.mrf.mxu0
        %v1010 = vadd.f32 %v921, %v1009
        %v1011 = vpop.f32.mrf.mxu0
        %v1012 = vadd.f32 %v923, %v1011
        %1013 = vmatmul.bf16.gmra.mxu0 %v491
        %v1014 = vpop.f32.mrf.mxu0
        %v1015 = vadd.f32 %v926, %v1014
        %v1016 = vpop.f32.mrf.mxu0
        %v1017 = vadd.f32 %v928, %v1016
        %1018 = vmatmul.bf16.gmra.mxu0 %v493
        %v1019 = vpop.f32.mrf.mxu0
        %v1020 = vadd.f32 %v931, %v1019
        %v1021 = vpop.f32.mrf.mxu0
        %v1022 = vadd.f32 %v933, %v1021
        %1023 = vmatmul.bf16.gmra.mxu0 %v495
        %v1024 = vpop.f32.mrf.mxu0
        %v1025 = vadd.f32 %v936, %v1024
        %v1026 = vpop.f32.mrf.mxu0
        %v1027 = vadd.f32 %v938, %v1026
        %1028 = vmatmul.bf16.gmra.mxu0 %v497
        %v1029 = vpop.f32.mrf.mxu0
        %v1030 = vadd.f32 %v941, %v1029
        %v1031 = vpop.f32.mrf.mxu0
        %v1032 = vadd.f32 %v943, %v1031
        %1033 = vmatmul.bf16.gmra.mxu0 %v499
        %v1034 = vpop.f32.mrf.mxu0
        %v1035 = vadd.f32 %v946, %v1034
        %v1036 = vpop.f32.mrf.mxu0
        %v1037 = vadd.f32 %v948, %v1036
        %1038 = vmatmul.bf16.gmra.mxu0 %v501
        %v1039 = vpop.f32.mrf.mxu0
        %v1040 = vadd.f32 %v951, %v1039
        %v1041 = vpop.f32.mrf.mxu0
        %v1042 = vadd.f32 %v953, %v1041
        %1043 = vmatmul.bf16.gmra.mxu0 %v503
        %v1044 = vpop.f32.mrf.mxu0
        %v1045 = vadd.f32 %v956, %v1044
        %v1046 = vpop.f32.mrf.mxu0
        %v1047 = vadd.f32 %v958, %v1046
        %1048 = vmatmul.bf16.gmra.mxu0 %v505
        %v1049 = vpop.f32.mrf.mxu0
        %v1050 = vadd.f32 %v961, %v1049
        %v1051 = vpop.f32.mrf.mxu0
        %v1052 = vadd.f32 %v963, %v1051
        %1053 = vdwg.mxu0
        %v1054 = vld [vmem:[%s264] sm:$0x3]
        %v1055 = vld [vmem:[%s274] sm:$0x3]
        %v1056 = vadd.f32 %v797, %v799
        %v1057 = vadd.f32 %v1056, %v802
        %v1058 = vadd.f32 %v1057, %v804
        %v1059 = vadd.f32 %v1058, %v807
        %v1060 = vadd.f32 %v1059, %v809
        %v1061 = vadd.f32 %v1060, %v812
        %v1062 = vadd.f32 %v1061, %v814
        %v1063 = vadd.f32 %v1062, %v817
        %v1064 = vadd.f32 %v1063, %v819
        %v1065 = vadd.f32 %v1064, %v822
        %v1066 = vadd.f32 %v1065, %v824
        %v1067 = vadd.f32 %v1066, %v827
        %v1068 = vadd.f32 %v1067, %v829
        %v1069 = vadd.f32 %v1068, %v832
        %v1070 = vadd.f32 %v1069, %v834
        %v1071 = vadd.f32 %v1070, %v837
        %v1072 = vadd.f32 %v1071, %v839
        %v1073 = vadd.f32 %v1072, %v842
        %v1074 = vadd.f32 %v1073, %v844
        %v1075 = vadd.f32 %v1074, %v847
        %v1076 = vadd.f32 %v1075, %v849
        %v1077 = vadd.f32 %v1076, %v852
        %v1078 = vadd.f32 %v1077, %v854
        %v1079 = vadd.f32 %v1078, %v857
        %v1080 = vadd.f32 %v1079, %v859
        %v1081 = vadd.f32 %v1080, %v862
        %v1082 = vadd.f32 %v1081, %v864
        %v1083 = vadd.f32 %v1082, %v867
        %v1084 = vadd.f32 %v1083, %v869
        %v1085 = vadd.f32 %v1084, %v872
        %v1086 = vadd.f32 %v1085, %v874
        %v1087 = vrot.slane %v1086, 4
        %v1088 = vadd.f32 %v1086, %v1087
        %v1089 = vrot.slane %v1088, 2
        %v1090 = vadd.f32 %v1088, %v1089
        %v1091 = vrot.slane %v1090, 1
        %v1092 = vadd.f32 %v1090, %v1091
        %v1093 = vadd.f32 %v975, %v977
        %v1094 = vadd.f32 %v1093, %v980
        %v1095 = vadd.f32 %v1094, %v982
        %v1096 = vadd.f32 %v1095, %v985
        %v1097 = vadd.f32 %v1096, %v987
        %v1098 = vadd.f32 %v1097, %v990
        %v1099 = vadd.f32 %v1098, %v992
        %v1100 = vadd.f32 %v1099, %v995
        %v1101 = vadd.f32 %v1100, %v997
        %v1102 = vadd.f32 %v1101, %v1000
        %v1103 = vadd.f32 %v1102, %v1002
        %v1104 = vadd.f32 %v1103, %v1005
        %v1105 = vadd.f32 %v1104, %v1007
        %v1106 = vadd.f32 %v1105, %v1010
        %v1107 = vadd.f32 %v1106, %v1012
        %v1108 = vadd.f32 %v1107, %v1015
        %v1109 = vadd.f32 %v1108, %v1017
        %v1110 = vadd.f32 %v1109, %v1020
        %v1111 = vadd.f32 %v1110, %v1022
        %v1112 = vadd.f32 %v1111, %v1025
        %v1113 = vadd.f32 %v1112, %v1027
        %v1114 = vadd.f32 %v1113, %v1030
        %v1115 = vadd.f32 %v1114, %v1032
        %v1116 = vadd.f32 %v1115, %v1035
        %v1117 = vadd.f32 %v1116, %v1037
        %v1118 = vadd.f32 %v1117, %v1040
        %v1119 = vadd.f32 %v1118, %v1042
        %v1120 = vadd.f32 %v1119, %v1045
        %v1121 = vadd.f32 %v1120, %v1047
        %v1122 = vadd.f32 %v1121, %v1050
        %v1123 = vadd.f32 %v1122, %v1052
        %v1124 = vrot.slane %v1123, 4
        %v1125 = vadd.f32 %v1123, %v1124
        %v1126 = vrot.slane %v1125, 2
        %v1127 = vadd.f32 %v1125, %v1126
        %v1128 = vrot.slane %v1127, 1
        %v1129 = vadd.f32 %v1127, %v1128
        %v1130 = vmul.f32 %v797, %v797
        %v1131 = vmul.f32 %v975, %v975
        %v1132 = vmul.f32 %v799, %v799
        %v1133 = vmul.f32 %v977, %v977
        %v1134 = vmul.f32 %v802, %v802
        %v1135 = vmul.f32 %v980, %v980
        %v1136 = vmul.f32 %v804, %v804
        %v1137 = vmul.f32 %v982, %v982
        %v1138 = vmul.f32 %v807, %v807
        %v1139 = vmul.f32 %v985, %v985
        %v1140 = vmul.f32 %v809, %v809
        %v1141 = vmul.f32 %v987, %v987
        %v1142 = vmul.f32 %v812, %v812
        %v1143 = vmul.f32 %v990, %v990
        %v1144 = vmul.f32 %v814, %v814
        %v1145 = vmul.f32 %v992, %v992
        %v1146 = vmul.f32 %v817, %v817
        %v1147 = vmul.f32 %v995, %v995
        %v1148 = vmul.f32 %v819, %v819
        %v1149 = vmul.f32 %v997, %v997
        %v1150 = vmul.f32 %v822, %v822
        %v1151 = vmul.f32 %v1000, %v1000
        %v1152 = vmul.f32 %v824, %v824
        %v1153 = vmul.f32 %v1002, %v1002
        %v1154 = vmul.f32 %v827, %v827
        %v1155 = vmul.f32 %v1005, %v1005
        %v1156 = vmul.f32 %v829, %v829
        %v1157 = vmul.f32 %v1007, %v1007
        %v1158 = vmul.f32 %v832, %v832
        %v1159 = vmul.f32 %v1010, %v1010
        %v1160 = vmul.f32 %v834, %v834
        %v1161 = vmul.f32 %v1012, %v1012
        %v1162 = vmul.f32 %v837, %v837
        %v1163 = vmul.f32 %v1015, %v1015
        %v1164 = vmul.f32 %v839, %v839
        %v1165 = vmul.f32 %v1017, %v1017
        %v1166 = vmul.f32 %v842, %v842
        %v1167 = vmul.f32 %v1020, %v1020
        %v1168 = vmul.f32 %v844, %v844
        %v1169 = vmul.f32 %v1022, %v1022
        %v1170 = vmul.f32 %v847, %v847
        %v1171 = vmul.f32 %v1025, %v1025
        %v1172 = vmul.f32 %v849, %v849
        %v1173 = vmul.f32 %v1027, %v1027
        %v1174 = vmul.f32 %v852, %v852
        %v1175 = vmul.f32 %v1030, %v1030
        %v1176 = vmul.f32 %v854, %v854
        %v1177 = vmul.f32 %v1032, %v1032
        %v1178 = vmul.f32 %v857, %v857
        %v1179 = vmul.f32 %v1035, %v1035
        %v1180 = vmul.f32 %v859, %v859
        %v1181 = vmul.f32 %v1037, %v1037
        %v1182 = vmul.f32 %v862, %v862
        %v1183 = vmul.f32 %v1040, %v1040
        %v1184 = vmul.f32 %v864, %v864
        %v1185 = vmul.f32 %v1042, %v1042
        %v1186 = vmul.f32 %v867, %v867
        %v1187 = vmul.f32 %v1045, %v1045
        %v1188 = vmul.f32 %v869, %v869
        %v1189 = vmul.f32 %v1047, %v1047
        %v1190 = vmul.f32 %v872, %v872
        %v1191 = vmul.f32 %v1050, %v1050
        %v1192 = vmul.f32 %v874, %v874
        %v1193 = vmul.f32 %v1052, %v1052
        %v1194 = vadd.f32 %v1130, %v1132
        %v1195 = vadd.f32 %v1194, %v1134
        %v1196 = vadd.f32 %v1195, %v1136
        %v1197 = vadd.f32 %v1196, %v1138
        %v1198 = vadd.f32 %v1197, %v1140
        %v1199 = vadd.f32 %v1198, %v1142
        %v1200 = vadd.f32 %v1199, %v1144
        %v1201 = vadd.f32 %v1200, %v1146
        %v1202 = vadd.f32 %v1201, %v1148
        %v1203 = vadd.f32 %v1202, %v1150
        %v1204 = vadd.f32 %v1203, %v1152
        %v1205 = vadd.f32 %v1204, %v1154
        %v1206 = vadd.f32 %v1205, %v1156
        %v1207 = vadd.f32 %v1206, %v1158
        %v1208 = vadd.f32 %v1207, %v1160
        %v1209 = vadd.f32 %v1208, %v1162
        %v1210 = vadd.f32 %v1209, %v1164
        %v1211 = vadd.f32 %v1210, %v1166
        %v1212 = vadd.f32 %v1211, %v1168
        %v1213 = vadd.f32 %v1212, %v1170
        %v1214 = vadd.f32 %v1213, %v1172
        %v1215 = vadd.f32 %v1214, %v1174
        %v1216 = vadd.f32 %v1215, %v1176
        %v1217 = vadd.f32 %v1216, %v1178
        %v1218 = vadd.f32 %v1217, %v1180
        %v1219 = vadd.f32 %v1218, %v1182
        %v1220 = vadd.f32 %v1219, %v1184
        %v1221 = vadd.f32 %v1220, %v1186
        %v1222 = vadd.f32 %v1221, %v1188
        %v1223 = vadd.f32 %v1222, %v1190
        %v1224 = vadd.f32 %v1223, %v1192
        %v1225 = vrot.slane %v1224, 4
        %v1226 = vadd.f32 %v1224, %v1225
        %v1227 = vrot.slane %v1226, 2
        %v1228 = vadd.f32 %v1226, %v1227
        %v1229 = vrot.slane %v1228, 1
        %v1230 = vadd.f32 %v1228, %v1229
        %v1231 = vadd.f32 %v1131, %v1133
        %v1232 = vadd.f32 %v1231, %v1135
        %v1233 = vadd.f32 %v1232, %v1137
        %v1234 = vadd.f32 %v1233, %v1139
        %v1235 = vadd.f32 %v1234, %v1141
        %v1236 = vadd.f32 %v1235, %v1143
        %v1237 = vadd.f32 %v1236, %v1145
        %v1238 = vadd.f32 %v1237, %v1147
        %v1239 = vadd.f32 %v1238, %v1149
        %v1240 = vadd.f32 %v1239, %v1151
        %v1241 = vadd.f32 %v1240, %v1153
        %v1242 = vadd.f32 %v1241, %v1155
        %v1243 = vadd.f32 %v1242, %v1157
        %v1244 = vadd.f32 %v1243, %v1159
        %v1245 = vadd.f32 %v1244, %v1161
        %v1246 = vadd.f32 %v1245, %v1163
        %v1247 = vadd.f32 %v1246, %v1165
        %v1248 = vadd.f32 %v1247, %v1167
        %v1249 = vadd.f32 %v1248, %v1169
        %v1250 = vadd.f32 %v1249, %v1171
        %v1251 = vadd.f32 %v1250, %v1173
        %v1252 = vadd.f32 %v1251, %v1175
        %v1253 = vadd.f32 %v1252, %v1177
        %v1254 = vadd.f32 %v1253, %v1179
        %v1255 = vadd.f32 %v1254, %v1181
        %v1256 = vadd.f32 %v1255, %v1183
        %v1257 = vadd.f32 %v1256, %v1185
        %v1258 = vadd.f32 %v1257, %v1187
        %v1259 = vadd.f32 %v1258, %v1189
        %v1260 = vadd.f32 %v1259, %v1191
        %v1261 = vadd.f32 %v1260, %v1193
        %v1262 = vrot.slane %v1261, 4
        %v1263 = vadd.f32 %v1261, %v1262
        %v1264 = vrot.slane %v1263, 2
        %v1265 = vadd.f32 %v1263, %v1264
        %v1266 = vrot.slane %v1265, 1
        %v1267 = vadd.f32 %v1265, %v1266
        %v1268 = vmul.f32 %v1092, 0.00390625
        %v1269 = vmul.f32 %v1129, 0.00390625
        %v1270 = vmul.f32 %v1230, 0.00390625
        %v1271 = vmul.f32 %v1267, 0.00390625
        %v1272 = vmul.f32 %v1268, %v1268
        %v1273 = vmul.f32 %v1269, %v1269
        %v1274 = vsub.f32 %v1270, %v1272
        %v1275 = vsub.f32 %v1271, %v1273
        %v1276 = vmax.f32 %v1274, 0.0
        %v1277 = vmax.f32 %v1275, 0.0
        %v1278 = vsub.f32 %v797, %v1268
        %v1279 = vsub.f32 %v975, %v1269
        %v1280 = vsub.f32 %v799, %v1268
        %v1281 = vsub.f32 %v977, %v1269
        %v1282 = vsub.f32 %v802, %v1268
        %v1283 = vsub.f32 %v980, %v1269
        %v1284 = vsub.f32 %v804, %v1268
        %v1285 = vsub.f32 %v982, %v1269
        %v1286 = vsub.f32 %v807, %v1268
        %v1287 = vsub.f32 %v985, %v1269
        %v1288 = vsub.f32 %v809, %v1268
        %v1289 = vsub.f32 %v987, %v1269
        %v1290 = vsub.f32 %v812, %v1268
        %v1291 = vsub.f32 %v990, %v1269
        %v1292 = vsub.f32 %v814, %v1268
        %v1293 = vsub.f32 %v992, %v1269
        %v1294 = vsub.f32 %v817, %v1268
        %v1295 = vsub.f32 %v995, %v1269
        %v1296 = vsub.f32 %v819, %v1268
        %v1297 = vsub.f32 %v997, %v1269
        %v1298 = vsub.f32 %v822, %v1268
        %v1299 = vsub.f32 %v1000, %v1269
        %v1300 = vsub.f32 %v824, %v1268
        %v1301 = vsub.f32 %v1002, %v1269
        %v1302 = vsub.f32 %v827, %v1268
        %v1303 = vsub.f32 %v1005, %v1269
        %v1304 = vsub.f32 %v829, %v1268
        %v1305 = vsub.f32 %v1007, %v1269
        %v1306 = vsub.f32 %v832, %v1268
        %v1307 = vsub.f32 %v1010, %v1269
        %v1308 = vsub.f32 %v834, %v1268
        %v1309 = vsub.f32 %v1012, %v1269
        %v1310 = vsub.f32 %v837, %v1268
        %v1311 = vsub.f32 %v1015, %v1269
        %v1312 = vsub.f32 %v839, %v1268
        %v1313 = vsub.f32 %v1017, %v1269
        %v1314 = vsub.f32 %v842, %v1268
        %v1315 = vsub.f32 %v1020, %v1269
        %v1316 = vsub.f32 %v844, %v1268
        %v1317 = vsub.f32 %v1022, %v1269
        %v1318 = vsub.f32 %v847, %v1268
        %v1319 = vsub.f32 %v1025, %v1269
        %v1320 = vsub.f32 %v849, %v1268
        %v1321 = vsub.f32 %v1027, %v1269
        %v1322 = vsub.f32 %v852, %v1268
        %v1323 = vsub.f32 %v1030, %v1269
        %v1324 = vsub.f32 %v854, %v1268
        %v1325 = vsub.f32 %v1032, %v1269
        %v1326 = vsub.f32 %v857, %v1268
        %v1327 = vsub.f32 %v1035, %v1269
        %v1328 = vsub.f32 %v859, %v1268
        %v1329 = vsub.f32 %v1037, %v1269
        %v1330 = vsub.f32 %v862, %v1268
        %v1331 = vsub.f32 %v1040, %v1269
        %v1332 = vsub.f32 %v864, %v1268
        %v1333 = vsub.f32 %v1042, %v1269
        %v1334 = vsub.f32 %v867, %v1268
        %v1335 = vsub.f32 %v1045, %v1269
        %v1336 = vsub.f32 %v869, %v1268
        %v1337 = vsub.f32 %v1047, %v1269
        %v1338 = vsub.f32 %v872, %v1268
        %v1339 = vsub.f32 %v1050, %v1269
        %v1340 = vsub.f32 %v874, %v1268
        %v1341 = vsub.f32 %v1052, %v1269
        %v1342 = vadd.f32 %v1276, 1e-05
        %v1343 = vadd.f32 %v1277, 1e-05
        %v1344 = vrsqrt.pop %v1342
        %v1345 = vmul.f32 %v1344, %v1342
        %v1346 = vmul.f32 %v1345, %v1344
        %v1347 = vmul.f32 0.5, %v1346
        %v1348 = vsub.f32 1.5, %v1347
        %v1349 = vmul.f32 %v1344, %v1348
        %vm1350 = vweird.f32 %v1342
        %vm1351 = vweird.f32 %v1344
        %vm1352 = vmor %vm1350, %vm1351
        %v1353 = vsel %vm1352, %v1344, %v1349
        %v1354 = vrsqrt.pop %v1343
        %v1355 = vmul.f32 %v1354, %v1343
        %v1356 = vmul.f32 %v1355, %v1354
        %v1357 = vmul.f32 0.5, %v1356
        %v1358 = vsub.f32 1.5, %v1357
        %v1359 = vmul.f32 %v1354, %v1358
        %vm1360 = vweird.f32 %v1343
        %vm1361 = vweird.f32 %v1354
        %vm1362 = vmor %vm1360, %vm1361
        %v1363 = vsel %vm1362, %v1354, %v1359
        %v1364 = vmul.f32 %v1278, %v1353
        %v1365 = vmul.f32 %v1279, %v1363
        %v1366 = vmul.f32 %v1280, %v1353
        %v1367 = vmul.f32 %v1281, %v1363
        %v1368 = vmul.f32 %v1282, %v1353
        %v1369 = vmul.f32 %v1283, %v1363
        %v1370 = vmul.f32 %v1284, %v1353
        %v1371 = vmul.f32 %v1285, %v1363
        %v1372 = vmul.f32 %v1286, %v1353
        %v1373 = vmul.f32 %v1287, %v1363
        %v1374 = vmul.f32 %v1288, %v1353
        %v1375 = vmul.f32 %v1289, %v1363
        %v1376 = vmul.f32 %v1290, %v1353
        %v1377 = vmul.f32 %v1291, %v1363
        %v1378 = vmul.f32 %v1292, %v1353
        %v1379 = vmul.f32 %v1293, %v1363
        %v1380 = vmul.f32 %v1294, %v1353
        %v1381 = vmul.f32 %v1295, %v1363
        %v1382 = vmul.f32 %v1296, %v1353
        %v1383 = vmul.f32 %v1297, %v1363
        %v1384 = vmul.f32 %v1298, %v1353
        %v1385 = vmul.f32 %v1299, %v1363
        %v1386 = vmul.f32 %v1300, %v1353
        %v1387 = vmul.f32 %v1301, %v1363
        %v1388 = vmul.f32 %v1302, %v1353
        %v1389 = vmul.f32 %v1303, %v1363
        %v1390 = vmul.f32 %v1304, %v1353
        %v1391 = vmul.f32 %v1305, %v1363
        %v1392 = vmul.f32 %v1306, %v1353
        %v1393 = vmul.f32 %v1307, %v1363
        %v1394 = vmul.f32 %v1308, %v1353
        %v1395 = vmul.f32 %v1309, %v1363
        %v1396 = vmul.f32 %v1310, %v1353
        %v1397 = vmul.f32 %v1311, %v1363
        %v1398 = vmul.f32 %v1312, %v1353
        %v1399 = vmul.f32 %v1313, %v1363
        %v1400 = vmul.f32 %v1314, %v1353
        %v1401 = vmul.f32 %v1315, %v1363
        %v1402 = vmul.f32 %v1316, %v1353
        %v1403 = vmul.f32 %v1317, %v1363
        %v1404 = vmul.f32 %v1318, %v1353
        %v1405 = vmul.f32 %v1319, %v1363
        %v1406 = vmul.f32 %v1320, %v1353
        %v1407 = vmul.f32 %v1321, %v1363
        %v1408 = vmul.f32 %v1322, %v1353
        %v1409 = vmul.f32 %v1323, %v1363
        %v1410 = vmul.f32 %v1324, %v1353
        %v1411 = vmul.f32 %v1325, %v1363
        %v1412 = vmul.f32 %v1326, %v1353
        %v1413 = vmul.f32 %v1327, %v1363
        %v1414 = vmul.f32 %v1328, %v1353
        %v1415 = vmul.f32 %v1329, %v1363
        %v1416 = vmul.f32 %v1330, %v1353
        %v1417 = vmul.f32 %v1331, %v1363
        %v1418 = vmul.f32 %v1332, %v1353
        %v1419 = vmul.f32 %v1333, %v1363
        %v1420 = vmul.f32 %v1334, %v1353
        %v1421 = vmul.f32 %v1335, %v1363
        %v1422 = vmul.f32 %v1336, %v1353
        %v1423 = vmul.f32 %v1337, %v1363
        %v1424 = vmul.f32 %v1338, %v1353
        %v1425 = vmul.f32 %v1339, %v1363
        %v1426 = vmul.f32 %v1340, %v1353
        %v1427 = vmul.f32 %v1341, %v1363
        %v1429 = vperm.slane %v1054, 0
        %v1430 = vperm.slane %v1054, 1
        %v1433 = vmul.f32 %v1364, %v1429
        %v1434 = vmul.f32 %v1365, %v1430
        %v1435 = vmul.f32 %v1366, %v1429
        %v1436 = vmul.f32 %v1367, %v1430
        %v1437 = vmul.f32 %v1368, %v1429
        %v1438 = vmul.f32 %v1369, %v1430
        %v1439 = vmul.f32 %v1370, %v1429
        %v1440 = vmul.f32 %v1371, %v1430
        %v1441 = vmul.f32 %v1372, %v1429
        %v1442 = vmul.f32 %v1373, %v1430
        %v1443 = vmul.f32 %v1374, %v1429
        %v1444 = vmul.f32 %v1375, %v1430
        %v1445 = vmul.f32 %v1376, %v1429
        %v1446 = vmul.f32 %v1377, %v1430
        %v1447 = vmul.f32 %v1378, %v1429
        %v1448 = vmul.f32 %v1379, %v1430
        %v1449 = vmul.f32 %v1380, %v1429
        %v1450 = vmul.f32 %v1381, %v1430
        %v1451 = vmul.f32 %v1382, %v1429
        %v1452 = vmul.f32 %v1383, %v1430
        %v1453 = vmul.f32 %v1384, %v1429
        %v1454 = vmul.f32 %v1385, %v1430
        %v1455 = vmul.f32 %v1386, %v1429
        %v1456 = vmul.f32 %v1387, %v1430
        %v1457 = vmul.f32 %v1388, %v1429
        %v1458 = vmul.f32 %v1389, %v1430
        %v1459 = vmul.f32 %v1390, %v1429
        %v1460 = vmul.f32 %v1391, %v1430
        %v1461 = vmul.f32 %v1392, %v1429
        %v1462 = vmul.f32 %v1393, %v1430
        %v1463 = vmul.f32 %v1394, %v1429
        %v1464 = vmul.f32 %v1395, %v1430
        %v1465 = vmul.f32 %v1396, %v1429
        %v1466 = vmul.f32 %v1397, %v1430
        %v1467 = vmul.f32 %v1398, %v1429
        %v1468 = vmul.f32 %v1399, %v1430
        %v1469 = vmul.f32 %v1400, %v1429
        %v1470 = vmul.f32 %v1401, %v1430
        %v1471 = vmul.f32 %v1402, %v1429
        %v1472 = vmul.f32 %v1403, %v1430
        %v1473 = vmul.f32 %v1404, %v1429
        %v1474 = vmul.f32 %v1405, %v1430
        %v1475 = vmul.f32 %v1406, %v1429
        %v1476 = vmul.f32 %v1407, %v1430
        %v1477 = vmul.f32 %v1408, %v1429
        %v1478 = vmul.f32 %v1409, %v1430
        %v1479 = vmul.f32 %v1410, %v1429
        %v1480 = vmul.f32 %v1411, %v1430
        %v1481 = vmul.f32 %v1412, %v1429
        %v1482 = vmul.f32 %v1413, %v1430
        %v1483 = vmul.f32 %v1414, %v1429
        %v1484 = vmul.f32 %v1415, %v1430
        %v1485 = vmul.f32 %v1416, %v1429
        %v1486 = vmul.f32 %v1417, %v1430
        %v1487 = vmul.f32 %v1418, %v1429
        %v1488 = vmul.f32 %v1419, %v1430
        %v1489 = vmul.f32 %v1420, %v1429
        %v1490 = vmul.f32 %v1421, %v1430
        %v1491 = vmul.f32 %v1422, %v1429
        %v1492 = vmul.f32 %v1423, %v1430
        %v1493 = vmul.f32 %v1424, %v1429
        %v1494 = vmul.f32 %v1425, %v1430
        %v1495 = vmul.f32 %v1426, %v1429
        %v1496 = vmul.f32 %v1427, %v1430
        %v1498 = vperm.slane %v1055, 0
        %v1499 = vperm.slane %v1055, 1
        %v1502 = vadd.f32 %v1433, %v1498
        %v1503 = vadd.f32 %v1434, %v1499
        %v1504 = vadd.f32 %v1435, %v1498
        %v1505 = vadd.f32 %v1436, %v1499
        %v1506 = vadd.f32 %v1437, %v1498
        %v1507 = vadd.f32 %v1438, %v1499
        %v1508 = vadd.f32 %v1439, %v1498
        %v1509 = vadd.f32 %v1440, %v1499
        %v1510 = vadd.f32 %v1441, %v1498
        %v1511 = vadd.f32 %v1442, %v1499
        %v1512 = vadd.f32 %v1443, %v1498
        %v1513 = vadd.f32 %v1444, %v1499
        %v1514 = vadd.f32 %v1445, %v1498
        %v1515 = vadd.f32 %v1446, %v1499
        %v1516 = vadd.f32 %v1447, %v1498
        %v1517 = vadd.f32 %v1448, %v1499
        %v1518 = vadd.f32 %v1449, %v1498
        %v1519 = vadd.f32 %v1450, %v1499
        %v1520 = vadd.f32 %v1451, %v1498
        %v1521 = vadd.f32 %v1452, %v1499
        %v1522 = vadd.f32 %v1453, %v1498
        %v1523 = vadd.f32 %v1454, %v1499
        %v1524 = vadd.f32 %v1455, %v1498
        %v1525 = vadd.f32 %v1456, %v1499
        %v1526 = vadd.f32 %v1457, %v1498
        %v1527 = vadd.f32 %v1458, %v1499
        %v1528 = vadd.f32 %v1459, %v1498
        %v1529 = vadd.f32 %v1460, %v1499
        %v1530 = vadd.f32 %v1461, %v1498
        %v1531 = vadd.f32 %v1462, %v1499
        %v1532 = vadd.f32 %v1463, %v1498
        %v1533 = vadd.f32 %v1464, %v1499
        %v1534 = vadd.f32 %v1465, %v1498
        %v1535 = vadd.f32 %v1466, %v1499
        %v1536 = vadd.f32 %v1467, %v1498
        %v1537 = vadd.f32 %v1468, %v1499
        %v1538 = vadd.f32 %v1469, %v1498
        %v1539 = vadd.f32 %v1470, %v1499
        %v1540 = vadd.f32 %v1471, %v1498
        %v1541 = vadd.f32 %v1472, %v1499
        %v1542 = vadd.f32 %v1473, %v1498
        %v1543 = vadd.f32 %v1474, %v1499
        %v1544 = vadd.f32 %v1475, %v1498
        %v1545 = vadd.f32 %v1476, %v1499
        %v1546 = vadd.f32 %v1477, %v1498
        %v1547 = vadd.f32 %v1478, %v1499
        %v1548 = vadd.f32 %v1479, %v1498
        %v1549 = vadd.f32 %v1480, %v1499
        %v1550 = vadd.f32 %v1481, %v1498
        %v1551 = vadd.f32 %v1482, %v1499
        %v1552 = vadd.f32 %v1483, %v1498
        %v1553 = vadd.f32 %v1484, %v1499
        %v1554 = vadd.f32 %v1485, %v1498
        %v1555 = vadd.f32 %v1486, %v1499
        %v1556 = vadd.f32 %v1487, %v1498
        %v1557 = vadd.f32 %v1488, %v1499
        %v1558 = vadd.f32 %v1489, %v1498
        %v1559 = vadd.f32 %v1490, %v1499
        %v1560 = vadd.f32 %v1491, %v1498
        %v1561 = vadd.f32 %v1492, %v1499
        %v1562 = vadd.f32 %v1493, %v1498
        %v1563 = vadd.f32 %v1494, %v1499
        %v1564 = vadd.f32 %v1495, %v1498
        %v1565 = vadd.f32 %v1496, %v1499
        %v1566 = vmax.f32 %v1502, 0.0
        %v1567 = vmax.f32 %v1503, 0.0
        %v1568 = vmax.f32 %v1504, 0.0
        %v1569 = vmax.f32 %v1505, 0.0
        %v1570 = vmax.f32 %v1506, 0.0
        %v1571 = vmax.f32 %v1507, 0.0
        %v1572 = vmax.f32 %v1508, 0.0
        %v1573 = vmax.f32 %v1509, 0.0
        %v1574 = vmax.f32 %v1510, 0.0
        %v1575 = vmax.f32 %v1511, 0.0
        %v1576 = vmax.f32 %v1512, 0.0
        %v1577 = vmax.f32 %v1513, 0.0
        %v1578 = vmax.f32 %v1514, 0.0
        %v1579 = vmax.f32 %v1515, 0.0
        %v1580 = vmax.f32 %v1516, 0.0
        %v1581 = vmax.f32 %v1517, 0.0
        %v1582 = vmax.f32 %v1518, 0.0
        %v1583 = vmax.f32 %v1519, 0.0
        %v1584 = vmax.f32 %v1520, 0.0
        %v1585 = vmax.f32 %v1521, 0.0
        %v1586 = vmax.f32 %v1522, 0.0
        %v1587 = vmax.f32 %v1523, 0.0
        %v1588 = vmax.f32 %v1524, 0.0
        %v1589 = vmax.f32 %v1525, 0.0
        %v1590 = vmax.f32 %v1526, 0.0
        %v1591 = vmax.f32 %v1527, 0.0
        %v1592 = vmax.f32 %v1528, 0.0
        %v1593 = vmax.f32 %v1529, 0.0
        %v1594 = vmax.f32 %v1530, 0.0
        %v1595 = vmax.f32 %v1531, 0.0
        %v1596 = vmax.f32 %v1532, 0.0
        %v1597 = vmax.f32 %v1533, 0.0
        %v1598 = vmax.f32 %v1534, 0.0
        %v1599 = vmax.f32 %v1535, 0.0
        %v1600 = vmax.f32 %v1536, 0.0
        %v1601 = vmax.f32 %v1537, 0.0
        %v1602 = vmax.f32 %v1538, 0.0
        %v1603 = vmax.f32 %v1539, 0.0
        %v1604 = vmax.f32 %v1540, 0.0
        %v1605 = vmax.f32 %v1541, 0.0
        %v1606 = vmax.f32 %v1542, 0.0
        %v1607 = vmax.f32 %v1543, 0.0
        %v1608 = vmax.f32 %v1544, 0.0
        %v1609 = vmax.f32 %v1545, 0.0
        %v1610 = vmax.f32 %v1546, 0.0
        %v1611 = vmax.f32 %v1547, 0.0
        %v1612 = vmax.f32 %v1548, 0.0
        %v1613 = vmax.f32 %v1549, 0.0
        %v1614 = vmax.f32 %v1550, 0.0
        %v1615 = vmax.f32 %v1551, 0.0
        %v1616 = vmax.f32 %v1552, 0.0
        %v1617 = vmax.f32 %v1553, 0.0
        %v1618 = vmax.f32 %v1554, 0.0
        %v1619 = vmax.f32 %v1555, 0.0
        %v1620 = vmax.f32 %v1556, 0.0
        %v1621 = vmax.f32 %v1557, 0.0
        %v1622 = vmax.f32 %v1558, 0.0
        %v1623 = vmax.f32 %v1559, 0.0
        %v1624 = vmax.f32 %v1560, 0.0
        %v1625 = vmax.f32 %v1561, 0.0
        %v1626 = vmax.f32 %v1562, 0.0
        %v1627 = vmax.f32 %v1563, 0.0
        %v1628 = vmax.f32 %v1564, 0.0
        %v1629 = vmax.f32 %v1565, 0.0
        %v1630 = vpack.c.bf16 %v1567, %v1566
        %v1631 = vpack.c.bf16 %v1569, %v1568
        %v1632 = vpack.c.bf16 %v1571, %v1570
        %v1633 = vpack.c.bf16 %v1573, %v1572
        %v1634 = vpack.c.bf16 %v1575, %v1574
        %v1635 = vpack.c.bf16 %v1577, %v1576
        %v1636 = vpack.c.bf16 %v1579, %v1578
        %v1637 = vpack.c.bf16 %v1581, %v1580
        %v1638 = vpack.c.bf16 %v1583, %v1582
        %v1639 = vpack.c.bf16 %v1585, %v1584
        %v1640 = vpack.c.bf16 %v1587, %v1586
        %v1641 = vpack.c.bf16 %v1589, %v1588
        %v1642 = vpack.c.bf16 %v1591, %v1590
        %v1643 = vpack.c.bf16 %v1593, %v1592
        %v1644 = vpack.c.bf16 %v1595, %v1594
        %v1645 = vpack.c.bf16 %v1597, %v1596
        %v1646 = vpack.c.bf16 %v1599, %v1598
        %v1647 = vpack.c.bf16 %v1601, %v1600
        %v1648 = vpack.c.bf16 %v1603, %v1602
        %v1649 = vpack.c.bf16 %v1605, %v1604
        %v1650 = vpack.c.bf16 %v1607, %v1606
        %v1651 = vpack.c.bf16 %v1609, %v1608
        %v1652 = vpack.c.bf16 %v1611, %v1610
        %v1653 = vpack.c.bf16 %v1613, %v1612
        %v1654 = vpack.c.bf16 %v1615, %v1614
        %v1655 = vpack.c.bf16 %v1617, %v1616
        %v1656 = vpack.c.bf16 %v1619, %v1618
        %v1657 = vpack.c.bf16 %v1621, %v1620
        %v1658 = vpack.c.bf16 %v1623, %v1622
        %v1659 = vpack.c.bf16 %v1625, %v1624
        %v1660 = vpack.c.bf16 %v1627, %v1626
        %v1661 = vpack.c.bf16 %v1629, %v1628
        %1662 = vst [vmem:[%s309] sm:$0xff] %v1630
        %1663 = vst [vmem:[%s309 + $0x8] sm:$0xff] %v1631
        %1664 = vst [vmem:[%s309 + $0x10] sm:$0xff] %v1632
        %1665 = vst [vmem:[%s309 + $0x18] sm:$0xff] %v1633
        %1666 = vst [vmem:[%s309 + $0x20] sm:$0xff] %v1634
        %1667 = vst [vmem:[%s309 + $0x28] sm:$0xff] %v1635
        %1668 = vst [vmem:[%s309 + $0x30] sm:$0xff] %v1636
        %1669 = vst [vmem:[%s309 + $0x38] sm:$0xff] %v1637
        %1670 = vst [vmem:[%s309 + $0x40] sm:$0xff] %v1638
        %1671 = vst [vmem:[%s309 + $0x48] sm:$0xff] %v1639
        %1672 = vst [vmem:[%s309 + $0x50] sm:$0xff] %v1640
        %1673 = vst [vmem:[%s309 + $0x58] sm:$0xff] %v1641
        %1674 = vst [vmem:[%s309 + $0x60] sm:$0xff] %v1642
        %1675 = vst [vmem:[%s309 + $0x68] sm:$0xff] %v1643
        %1676 = vst [vmem:[%s309 + $0x70] sm:$0xff] %v1644
        %1677 = vst [vmem:[%s309 + $0x78] sm:$0xff] %v1645
        %1678 = vst [vmem:[%s309 + $0x80] sm:$0xff] %v1646
        %1679 = vst [vmem:[%s309 + $0x88] sm:$0xff] %v1647
        %1680 = vst [vmem:[%s309 + $0x90] sm:$0xff] %v1648
        %1681 = vst [vmem:[%s309 + $0x98] sm:$0xff] %v1649
        %1682 = vst [vmem:[%s309 + $0xa0] sm:$0xff] %v1650
        %1683 = vst [vmem:[%s309 + $0xa8] sm:$0xff] %v1651
        %1684 = vst [vmem:[%s309 + $0xb0] sm:$0xff] %v1652
        %1685 = vst [vmem:[%s309 + $0xb8] sm:$0xff] %v1653
        %1686 = vst [vmem:[%s309 + $0xc0] sm:$0xff] %v1654
        %1687 = vst [vmem:[%s309 + $0xc8] sm:$0xff] %v1655
        %1688 = vst [vmem:[%s309 + $0xd0] sm:$0xff] %v1656
        %1689 = vst [vmem:[%s309 + $0xd8] sm:$0xff] %v1657
        %1690 = vst [vmem:[%s309 + $0xe0] sm:$0xff] %v1658
        %1691 = vst [vmem:[%s309 + $0xe8] sm:$0xff] %v1659
        %1692 = vst [vmem:[%s309 + $0xf0] sm:$0xff] %v1660
        %1693 = vst [vmem:[%s309 + $0xf8] sm:$0xff] %v1661
        %s1694 = sand.u32 %s132, 1
        %s1695 = scalar_lea.sflag [#allocation4], %s1694
        %s1696 = sand.u32 %s132, 1
        %s1697 = smul.addr %s1696, 256
        %s1698 = scalar_lea.vmem [#allocation10], %s1697
        // Predicated region
        $region53: #{tpu_custom_call.1} parent=35 // pred_check
          %p1699 = pneg %p142
        $region54: #{tpu_custom_call.1} parent=35 // pred_check_branch
          %1701 = sbr.rel (%p1699) target = $region56
        $region55: #{tpu_custom_call.1} parent=35 // pred_region
          %s1702 = smul.u32 2, %s25
          %1704 = vsyncadd %s1695, 0
          %s1705 = smul.addr %s1702, 4
          %s1706 = scalar_lea.hbm %s4, %s1705
          %s1707 = sshll.u32 %s1698, 4
          %s1708 = int_to_ptr.vmem [resolvable:$true] %s1707
          %s1709 = sshll.u32 %s1706, 4
          %s1710 = int_to_ptr.hbm [resolvable:$true] %s1709
          %1715 = dma.vmem_to_hbm [thread:$0]  %s1708, 4096, %s1710, %s1695, 128, 256, 8
        $region56: #{tpu_custom_call.1} parent=35 // pred_fallthru
          _
      $region36: #{tpu_custom_call.1} parent=5 // pred_fallthru
        _
      %p1716 = scmp.le.s32.totalorder 2, %s20
      // Predicated region
      $region57: #{tpu_custom_call.1} parent=5 // pred_check
        %p1717 = pneg %p1716
      $region58: #{tpu_custom_call.1} parent=5 // pred_check_branch
        %1719 = sbr.rel (%p1717) target = $region60
      $region59: #{tpu_custom_call.1} parent=5 // pred_region
        %s1720 = ssub.s32 %s20, 2
        // Predicated region
        $region61: #{tpu_custom_call.1} parent=59 // pred_check
          %p1721 = pneg %p148
        $region62: #{tpu_custom_call.1} parent=59 // pred_check_branch
          %1723 = sbr.rel (%p1721) target = $region64
        $region63: #{tpu_custom_call.1} parent=59 // pred_region
          %s1724 = sand.u32 %s133, 1
          %s1725 = scalar_lea.sflag [#allocation4], %s1724
          %s1726 = sand.u32 %s133, 1
          %s1727 = smul.addr %s1726, 256
          %s1728 = scalar_lea.vmem [#allocation10], %s1727
          %1730 = dma.done %s1725, 4096
        $region64: #{tpu_custom_call.1} parent=59 // pred_fallthru
          _
      $region60: #{tpu_custom_call.1} parent=5 // pred_fallthru
        _
    $region6: #{tpu_custom_call.1} parent=1 // loop_footer
      %s24 = sadd.s32 1, %s20
    $region7: #{tpu_custom_call.1} parent=1 // loop_footer_branch
      %19 = sbr.rel target = $region3
    $region8: #{tpu_custom_call.1} parent=1 // loop_exit
      _
    %1731 = vsyncpa [#allocation3], 1
    %s1732 = scalar_lea.sflag [#allocation3], 1
    %1733 = vsyncpa %s1732, 1
    %1734 = vsyncpa [#allocation6], 1
    %s1735 = scalar_lea.sflag [#allocation6], 1
    %1736 = vsyncpa %s1735, 1
    %1737 = vsyncpa [#allocation9], 1
    %s1738 = scalar_lea.sflag [#allocation9], 1
    %1739 = vsyncpa %s1738, 1
    %1740 = vsyncpa [#allocation4], 1
    %s1741 = scalar_lea.sflag [#allocation4], 1
    %1742 = vsyncpa %s1741, 1

</llo_original>
